<compile_context>
chip_gen: v7x
topology: tpu7x:2x2x1
jax: 0.10.0
libtpu: 0.0.40
codegen_flags: <defaults>
</compile_context>

<pallas_src>
import functools

import jax
import jax.numpy as jnp
import numpy as np
from jax import lax
from jax.experimental import pallas as pl
from jax.experimental.pallas import tpu as pltpu

EPS = 1e-5
MASK_NEG = -1e30  # safe additive mask bias (avoids -inf / NaN of -finfo.max arithmetic)

_LAYER_KEYS = ("ag", "ab", "wqkv", "wq", "wk", "wr", "br", "wo", "bo",
               "fg", "fb", "w1", "b1", "w2", "b2")


# ---------------------------------------------------------------------------
# in-kernel helpers
# ---------------------------------------------------------------------------
def _dot(a, b):
    # single-pass bf16 MXU matmul with f32 accumulation
    return jnp.dot(a.astype(jnp.bfloat16), b.astype(jnp.bfloat16),
                   preferred_element_type=jnp.float32)


def _layernorm(x, g, b):
    mu = jnp.mean(x, axis=-1, keepdims=True)
    var = jnp.mean((x - mu) ** 2, axis=-1, keepdims=True)
    return (x - mu) * lax.rsqrt(var + EPS) * g + b


def _gelu_tanh(x):
    # tanh-form GELU: transcendental goes to the EUP slot (vs the 12-op erf polynomial)
    c = 0.7978845608028654  # sqrt(2/pi)
    return 0.5 * x * (1.0 + jnp.tanh(c * (x + 0.044715 * x * x * x)))


def _softmax_cols(logits):
    # logits: (N, H); softmax over N (sequence axis) for all heads at once
    m = jnp.max(logits, axis=0, keepdims=True)
    e = jnp.exp(logits - m)
    return e * pl.reciprocal(jnp.sum(e, axis=0, keepdims=True), approx=True)


# ---------------------------------------------------------------------------
# Pallas kernels
# ---------------------------------------------------------------------------
def stack_kernel(x_ref, mb_ref, cos_ref, sa_ref, sb_ref, exp_ref,
                 ag_ref, ab_ref, wqkv_ref, wq_ref, wk_ref, wr_ref, br_ref,
                 wo_ref, bo_ref, fg_ref, fb_ref, w1_ref, b1_ref, w2_ref, b2_ref,
                 o_ref, xcur_ref, *, ff_rows):
    """Whole transformer stack.  grid = (batch, layer); layer axis is 'arbitrary' and the
    activation is carried across it in the f32 VMEM scratch `xcur_ref`."""
    layer = pl.program_id(1)

    @pl.when(layer == 0)
    def _():
        xcur_ref[...] = x_ref[...].astype(jnp.float32)

    x = xcur_ref[...]                                    # (N, D) carried activation
    inner = wr_ref.shape[1]
    cos = cos_ref[...]
    sa = sa_ref[...]                                     # -sin on even rotary lanes, else 0
    sb = sb_ref[...]                                     # +sin on odd rotary lanes, else 0

    # ---------------- PreNorm + FastAttention + residual ----------------
    xn = _layernorm(x, ag_ref[...], ab_ref[...])
    qkv = _dot(xn, wqkv_ref[...])                        # (N, 3*inner)
    q = qkv[:, :inner]
    k = qkv[:, inner:2 * inner]
    v = qkv[:, 2 * inner:]

    def rope(t):
        # rotate_half via XLU lane rotations; wrap-around lanes are killed by sa/sb zeros.
        t_next = pltpu.roll(t, shift=inner - 1, axis=1)  # t[:, j+1]
        t_prev = pltpu.roll(t, shift=1, axis=1)          # t[:, j-1]
        return t * cos + t_next * sa + t_prev * sb

    q_a, k_a, v_a = rope(q), rope(k), rope(v)

    mb = mb_ref[...]                                     # (N, H) additive mask bias
    expd = exp_ref[...]                                  # (H, inner) head -> lane expansion

    # global query: lane-dense (N, H) logits, one column softmax (scale folded into wq)
    ql = _dot(q, wq_ref[...]) + mb
    q_attn = _softmax_cols(ql)
    gq = jnp.sum(_dot(q_attn, expd) * q_a, axis=0, keepdims=True)       # (1, inner)

    # global key (pair-sum + to_k_attn_logits folded into wk)
    kl = _dot(k * gq, wk_ref[...]) + mb
    k_attn = _softmax_cols(kl)
    gk = jnp.sum(_dot(k_attn, expd) * k_a, axis=0, keepdims=True)       # (1, inner)

    # value path (pair-sum + to_r folded into wr), residual with un-rotated q
    r = _dot(v_a * gk, wr_ref[...]) + br_ref[...] + q
    xcur_ref[...] = x + _dot(r, wo_ref[...]) + bo_ref[...]

    # ---------------- PreNorm + FeedForward + residual (row-chunked) ----------------
    fg = fg_ref[...]
    fb = fb_ref[...]
    w1 = w1_ref[...]
    b1 = b1_ref[...]
    w2 = w2_ref[...]
    b2 = b2_ref[...]

    def ff_chunk(c, carry):
        row0 = pl.multiple_of(c * ff_rows, ff_rows)
        rows = pl.ds(row0, ff_rows)
        xa = xcur_ref[rows, :]
        h = _gelu_tanh(_dot(_layernorm(xa, fg, fb), w1) + b1)
        xcur_ref[rows, :] = xa + _dot(h, w2) + b2
        return carry

    lax.fori_loop(0, xcur_ref.shape[0] // ff_rows, ff_chunk, 0)

    @pl.when(layer == pl.num_programs(1) - 1)
    def _():
        o_ref[...] = xcur_ref[...].astype(o_ref.dtype)


def logits_kernel(x_ref, g_ref, b_ref, w_ref, b2_ref, o_ref, xn_ref):
    """Final LayerNorm + vocab projection; LN is computed once per batch row (vocab-tile
    grid axis is 'arbitrary', LN result cached in a bf16 VMEM scratch)."""
    @pl.when(pl.program_id(1) == 0)
    def _():
        xn = _layernorm(x_ref[...].astype(jnp.float32), g_ref[...], b_ref[...])
        xn_ref[...] = xn.astype(jnp.bfloat16)

    o_ref[...] = (jnp.dot(xn_ref[...], w_ref[...], preferred_element_type=jnp.float32)
                  + b2_ref[...])


# ---------------------------------------------------------------------------
# VMEM budgeting
# ---------------------------------------------------------------------------
def _nbytes(a):
    return int(np.prod(a.shape)) * jnp.dtype(a.dtype).itemsize


def _vmem_ceiling():
    try:
        cap = int(pltpu.get_tpu_info().vmem_capacity_bytes)
    except Exception:  # pragma: no cover - conservative fallback (works on every gen)
        cap = 64 * 1024 * 1024
    return max(32 * 1024 * 1024, (cap * 3) // 4)   # leave headroom for compiler scratch


def _vmem_limit(block_bytes, scratch_bytes, interm_bytes):
    want = 2 * int(block_bytes) + int(scratch_bytes) + int(interm_bytes) + (8 << 20)
    return int(max(32 << 20, min(_vmem_ceiling(), want)))


# ---------------------------------------------------------------------------
# pallas_call wrappers
# ---------------------------------------------------------------------------
def _row_tile(n, cap=512):
    if n <= cap:
        return n
    for t in range(cap, 7, -8):
        if n % t == 0:
            return t
    return n


def transformer_stack(x, mask_bias, layers, consts, *, ff_rows=None):
    """x: (B, N, D) f32 -> (B, N, D) bf16 after all transformer layers."""
    B, N, D = x.shape
    depth = layers["wqkv"].shape[0]
    inner = layers["wr"].shape[-1]
    H = layers["wq"].shape[-1]
    hid = layers["w1"].shape[-1]
    if ff_rows is None:
        ff_rows = _row_tile(N)

    const_ops = [consts["cos"], consts["sin_a"], consts["sin_b"], consts["expand"]]
    layer_ops = [layers[k] for k in _LAYER_KEYS]

    def _const_spec(a):
        nd = a.ndim
        return pl.BlockSpec(a.shape, lambda b, l, _nd=nd: (0,) * _nd)

    def _stacked_spec(a):
        nd = a.ndim
        return pl.BlockSpec((None,) + a.shape[1:],
                            lambda b, l, _nd=nd: (l,) + (0,) * (_nd - 1))

    in_specs = ([pl.BlockSpec((None, N, D), lambda b, l: (b, 0, 0)),
                 pl.BlockSpec((None, N, H), lambda b, l: (b, 0, 0))]
                + [_const_spec(a) for a in const_ops]
                + [_stacked_spec(a) for a in layer_ops])

    per_layer_bytes = sum(int(np.prod(a.shape[1:])) * jnp.dtype(a.dtype).itemsize
                          for a in layer_ops)
    const_bytes = sum(_nbytes(a) for a in const_ops)
    block_bytes = (_nbytes(x) // B + _nbytes(mask_bias) // B + const_bytes
                   + per_layer_bytes + N * D * 2)
    # largest live intermediates: qkv + rotated q/k/v (+ rolls) + FF hidden chunk
    interm_bytes = (12 * N * inner + 2 * ff_rows * hid + 4 * N * D) * 4

    kern = functools.partial(stack_kernel, ff_rows=ff_rows)
    return pl.pallas_call(
        kern,
        out_shape=jax.ShapeDtypeStruct((B, N, D), jnp.bfloat16),
        grid=(B, depth),
        in_specs=in_specs,
        out_specs=pl.BlockSpec((None, N, D), lambda b, l: (b, 0, 0)),
        scratch_shapes=[pltpu.VMEM((N, D), jnp.float32)],
        compiler_params=pltpu.CompilerParams(
            dimension_semantics=("parallel", "arbitrary"),
            vmem_limit_bytes=_vmem_limit(block_bytes, N * D * 4, interm_bytes)),
    )(x, mask_bias, *const_ops, *layer_ops)


def _pick_vocab_tile(v):
    if v % 128 != 0 or v <= 2048:
        return v
    for t in (2048, 1024, 512, 256, 128):
        if v % t == 0:
            return t
    return v


def logits_layer(x, fp):
    B, N, D = x.shape
    V = fp["w"].shape[1]
    tv = _pick_vocab_tile(V)
    nv = V // tv

    block_bytes = N * D * 2 + 2 * D * 4 + D * tv * 2 + tv * 4 + N * tv * 4
    return pl.pallas_call(
        logits_kernel,
        out_shape=jax.ShapeDtypeStruct((B, N, V), jnp.float32),
        grid=(B, nv),
        in_specs=[
            pl.BlockSpec((None, N, D), lambda b, j: (b, 0, 0)),
            pl.BlockSpec((1, D), lambda b, j: (0, 0)),
            pl.BlockSpec((1, D), lambda b, j: (0, 0)),
            pl.BlockSpec((D, tv), lambda b, j: (0, j)),
            pl.BlockSpec((1, tv), lambda b, j: (0, j)),
        ],
        out_specs=pl.BlockSpec((None, N, tv), lambda b, j: (b, 0, j)),
        scratch_shapes=[pltpu.VMEM((N, D), jnp.bfloat16)],
        compiler_params=pltpu.CompilerParams(
            dimension_semantics=("parallel", "arbitrary"),
            vmem_limit_bytes=_vmem_limit(block_bytes, N * D * 2, N * tv * 4)),
    )(x, fp["ln_g"], fp["ln_b"], fp["w"], fp["b"])


# ---------------------------------------------------------------------------
# host-side one-time parameter / constant preparation
# ---------------------------------------------------------------------------
def build_attention_constants(n, heads, dim_head):
    rot_dim = dim_head // 2                          # RotaryEmbedding(dim_head // 2)
    half = rot_dim // 2
    inv_freq = 1.0 / (10000.0 ** (np.arange(0, rot_dim, 2)[:half].astype(np.float32)
                                  / rot_dim))
    t = np.arange(n, dtype=np.float32)
    f = np.repeat(np.einsum("n,f->nf", t, inv_freq), 2, axis=-1)         # (n, rot_dim)
    cos_h = np.concatenate([np.cos(f), np.ones((n, dim_head - rot_dim), np.float32)], -1)
    sin_h = np.concatenate([np.sin(f), np.zeros((n, dim_head - rot_dim), np.float32)], -1)
    inner = heads * dim_head
    cos_full = np.tile(cos_h, (1, heads)).astype(np.float32)             # (n, inner)
    sin_full = np.tile(sin_h, (1, heads)).astype(np.float32)

    # sin tables with rotate_half's sign and pair-parity folded in:
    #   rotate_half(x)[2i] = -x[2i+1]  (pairs with roll -> x[j+1])
    #   rotate_half(x)[2i+1] = x[2i]   (pairs with roll -> x[j-1])
    even = (np.arange(inner) % 2 == 0)[None, :]
    sin_a = np.where(even, -sin_full, 0.0).astype(np.float32)
    sin_b = np.where(~even, sin_full, 0.0).astype(np.float32)

    # per-head attention prob -> per-lane broadcast: (H, inner) one-hot blocks
    expand = np.kron(np.eye(heads, dtype=np.float32),
                     np.ones((1, dim_head), np.float32))

    # adjacent-pair sum '(d r) -> d' (r=2) as a per-head (dh, dh//2) matrix
    pair_h = np.zeros((dim_head, dim_head // 2), np.float32)
    for d in range(dim_head // 2):
        pair_h[2 * d, d] = 1.0
        pair_h[2 * d + 1, d] = 1.0

    return dict(cos=jnp.asarray(cos_full), sin_a=jnp.asarray(sin_a),
                sin_b=jnp.asarray(sin_b),
                expand=jnp.asarray(expand, dtype=jnp.bfloat16),
                pair_h=pair_h)


def _prep_layer(layer, consts, heads, dim_head):
    """Head-batched (block-diagonal) bf16 weights for the fused stack kernel."""
    a, f = layer["attn"], layer["ff"]
    scale = dim_head ** -0.5
    eye_h = np.eye(heads, dtype=np.float32)
    pair_h = consts["pair_h"]

    wq_col = np.asarray(a["wq"]).reshape(dim_head, 1) * scale            # scale folded
    wk_col = np.repeat(np.asarray(a["wk"])[0], 2).reshape(dim_head, 1) * scale  # pair-sum
    wr_blk = pair_h @ np.asarray(a["wr"])                                # pair-sum folded

    return dict(
        ag=a["ln_g"], ab=a["ln_b"],
        wqkv=a["wqkv"].astype(jnp.bfloat16),                             # (D, 3*inner)
        wq=jnp.asarray(np.kron(eye_h, wq_col), dtype=jnp.bfloat16),      # (inner, H)
        wk=jnp.asarray(np.kron(eye_h, wk_col), dtype=jnp.bfloat16),      # (inner, H)
        wr=jnp.asarray(np.kron(eye_h, wr_blk), dtype=jnp.bfloat16),      # (inner, inner)
        br=jnp.tile(a["br"], (1, heads)),                                # (1, inner)
        wo=a["wo"].astype(jnp.bfloat16), bo=a["bo"],
        fg=f["ln_g"], fb=f["ln_b"],
        w1=f["w1"].astype(jnp.bfloat16), b1=f["b1"],
        w2=f["w2"].astype(jnp.bfloat16), b2=f["b2"],
    )


def prepare_params(params, cfg, n):
    """One-time prep: rotary tables, block-diagonal head-batched weights, bf16 casts,
    per-layer stacking for the (batch, layer) grid."""
    H, dh = cfg["heads"], cfg["dim_head"]
    consts = build_attention_constants(n, H, dh)
    per_layer = [_prep_layer(layer, consts, H, dh) for layer in params["layers"]]
    stacked = {k: jnp.stack([lp[k] for lp in per_layer], axis=0) for k in _LAYER_KEYS}
    final = dict(ln_g=params["final"]["ln_g"], ln_b=params["final"]["ln_b"],
                 w=params["final"]["w"].astype(jnp.bfloat16), b=params["final"]["b"])
    consts_dev = {k: consts[k] for k in ("cos", "sin_a", "sin_b", "expand")}
    return dict(token_emb=params["token_emb"], layers=stacked,
                consts=consts_dev, final=final)


# ---------------------------------------------------------------------------
# parameters + forward
# ---------------------------------------------------------------------------
def init_params(key, cfg):
    V, D, depth = cfg["num_tokens"], cfg["dim"], cfg["depth"]
    H, dh, mult = cfg["heads"], cfg["dim_head"], cfg["ff_mult"]
    inner = H * dh
    keys = iter(jax.random.split(key, 128))

    def nrm(shape, s=0.02):
        return jax.random.normal(next(keys), shape, jnp.float32) * s

    token_emb = nrm((V, D))
    # to_q_attn_logits / to_k_attn_logits are SHARED across layers (as in FastTransformer)
    wq_shared = nrm((1, dh))
    wk_shared = nrm((1, dh // 2))

    layers = []
    for _ in range(depth):
        attn = dict(ln_g=jnp.ones((1, D), jnp.float32), ln_b=jnp.zeros((1, D), jnp.float32),
                    wqkv=nrm((D, inner * 3)), wq=wq_shared, wk=wk_shared,
                    wr=nrm((dh // 2, dh)), br=nrm((1, dh)),
                    wo=nrm((inner, D)), bo=nrm((1, D)))
        ff = dict(ln_g=jnp.ones((1, D), jnp.float32), ln_b=jnp.zeros((1, D), jnp.float32),
                  w1=nrm((D, D * mult)), b1=nrm((1, D * mult)),
                  w2=nrm((D * mult, D)), b2=nrm((1, D)))
        layers.append(dict(attn=attn, ff=ff))

    final = dict(ln_g=jnp.ones((1, D), jnp.float32), ln_b=jnp.zeros((1, D), jnp.float32),
                 w=nrm((D, V)), b=nrm((1, V)))
    return dict(token_emb=token_emb, layers=layers, final=final)


@jax.jit
def fast_transformer_forward(tokens, mask_bool, prepped):
    x = jnp.take(prepped["token_emb"], tokens, axis=0)     # embedding gather (XLA glue)
    B, N, D = x.shape
    H = prepped["layers"]["wq"].shape[-1]
    bias = jnp.where(mask_bool, 0.0, MASK_NEG).astype(jnp.float32)
    mask_bias = jnp.broadcast_to(bias[:, :, None], (B, N, H))   # lane-dense (N, H) per batch
    x = transformer_stack(x, mask_bias, prepped["layers"], prepped["consts"])
    return logits_layer(x, prepped["final"])


# ---------------------------------------------------------------------------
# pure-JAX reference (mirrors the PyTorch code) for validation
# ---------------------------------------------------------------------------
def _ref_ln(x, g, b):
    mu = jnp.mean(x, axis=-1, keepdims=True)
    var = jnp.mean((x - mu) ** 2, axis=-1, keepdims=True)
    return (x - mu) / jnp.sqrt(var + EPS) * g + b


def _ref_rotate_half(x):
    shp = x.shape
    xr = x.reshape(shp[:-1] + (shp[-1] // 2, 2))
    x1, x2 = xr[..., 0], xr[..., 1]
    return jnp.stack((-x2, x1), axis=-1).reshape(shp)


def reference_forward(tokens, mask_bool, params, cfg):
    H, dh = cfg["heads"], cfg["dim_head"]
    x = params["token_emb"][tokens]
    B, n, D = x.shape
    rot = dh // 2
    inv_freq = 1.0 / (10000.0 ** (jnp.arange(0, rot, 2)[: rot // 2].astype(jnp.float32) / rot))
    f = jnp.repeat(jnp.einsum("n,f->nf", jnp.arange(n, dtype=jnp.float32), inv_freq), 2, axis=-1)
    fr = f[None, None]                                        # (1,1,n,rot)
    mask3 = mask_bool[:, None, :]
    mv = -jnp.finfo(jnp.float32).max
    scale = dh ** -0.5

    for layer in params["layers"]:
        ap = layer["attn"]
        xn = _ref_ln(x, ap["ln_g"], ap["ln_b"])
        qkv = xn @ ap["wqkv"]
        q, k, v = jnp.split(qkv, 3, axis=-1)
        to_heads = lambda t: t.reshape(B, n, H, dh).transpose(0, 2, 1, 3)
        q, k, v = map(to_heads, (q, k, v))

        def rope(t):
            mid, rest = t[..., :rot], t[..., rot:]
            mid = mid * jnp.cos(fr) + _ref_rotate_half(mid) * jnp.sin(fr)
            return jnp.concatenate([mid, rest], axis=-1)

        q_aggr, k_aggr, v_aggr = rope(q), rope(k), rope(v)

        ql = jnp.where(mask3, jnp.sum(q * ap["wq"], axis=-1) * scale, mv)
        q_attn = jax.nn.softmax(ql, axis=-1)
        gq = jnp.einsum("bhn,bhnd->bhd", q_attn, q_aggr)[:, :, None, :]
        kk = (k * gq).reshape(B, H, n, dh // 2, 2).sum(-1)
        kl = jnp.where(mask3, jnp.sum(kk * ap["wk"], axis=-1) * scale, mv)
        k_attn = jax.nn.softmax(kl, axis=-1)
        gk = jnp.einsum("bhn,bhnd->bhd", k_attn, k_aggr)[:, :, None, :]
        u = (v_aggr * gk).reshape(B, H, n, dh // 2, 2).sum(-1)
        r = u @ ap["wr"] + ap["br"][0]
        r = r + q
        r = r.transpose(0, 2, 1, 3).reshape(B, n, H * dh)
        x = r @ ap["wo"] + ap["bo"][0] + x

        fp = layer["ff"]
        xn = _ref_ln(x, fp["ln_g"], fp["ln_b"])
        h = jax.nn.gelu(xn @ fp["w1"] + fp["b1"][0], approximate=False)
        x = h @ fp["w2"] + fp["b2"][0] + x

    fn = params["final"]
    xn = _ref_ln(x, fn["ln_g"], fn["ln_b"])
    return xn @ fn["w"] + fn["b"][0]


# ---------------------------------------------------------------------------
if __name__ == "__main__":
    cfg = dict(num_tokens=256, dim=64, depth=2, max_seq_len=16,
               heads=4, dim_head=32, ff_mult=4)
    key = jax.random.PRNGKey(0)
    pkey, tkey = jax.random.split(key)
    params = init_params(pkey, cfg)

    B, N = 2, cfg["max_seq_len"]
    tokens = jax.random.randint(tkey, (B, N), 0, cfg["num_tokens"], dtype=jnp.int32)
    mask = jnp.ones((B, N), dtype=bool).at[1, N - 3:].set(False)  # exercise padding mask

    prepped = prepare_params(params, cfg, N)   # one-time host prep (hoisted out of forward)
    out = jax.block_until_ready(fast_transformer_forward(tokens, mask, prepped))

    # f32 (highest-precision) reference; kernel uses single-pass bf16 MXU matmuls with
    # f32 accumulation, tanh-GELU and a bf16 layer-stack->logits carry, hence the tolerance.
    with jax.default_matmul_precision("highest"):
        ref = jax.block_until_ready(reference_forward(tokens, mask, params, cfg))
    np.testing.assert_allclose(np.asarray(out, dtype=np.float32), np.asarray(ref),
                               rtol=5e-2, atol=1e-2)
    assert out.shape == (B, N, cfg["num_tokens"])
    print("KERNEL_OK")
</pallas_src>

<mosaic_0001>
module attributes {stable_mosaic.version = 11 : i64} {
  func.func @logits_kernel(%arg0: i32, %arg1: i32, %arg2: memref<1x16x64xbf16, #tpu.memory_space<vmem>>, %arg3: memref<1x64xf32, #tpu.memory_space<vmem>>, %arg4: memref<1x64xf32, #tpu.memory_space<vmem>>, %arg5: memref<64x256xbf16, #tpu.memory_space<vmem>>, %arg6: memref<1x256xf32, #tpu.memory_space<vmem>>, %arg7: memref<1x16x256xf32, #tpu.memory_space<vmem>>, %arg8: memref<16x64xbf16, #tpu.memory_space<vmem>>) attributes {dimension_semantics = [#tpu.dimension_semantics<parallel>, #tpu.dimension_semantics<arbitrary>], iteration_bounds = array<i64: 2, 1>, scalar_prefetch = 0 : i64, scratch_operands = 1 : i64, tpu.core_type = #tpu.core_type<tc>, window_params = [{transform_indices = @transform_0, window_bounds = array<i64: 1, 16, 64>}, {pipeline_mode = #tpu.pipeline_mode<synchronous>, transform_indices = @transform_1, window_bounds = array<i64: 1, 64>}, {pipeline_mode = #tpu.pipeline_mode<synchronous>, transform_indices = @transform_2, window_bounds = array<i64: 1, 64>}, {transform_indices = @transform_3, window_bounds = array<i64: 64, 256>}, {transform_indices = @transform_4, window_bounds = array<i64: 1, 256>}, {transform_indices = @transform_5, window_bounds = array<i64: 1, 16, 256>}]} {
    %c0_i32 = arith.constant 0 : i32
    %0 = arith.cmpi eq, %arg1, %c0_i32 : i32
    %1 = arith.extui %0 : i1 to i32
    %c0_i32_0 = arith.constant 0 : i32
    %2 = arith.cmpi ne, %1, %c0_i32_0 : i32
    scf.if %2 {
      %c0_9 = arith.constant 0 : index
      %c0_10 = arith.constant 0 : index
      %c0_11 = arith.constant 0 : index
      %12 = vector.load %arg2[%c0_9, %c0_10, %c0_11] : memref<1x16x64xbf16, #tpu.memory_space<vmem>>, vector<1x16x64xbf16>
      %13 = vector.shape_cast %12 : vector<1x16x64xbf16> to vector<16x64xbf16>
      %14 = arith.extf %13 : vector<16x64xbf16> to vector<16x64xf32>
      %c0_12 = arith.constant 0 : index
      %c0_13 = arith.constant 0 : index
      %15 = vector.load %arg3[%c0_12, %c0_13] : memref<1x64xf32, #tpu.memory_space<vmem>>, vector<1x64xf32>
      %c0_14 = arith.constant 0 : index
      %c0_15 = arith.constant 0 : index
      %16 = vector.load %arg4[%c0_14, %c0_15] : memref<1x64xf32, #tpu.memory_space<vmem>>, vector<1x64xf32>
      %cst_16 = arith.constant dense<0.000000e+00> : vector<16xf32>
      %17 = vector.multi_reduction <add>, %14, %cst_16 [1] : vector<16x64xf32> to vector<16xf32>
      %18 = vector.shape_cast %17 : vector<16xf32> to vector<16x1xf32>
      %cst_17 = arith.constant 6.400000e+01 : f32
      %19 = vector.broadcast %cst_17 : f32 to vector<16x1xf32>
      %20 = arith.divf %18, %19 : vector<16x1xf32>
      %21 = vector.broadcast %20 : vector<16x1xf32> to vector<16x64xf32>
      %22 = arith.subf %14, %21 : vector<16x64xf32>
      %23 = arith.mulf %22, %22 : vector<16x64xf32>
      %cst_18 = arith.constant dense<0.000000e+00> : vector<16xf32>
      %24 = vector.multi_reduction <add>, %23, %cst_18 [1] : vector<16x64xf32> to vector<16xf32>
      %25 = vector.shape_cast %24 : vector<16xf32> to vector<16x1xf32>
      %cst_19 = arith.constant 6.400000e+01 : f32
      %26 = vector.broadcast %cst_19 : f32 to vector<16x1xf32>
      %27 = arith.divf %25, %26 : vector<16x1xf32>
      %28 = vector.broadcast %20 : vector<16x1xf32> to vector<16x64xf32>
      %29 = arith.subf %14, %28 : vector<16x64xf32>
      %cst_20 = arith.constant 9.99999974E-6 : f32
      %30 = vector.broadcast %cst_20 : f32 to vector<16x1xf32>
      %31 = arith.addf %27, %30 : vector<16x1xf32>
      %32 = math.rsqrt %31 : vector<16x1xf32>
      %33 = vector.broadcast %32 : vector<16x1xf32> to vector<16x64xf32>
      %34 = arith.mulf %29, %33 : vector<16x64xf32>
      %35 = vector.broadcast %15 : vector<1x64xf32> to vector<16x64xf32>
      %36 = arith.mulf %34, %35 : vector<16x64xf32>
      %37 = vector.broadcast %16 : vector<1x64xf32> to vector<16x64xf32>
      %38 = arith.addf %36, %37 : vector<16x64xf32>
      %39 = arith.truncf %38 : vector<16x64xf32> to vector<16x64xbf16>
      %c0_21 = arith.constant 0 : index
      %c0_22 = arith.constant 0 : index
      %40 = vector.load %arg8[%c0_21, %c0_22] : memref<16x64xbf16, #tpu.memory_space<vmem>>, vector<16x64xbf16>
      tpu.vector_store %arg8[%c0_21, %c0_22], %39 {strides = array<i32>} : memref<16x64xbf16, #tpu.memory_space<vmem>>, vector<16x64xbf16>,
    } else {
    }
    %c0 = arith.constant 0 : index
    %c0_1 = arith.constant 0 : index
    %3 = vector.load %arg8[%c0, %c0_1] : memref<16x64xbf16, #tpu.memory_space<vmem>>, vector<16x64xbf16>
    %c0_2 = arith.constant 0 : index
    %c0_3 = arith.constant 0 : index
    %4 = vector.load %arg5[%c0_2, %c0_3] : memref<64x256xbf16, #tpu.memory_space<vmem>>, vector<64x256xbf16>
    %cst = arith.constant dense<0.000000e+00> : vector<16x256xf32>
    %5 = tpu.matmul %3, %4, %cst {dimension_numbers = #tpu.dot_dimension_numbers<[1], [0], [0], [1], [0, 0, 1, 1], [], []>} : vector<16x64xbf16>, vector<64x256xbf16>, vector<16x256xf32> -> vector<16x256xf32>
    %c0_4 = arith.constant 0 : index
    %c0_5 = arith.constant 0 : index
    %6 = vector.load %arg6[%c0_4, %c0_5] : memref<1x256xf32, #tpu.memory_space<vmem>>, vector<1x256xf32>
    %7 = vector.broadcast %6 : vector<1x256xf32> to vector<16x256xf32>
    %8 = arith.addf %5, %7 : vector<16x256xf32>
    %c0_6 = arith.constant 0 : index
    %c0_7 = arith.constant 0 : index
    %c0_8 = arith.constant 0 : index
    %9 = vector.load %arg7[%c0_6, %c0_7, %c0_8] : memref<1x16x256xf32, #tpu.memory_space<vmem>>, vector<1x16x256xf32>
    %10 = vector.shape_cast %9 : vector<1x16x256xf32> to vector<16x256xf32>
    %11 = vector.shape_cast %8 : vector<16x256xf32> to vector<1x16x256xf32>
    tpu.vector_store %arg7[%c0_6, %c0_7, %c0_8], %11 {strides = array<i32>} : memref<1x16x256xf32, #tpu.memory_space<vmem>>, vector<1x16x256xf32>,
    return
  }
  func.func @transform_0(%arg0: i32, %arg1: i32) -> (i32, i32, i32) {
    %c0_i32 = arith.constant 0 : i32
    %c0_i32_0 = arith.constant 0 : i32
    %c0_i32_1 = arith.constant 0 : i32
    return %arg0, %c0_i32, %c0_i32_0 : i32, i32, i32
  }
  func.func @transform_1(%arg0: i32, %arg1: i32) -> (i32, i32) {
    %c0_i32 = arith.constant 0 : i32
    %c0_i32_0 = arith.constant 0 : i32
    %c0_i32_1 = arith.constant 0 : i32
    return %c0_i32, %c0_i32_0 : i32, i32
  }
  func.func @transform_2(%arg0: i32, %arg1: i32) -> (i32, i32) {
    %c0_i32 = arith.constant 0 : i32
    %c0_i32_0 = arith.constant 0 : i32
    %c0_i32_1 = arith.constant 0 : i32
    return %c0_i32, %c0_i32_0 : i32, i32
  }
  func.func @transform_3(%arg0: i32, %arg1: i32) -> (i32, i32) {
    %c0_i32 = arith.constant 0 : i32
    %c0_i32_0 = arith.constant 0 : i32
    return %c0_i32, %arg1 : i32, i32
  }
  func.func @transform_4(%arg0: i32, %arg1: i32) -> (i32, i32) {
    %c0_i32 = arith.constant 0 : i32
    %c0_i32_0 = arith.constant 0 : i32
    return %c0_i32, %arg1 : i32, i32
  }
  func.func @transform_5(%arg0: i32, %arg1: i32) -> (i32, i32, i32) {
    %c0_i32 = arith.constant 0 : i32
    %c0_i32_0 = arith.constant 0 : i32
    return %arg0, %c0_i32, %arg1 : i32, i32, i32
  }
}

module attributes {stable_mosaic.version = 11 : i64} {
  func.func @stack_kernel(%arg0: i32, %arg1: i32, %arg2: memref<1x16x64xf32, #tpu.memory_space<vmem>>, %arg3: memref<1x16x4xf32, #tpu.memory_space<vmem>>, %arg4: memref<16x128xf32, #tpu.memory_space<vmem>>, %arg5: memref<16x128xf32, #tpu.memory_space<vmem>>, %arg6: memref<16x128xf32, #tpu.memory_space<vmem>>, %arg7: memref<4x128xbf16, #tpu.memory_space<vmem>>, %arg8: memref<1x1x64xf32, #tpu.memory_space<vmem>>, %arg9: memref<1x1x64xf32, #tpu.memory_space<vmem>>, %arg10: memref<1x64x384xbf16, #tpu.memory_space<vmem>>, %arg11: memref<1x128x4xbf16, #tpu.memory_space<vmem>>, %arg12: memref<1x128x4xbf16, #tpu.memory_space<vmem>>, %arg13: memref<1x128x128xbf16, #tpu.memory_space<vmem>>, %arg14: memref<1x1x128xf32, #tpu.memory_space<vmem>>, %arg15: memref<1x128x64xbf16, #tpu.memory_space<vmem>>, %arg16: memref<1x1x64xf32, #tpu.memory_space<vmem>>, %arg17: memref<1x1x64xf32, #tpu.memory_space<vmem>>, %arg18: memref<1x1x64xf32, #tpu.memory_space<vmem>>, %arg19: memref<1x64x256xbf16, #tpu.memory_space<vmem>>, %arg20: memref<1x1x256xf32, #tpu.memory_space<vmem>>, %arg21: memref<1x256x64xbf16, #tpu.memory_space<vmem>>, %arg22: memref<1x1x64xf32, #tpu.memory_space<vmem>>, %arg23: memref<1x16x64xbf16, #tpu.memory_space<vmem>>, %arg24: memref<16x64xf32, #tpu.memory_space<vmem>>) attributes {dimension_semantics = [#tpu.dimension_semantics<parallel>, #tpu.dimension_semantics<arbitrary>], iteration_bounds = array<i64: 2, 2>, scalar_prefetch = 0 : i64, scratch_operands = 1 : i64, tpu.core_type = #tpu.core_type<tc>, window_params = [{transform_indices = @transform_0, window_bounds = array<i64: 1, 16, 64>}, {transform_indices = @transform_1, window_bounds = array<i64: 1, 16, 4>}, {pipeline_mode = #tpu.pipeline_mode<synchronous>, transform_indices = @transform_2, window_bounds = array<i64: 16, 128>}, {pipeline_mode = #tpu.pipeline_mode<synchronous>, transform_indices = @transform_3, window_bounds = array<i64: 16, 128>}, {pipeline_mode = #tpu.pipeline_mode<synchronous>, transform_indices = @transform_4, window_bounds = array<i64: 16, 128>}, {pipeline_mode = #tpu.pipeline_mode<synchronous>, transform_indices = @transform_5, window_bounds = array<i64: 4, 128>}, {transform_indices = @transform_6, window_bounds = array<i64: 1, 1, 64>}, {transform_indices = @transform_7, window_bounds = array<i64: 1, 1, 64>}, {transform_indices = @transform_8, window_bounds = array<i64: 1, 64, 384>}, {transform_indices = @transform_9, window_bounds = array<i64: 1, 128, 4>}, {transform_indices = @transform_10, window_bounds = array<i64: 1, 128, 4>}, {transform_indices = @transform_11, window_bounds = array<i64: 1, 128, 128>}, {transform_indices = @transform_12, window_bounds = array<i64: 1, 1, 128>}, {transform_indices = @transform_13, window_bounds = array<i64: 1, 128, 64>}, {transform_indices = @transform_14, window_bounds = array<i64: 1, 1, 64>}, {transform_indices = @transform_15, window_bounds = array<i64: 1, 1, 64>}, {transform_indices = @transform_16, window_bounds = array<i64: 1, 1, 64>}, {transform_indices = @transform_17, window_bounds = array<i64: 1, 64, 256>}, {transform_indices = @transform_18, window_bounds = array<i64: 1, 1, 256>}, {transform_indices = @transform_19, window_bounds = array<i64: 1, 256, 64>}, {transform_indices = @transform_20, window_bounds = array<i64: 1, 1, 64>}, {transform_indices = @transform_21, window_bounds = array<i64: 1, 16, 64>}]} {
    %c0_i32 = arith.constant 0 : i32
    %0 = arith.cmpi eq, %arg1, %c0_i32 : i32
    %1 = arith.extui %0 : i1 to i32
    %c0_i32_0 = arith.constant 0 : i32
    %2 = arith.cmpi ne, %1, %c0_i32_0 : i32
    scf.if %2 {
      %c0_98 = arith.constant 0 : index
      %c0_99 = arith.constant 0 : index
      %c0_100 = arith.constant 0 : index
      %192 = vector.load %arg2[%c0_98, %c0_99, %c0_100] : memref<1x16x64xf32, #tpu.memory_space<vmem>>, vector<1x16x64xf32>
      %193 = vector.shape_cast %192 : vector<1x16x64xf32> to vector<16x64xf32>
      %c0_101 = arith.constant 0 : index
      %c0_102 = arith.constant 0 : index
      %194 = vector.load %arg24[%c0_101, %c0_102] : memref<16x64xf32, #tpu.memory_space<vmem>>, vector<16x64xf32>
      tpu.vector_store %arg24[%c0_101, %c0_102], %193 {strides = array<i32>} : memref<16x64xf32, #tpu.memory_space<vmem>>, vector<16x64xf32>,
    } else {
    }
    %c0 = arith.constant 0 : index
    %c0_1 = arith.constant 0 : index
    %3 = vector.load %arg24[%c0, %c0_1] : memref<16x64xf32, #tpu.memory_space<vmem>>, vector<16x64xf32>
    %c0_2 = arith.constant 0 : index
    %c0_3 = arith.constant 0 : index
    %4 = vector.load %arg4[%c0_2, %c0_3] : memref<16x128xf32, #tpu.memory_space<vmem>>, vector<16x128xf32>
    %c0_4 = arith.constant 0 : index
    %c0_5 = arith.constant 0 : index
    %5 = vector.load %arg5[%c0_4, %c0_5] : memref<16x128xf32, #tpu.memory_space<vmem>>, vector<16x128xf32>
    %c0_6 = arith.constant 0 : index
    %c0_7 = arith.constant 0 : index
    %6 = vector.load %arg6[%c0_6, %c0_7] : memref<16x128xf32, #tpu.memory_space<vmem>>, vector<16x128xf32>
    %c0_8 = arith.constant 0 : index
    %c0_9 = arith.constant 0 : index
    %c0_10 = arith.constant 0 : index
    %7 = vector.load %arg8[%c0_8, %c0_9, %c0_10] : memref<1x1x64xf32, #tpu.memory_space<vmem>>, vector<1x1x64xf32>
    %8 = vector.shape_cast %7 : vector<1x1x64xf32> to vector<1x64xf32>
    %c0_11 = arith.constant 0 : index
    %c0_12 = arith.constant 0 : index
    %c0_13 = arith.constant 0 : index
    %9 = vector.load %arg9[%c0_11, %c0_12, %c0_13] : memref<1x1x64xf32, #tpu.memory_space<vmem>>, vector<1x1x64xf32>
    %10 = vector.shape_cast %9 : vector<1x1x64xf32> to vector<1x64xf32>
    %cst = arith.constant dense<0.000000e+00> : vector<16xf32>
    %11 = vector.multi_reduction <add>, %3, %cst [1] : vector<16x64xf32> to vector<16xf32>
    %12 = vector.shape_cast %11 : vector<16xf32> to vector<16x1xf32>
    %cst_14 = arith.constant 6.400000e+01 : f32
    %13 = vector.broadcast %cst_14 : f32 to vector<16x1xf32>
    %14 = arith.divf %12, %13 : vector<16x1xf32>
    %15 = vector.broadcast %14 : vector<16x1xf32> to vector<16x64xf32>
    %16 = arith.subf %3, %15 : vector<16x64xf32>
    %17 = arith.mulf %16, %16 : vector<16x64xf32>
    %cst_15 = arith.constant dense<0.000000e+00> : vector<16xf32>
    %18 = vector.multi_reduction <add>, %17, %cst_15 [1] : vector<16x64xf32> to vector<16xf32>
    %19 = vector.shape_cast %18 : vector<16xf32> to vector<16x1xf32>
    %cst_16 = arith.constant 6.400000e+01 : f32
    %20 = vector.broadcast %cst_16 : f32 to vector<16x1xf32>
    %21 = arith.divf %19, %20 : vector<16x1xf32>
    %22 = vector.broadcast %14 : vector<16x1xf32> to vector<16x64xf32>
    %23 = arith.subf %3, %22 : vector<16x64xf32>
    %cst_17 = arith.constant 9.99999974E-6 : f32
    %24 = vector.broadcast %cst_17 : f32 to vector<16x1xf32>
    %25 = arith.addf %21, %24 : vector<16x1xf32>
    %26 = math.rsqrt %25 : vector<16x1xf32>
    %27 = vector.broadcast %26 : vector<16x1xf32> to vector<16x64xf32>
    %28 = arith.mulf %23, %27 : vector<16x64xf32>
    %29 = vector.broadcast %8 : vector<1x64xf32> to vector<16x64xf32>
    %30 = arith.mulf %28, %29 : vector<16x64xf32>
    %31 = vector.broadcast %10 : vector<1x64xf32> to vector<16x64xf32>
    %32 = arith.addf %30, %31 : vector<16x64xf32>
    %c0_18 = arith.constant 0 : index
    %c0_19 = arith.constant 0 : index
    %c0_20 = arith.constant 0 : index
    %33 = vector.load %arg10[%c0_18, %c0_19, %c0_20] : memref<1x64x384xbf16, #tpu.memory_space<vmem>>, vector<1x64x384xbf16>
    %34 = vector.shape_cast %33 : vector<1x64x384xbf16> to vector<64x384xbf16>
    %35 = arith.truncf %32 : vector<16x64xf32> to vector<16x64xbf16>
    %cst_21 = arith.constant dense<0.000000e+00> : vector<16x384xf32>
    %36 = tpu.matmul %35, %34, %cst_21 {dimension_numbers = #tpu.dot_dimension_numbers<[1], [0], [0], [1], [0, 0, 1, 1], [], []>} : vector<16x64xbf16>, vector<64x384xbf16>, vector<16x384xf32> -> vector<16x384xf32>
    %37 = vector.extract_strided_slice %36 {offsets = [0, 0], sizes = [16, 128], strides = [1, 1]} : vector<16x384xf32> to vector<16x128xf32>
    %38 = vector.extract_strided_slice %36 {offsets = [0, 128], sizes = [16, 128], strides = [1, 1]} : vector<16x384xf32> to vector<16x128xf32>
    %39 = vector.extract_strided_slice %36 {offsets = [0, 256], sizes = [16, 128], strides = [1, 1]} : vector<16x384xf32> to vector<16x128xf32>
    %c127_i32 = arith.constant 127 : i32
    %40 = tpu.dynamic_rotate %37 by %c127_i32 dim 1 : vector<16x128xf32>, i32 -> vector<16x128xf32>
    %c1_i32 = arith.constant 1 : i32
    %41 = tpu.dynamic_rotate %37 by %c1_i32 dim 1 : vector<16x128xf32>, i32 -> vector<16x128xf32>
    %42 = arith.mulf %37, %4 : vector<16x128xf32>
    %43 = arith.mulf %40, %5 : vector<16x128xf32>
    %44 = arith.addf %42, %43 : vector<16x128xf32>
    %45 = arith.mulf %41, %6 : vector<16x128xf32>
    %46 = arith.addf %44, %45 : vector<16x128xf32>
    %c127_i32_22 = arith.constant 127 : i32
    %47 = tpu.dynamic_rotate %38 by %c127_i32_22 dim 1 : vector<16x128xf32>, i32 -> vector<16x128xf32>
    %c1_i32_23 = arith.constant 1 : i32
    %48 = tpu.dynamic_rotate %38 by %c1_i32_23 dim 1 : vector<16x128xf32>, i32 -> vector<16x128xf32>
    %49 = arith.mulf %38, %4 : vector<16x128xf32>
    %50 = arith.mulf %47, %5 : vector<16x128xf32>
    %51 = arith.addf %49, %50 : vector<16x128xf32>
    %52 = arith.mulf %48, %6 : vector<16x128xf32>
    %53 = arith.addf %51, %52 : vector<16x128xf32>
    %c127_i32_24 = arith.constant 127 : i32
    %54 = tpu.dynamic_rotate %39 by %c127_i32_24 dim 1 : vector<16x128xf32>, i32 -> vector<16x128xf32>
    %c1_i32_25 = arith.constant 1 : i32
    %55 = tpu.dynamic_rotate %39 by %c1_i32_25 dim 1 : vector<16x128xf32>, i32 -> vector<16x128xf32>
    %56 = arith.mulf %39, %4 : vector<16x128xf32>
    %57 = arith.mulf %54, %5 : vector<16x128xf32>
    %58 = arith.addf %56, %57 : vector<16x128xf32>
    %59 = arith.mulf %55, %6 : vector<16x128xf32>
    %60 = arith.addf %58, %59 : vector<16x128xf32>
    %c0_26 = arith.constant 0 : index
    %c0_27 = arith.constant 0 : index
    %c0_28 = arith.constant 0 : index
    %61 = vector.load %arg3[%c0_26, %c0_27, %c0_28] : memref<1x16x4xf32, #tpu.memory_space<vmem>>, vector<1x16x4xf32>
    %62 = vector.shape_cast %61 : vector<1x16x4xf32> to vector<16x4xf32>
    %c0_29 = arith.constant 0 : index
    %c0_30 = arith.constant 0 : index
    %63 = vector.load %arg7[%c0_29, %c0_30] : memref<4x128xbf16, #tpu.memory_space<vmem>>, vector<4x128xbf16>
    %c0_31 = arith.constant 0 : index
    %c0_32 = arith.constant 0 : index
    %c0_33 = arith.constant 0 : index
    %64 = vector.load %arg11[%c0_31, %c0_32, %c0_33] : memref<1x128x4xbf16, #tpu.memory_space<vmem>>, vector<1x128x4xbf16>
    %65 = vector.shape_cast %64 : vector<1x128x4xbf16> to vector<128x4xbf16>
    %66 = arith.truncf %37 : vector<16x128xf32> to vector<16x128xbf16>
    %cst_34 = arith.constant dense<0.000000e+00> : vector<16x4xf32>
    %67 = tpu.matmul %66, %65, %cst_34 {dimension_numbers = #tpu.dot_dimension_numbers<[1], [0], [0], [1], [0, 0, 1, 1], [], []>} : vector<16x128xbf16>, vector<128x4xbf16>, vector<16x4xf32> -> vector<16x4xf32>
    %68 = arith.addf %67, %62 : vector<16x4xf32>
    %cst_35 = arith.constant dense<0xFF800000> : vector<4xf32>
    %69 = vector.multi_reduction <maximumf>, %68, %cst_35 [0] : vector<16x4xf32> to vector<4xf32>
    %70 = vector.shape_cast %69 : vector<4xf32> to vector<1x4xf32>
    %71 = vector.broadcast %70 : vector<1x4xf32> to vector<16x4xf32>
    %72 = arith.subf %68, %71 : vector<16x4xf32>
    %73 = math.exp %72 : vector<16x4xf32>
    %cst_36 = arith.constant dense<0.000000e+00> : vector<4xf32>
    %74 = vector.multi_reduction <add>, %73, %cst_36 [0] : vector<16x4xf32> to vector<4xf32>
    %75 = vector.shape_cast %74 : vector<4xf32> to vector<1x4xf32>
    %76 = tpu.reciprocal %75 {approx = true} : vector<1x4xf32> -> vector<1x4xf32>
    %77 = vector.broadcast %76 : vector<1x4xf32> to vector<16x4xf32>
    %78 = arith.mulf %73, %77 : vector<16x4xf32>
    %79 = arith.truncf %78 : vector<16x4xf32> to vector<16x4xbf16>
    %cst_37 = arith.constant dense<0.000000e+00> : vector<16x128xf32>
    %80 = tpu.matmul %79, %63, %cst_37 {dimension_numbers = #tpu.dot_dimension_numbers<[1], [0], [0], [1], [0, 0, 1, 1], [], []>} : vector<16x4xbf16>, vector<4x128xbf16>, vector<16x128xf32> -> vector<16x128xf32>
    %81 = arith.mulf %80, %46 : vector<16x128xf32>
    %cst_38 = arith.constant dense<0.000000e+00> : vector<128xf32>
    %82 = vector.multi_reduction <add>, %81, %cst_38 [0] : vector<16x128xf32> to vector<128xf32>
    %83 = vector.shape_cast %82 : vector<128xf32> to vector<1x128xf32>
    %84 = vector.broadcast %83 : vector<1x128xf32> to vector<16x128xf32>
    %85 = arith.mulf %38, %84 : vector<16x128xf32>
    %c0_39 = arith.constant 0 : index
    %c0_40 = arith.constant 0 : index
    %c0_41 = arith.constant 0 : index
    %86 = vector.load %arg12[%c0_39, %c0_40, %c0_41] : memref<1x128x4xbf16, #tpu.memory_space<vmem>>, vector<1x128x4xbf16>
    %87 = vector.shape_cast %86 : vector<1x128x4xbf16> to vector<128x4xbf16>
    %88 = arith.truncf %85 : vector<16x128xf32> to vector<16x128xbf16>
    %cst_42 = arith.constant dense<0.000000e+00> : vector<16x4xf32>
    %89 = tpu.matmul %88, %87, %cst_42 {dimension_numbers = #tpu.dot_dimension_numbers<[1], [0], [0], [1], [0, 0, 1, 1], [], []>} : vector<16x128xbf16>, vector<128x4xbf16>, vector<16x4xf32> -> vector<16x4xf32>
    %90 = arith.addf %89, %62 : vector<16x4xf32>
    %cst_43 = arith.constant dense<0xFF800000> : vector<4xf32>
    %91 = vector.multi_reduction <maximumf>, %90, %cst_43 [0] : vector<16x4xf32> to vector<4xf32>
    %92 = vector.shape_cast %91 : vector<4xf32> to vector<1x4xf32>
    %93 = vector.broadcast %92 : vector<1x4xf32> to vector<16x4xf32>
    %94 = arith.subf %90, %93 : vector<16x4xf32>
    %95 = math.exp %94 : vector<16x4xf32>
    %cst_44 = arith.constant dense<0.000000e+00> : vector<4xf32>
    %96 = vector.multi_reduction <add>, %95, %cst_44 [0] : vector<16x4xf32> to vector<4xf32>
    %97 = vector.shape_cast %96 : vector<4xf32> to vector<1x4xf32>
    %98 = tpu.reciprocal %97 {approx = true} : vector<1x4xf32> -> vector<1x4xf32>
    %99 = vector.broadcast %98 : vector<1x4xf32> to vector<16x4xf32>
    %100 = arith.mulf %95, %99 : vector<16x4xf32>
    %101 = arith.truncf %100 : vector<16x4xf32> to vector<16x4xbf16>
    %cst_45 = arith.constant dense<0.000000e+00> : vector<16x128xf32>
    %102 = tpu.matmul %101, %63, %cst_45 {dimension_numbers = #tpu.dot_dimension_numbers<[1], [0], [0], [1], [0, 0, 1, 1], [], []>} : vector<16x4xbf16>, vector<4x128xbf16>, vector<16x128xf32> -> vector<16x128xf32>
    %103 = arith.mulf %102, %53 : vector<16x128xf32>
    %cst_46 = arith.constant dense<0.000000e+00> : vector<128xf32>
    %104 = vector.multi_reduction <add>, %103, %cst_46 [0] : vector<16x128xf32> to vector<128xf32>
    %105 = vector.shape_cast %104 : vector<128xf32> to vector<1x128xf32>
    %106 = vector.broadcast %105 : vector<1x128xf32> to vector<16x128xf32>
    %107 = arith.mulf %60, %106 : vector<16x128xf32>
    %c0_47 = arith.constant 0 : index
    %c0_48 = arith.constant 0 : index
    %c0_49 = arith.constant 0 : index
    %108 = vector.load %arg13[%c0_47, %c0_48, %c0_49] : memref<1x128x128xbf16, #tpu.memory_space<vmem>>, vector<1x128x128xbf16>
    %109 = vector.shape_cast %108 : vector<1x128x128xbf16> to vector<128x128xbf16>
    %110 = arith.truncf %107 : vector<16x128xf32> to vector<16x128xbf16>
    %cst_50 = arith.constant dense<0.000000e+00> : vector<16x128xf32>
    %111 = tpu.matmul %110, %109, %cst_50 {dimension_numbers = #tpu.dot_dimension_numbers<[1], [0], [0], [1], [0, 0, 1, 1], [], []>} : vector<16x128xbf16>, vector<128x128xbf16>, vector<16x128xf32> -> vector<16x128xf32>
    %c0_51 = arith.constant 0 : index
    %c0_52 = arith.constant 0 : index
    %c0_53 = arith.constant 0 : index
    %112 = vector.load %arg14[%c0_51, %c0_52, %c0_53] : memref<1x1x128xf32, #tpu.memory_space<vmem>>, vector<1x1x128xf32>
    %113 = vector.shape_cast %112 : vector<1x1x128xf32> to vector<1x128xf32>
    %114 = vector.broadcast %113 : vector<1x128xf32> to vector<16x128xf32>
    %115 = arith.addf %111, %114 : vector<16x128xf32>
    %116 = arith.addf %115, %37 : vector<16x128xf32>
    %c0_54 = arith.constant 0 : index
    %c0_55 = arith.constant 0 : index
    %c0_56 = arith.constant 0 : index
    %117 = vector.load %arg15[%c0_54, %c0_55, %c0_56] : memref<1x128x64xbf16, #tpu.memory_space<vmem>>, vector<1x128x64xbf16>
    %118 = vector.shape_cast %117 : vector<1x128x64xbf16> to vector<128x64xbf16>
    %119 = arith.truncf %116 : vector<16x128xf32> to vector<16x128xbf16>
    %cst_57 = arith.constant dense<0.000000e+00> : vector<16x64xf32>
    %120 = tpu.matmul %119, %118, %cst_57 {dimension_numbers = #tpu.dot_dimension_numbers<[1], [0], [0], [1], [0, 0, 1, 1], [], []>} : vector<16x128xbf16>, vector<128x64xbf16>, vector<16x64xf32> -> vector<16x64xf32>
    %121 = arith.addf %3, %120 : vector<16x64xf32>
    %c0_58 = arith.constant 0 : index
    %c0_59 = arith.constant 0 : index
    %c0_60 = arith.constant 0 : index
    %122 = vector.load %arg16[%c0_58, %c0_59, %c0_60] : memref<1x1x64xf32, #tpu.memory_space<vmem>>, vector<1x1x64xf32>
    %123 = vector.shape_cast %122 : vector<1x1x64xf32> to vector<1x64xf32>
    %124 = vector.broadcast %123 : vector<1x64xf32> to vector<16x64xf32>
    %125 = arith.addf %121, %124 : vector<16x64xf32>
    %c0_61 = arith.constant 0 : index
    %c0_62 = arith.constant 0 : index
    %126 = vector.load %arg24[%c0_61, %c0_62] : memref<16x64xf32, #tpu.memory_space<vmem>>, vector<16x64xf32>
    tpu.vector_store %arg24[%c0_61, %c0_62], %125 {strides = array<i32>} : memref<16x64xf32, #tpu.memory_space<vmem>>, vector<16x64xf32>,
    %c0_63 = arith.constant 0 : index
    %c0_64 = arith.constant 0 : index
    %c0_65 = arith.constant 0 : index
    %127 = vector.load %arg17[%c0_63, %c0_64, %c0_65] : memref<1x1x64xf32, #tpu.memory_space<vmem>>, vector<1x1x64xf32>
    %128 = vector.shape_cast %127 : vector<1x1x64xf32> to vector<1x64xf32>
    %c0_66 = arith.constant 0 : index
    %c0_67 = arith.constant 0 : index
    %c0_68 = arith.constant 0 : index
    %129 = vector.load %arg18[%c0_66, %c0_67, %c0_68] : memref<1x1x64xf32, #tpu.memory_space<vmem>>, vector<1x1x64xf32>
    %130 = vector.shape_cast %129 : vector<1x1x64xf32> to vector<1x64xf32>
    %c0_69 = arith.constant 0 : index
    %c0_70 = arith.constant 0 : index
    %c0_71 = arith.constant 0 : index
    %131 = vector.load %arg19[%c0_69, %c0_70, %c0_71] : memref<1x64x256xbf16, #tpu.memory_space<vmem>>, vector<1x64x256xbf16>
    %132 = vector.shape_cast %131 : vector<1x64x256xbf16> to vector<64x256xbf16>
    %c0_72 = arith.constant 0 : index
    %c0_73 = arith.constant 0 : index
    %c0_74 = arith.constant 0 : index
    %133 = vector.load %arg20[%c0_72, %c0_73, %c0_74] : memref<1x1x256xf32, #tpu.memory_space<vmem>>, vector<1x1x256xf32>
    %134 = vector.shape_cast %133 : vector<1x1x256xf32> to vector<1x256xf32>
    %c0_75 = arith.constant 0 : index
    %c0_76 = arith.constant 0 : index
    %c0_77 = arith.constant 0 : index
    %135 = vector.load %arg21[%c0_75, %c0_76, %c0_77] : memref<1x256x64xbf16, #tpu.memory_space<vmem>>, vector<1x256x64xbf16>
    %136 = vector.shape_cast %135 : vector<1x256x64xbf16> to vector<256x64xbf16>
    %c0_78 = arith.constant 0 : index
    %c0_79 = arith.constant 0 : index
    %c0_80 = arith.constant 0 : index
    %137 = vector.load %arg22[%c0_78, %c0_79, %c0_80] : memref<1x1x64xf32, #tpu.memory_space<vmem>>, vector<1x1x64xf32>
    %138 = vector.shape_cast %137 : vector<1x1x64xf32> to vector<1x64xf32>
    %c0_i32_81 = arith.constant 0 : i32
    %c16_i32 = arith.constant 16 : i32
    %139 = arith.muli %c0_i32_81, %c16_i32 : i32
    %140 = tpu.assume_multiple %139, 16 : i32
    %141 = arith.index_cast %140 : i32 to index
    %c0_82 = arith.constant 0 : index
    %142 = vector.load %arg24[%141, %c0_82] : memref<16x64xf32, #tpu.memory_space<vmem>>, vector<16x64xf32>
    %cst_83 = arith.constant dense<0.000000e+00> : vector<16xf32>
    %143 = vector.multi_reduction <add>, %142, %cst_83 [1] : vector<16x64xf32> to vector<16xf32>
    %144 = vector.shape_cast %143 : vector<16xf32> to vector<16x1xf32>
    %cst_84 = arith.constant 6.400000e+01 : f32
    %145 = vector.broadcast %cst_84 : f32 to vector<16x1xf32>
    %146 = arith.divf %144, %145 : vector<16x1xf32>
    %147 = vector.broadcast %146 : vector<16x1xf32> to vector<16x64xf32>
    %148 = arith.subf %142, %147 : vector<16x64xf32>
    %149 = arith.mulf %148, %148 : vector<16x64xf32>
    %cst_85 = arith.constant dense<0.000000e+00> : vector<16xf32>
    %150 = vector.multi_reduction <add>, %149, %cst_85 [1] : vector<16x64xf32> to vector<16xf32>
    %151 = vector.shape_cast %150 : vector<16xf32> to vector<16x1xf32>
    %cst_86 = arith.constant 6.400000e+01 : f32
    %152 = vector.broadcast %cst_86 : f32 to vector<16x1xf32>
    %153 = arith.divf %151, %152 : vector<16x1xf32>
    %154 = vector.broadcast %146 : vector<16x1xf32> to vector<16x64xf32>
    %155 = arith.subf %142, %154 : vector<16x64xf32>
    %cst_87 = arith.constant 9.99999974E-6 : f32
    %156 = vector.broadcast %cst_87 : f32 to vector<16x1xf32>
    %157 = arith.addf %153, %156 : vector<16x1xf32>
    %158 = math.rsqrt %157 : vector<16x1xf32>
    %159 = vector.broadcast %158 : vector<16x1xf32> to vector<16x64xf32>
    %160 = arith.mulf %155, %159 : vector<16x64xf32>
    %161 = vector.broadcast %128 : vector<1x64xf32> to vector<16x64xf32>
    %162 = arith.mulf %160, %161 : vector<16x64xf32>
    %163 = vector.broadcast %130 : vector<1x64xf32> to vector<16x64xf32>
    %164 = arith.addf %162, %163 : vector<16x64xf32>
    %165 = arith.truncf %164 : vector<16x64xf32> to vector<16x64xbf16>
    %cst_88 = arith.constant dense<0.000000e+00> : vector<16x256xf32>
    %166 = tpu.matmul %165, %132, %cst_88 {dimension_numbers = #tpu.dot_dimension_numbers<[1], [0], [0], [1], [0, 0, 1, 1], [], []>} : vector<16x64xbf16>, vector<64x256xbf16>, vector<16x256xf32> -> vector<16x256xf32>
    %167 = vector.broadcast %134 : vector<1x256xf32> to vector<16x256xf32>
    %168 = arith.addf %166, %167 : vector<16x256xf32>
    %cst_89 = arith.constant 5.000000e-01 : f32
    %169 = vector.broadcast %cst_89 : f32 to vector<16x256xf32>
    %170 = arith.mulf %169, %168 : vector<16x256xf32>
    %cst_90 = arith.constant 4.471500e-02 : f32
    %171 = vector.broadcast %cst_90 : f32 to vector<16x256xf32>
    %172 = arith.mulf %171, %168 : vector<16x256xf32>
    %173 = arith.mulf %172, %168 : vector<16x256xf32>
    %174 = arith.mulf %173, %168 : vector<16x256xf32>
    %175 = arith.addf %168, %174 : vector<16x256xf32>
    %cst_91 = arith.constant 0.797884583 : f32
    %176 = vector.broadcast %cst_91 : f32 to vector<16x256xf32>
    %177 = arith.mulf %176, %175 : vector<16x256xf32>
    %178 = math.tanh %177 : vector<16x256xf32>
    %cst_92 = arith.constant 1.000000e+00 : f32
    %179 = vector.broadcast %cst_92 : f32 to vector<16x256xf32>
    %180 = arith.addf %179, %178 : vector<16x256xf32>
    %181 = arith.mulf %170, %180 : vector<16x256xf32>
    %182 = arith.truncf %181 : vector<16x256xf32> to vector<16x256xbf16>
    %cst_93 = arith.constant dense<0.000000e+00> : vector<16x64xf32>
    %183 = tpu.matmul %182, %136, %cst_93 {dimension_numbers = #tpu.dot_dimension_numbers<[1], [0], [0], [1], [0, 0, 1, 1], [], []>} : vector<16x256xbf16>, vector<256x64xbf16>, vector<16x64xf32> -> vector<16x64xf32>
    %184 = arith.addf %142, %183 : vector<16x64xf32>
    %185 = vector.broadcast %138 : vector<1x64xf32> to vector<16x64xf32>
    %186 = arith.addf %184, %185 : vector<16x64xf32>
    %187 = arith.index_cast %140 : i32 to index
    %c0_94 = arith.constant 0 : index
    %188 = vector.load %arg24[%187, %c0_94] : memref<16x64xf32, #tpu.memory_space<vmem>>, vector<16x64xf32>
    tpu.vector_store %arg24[%187, %c0_94], %186 {strides = array<i32>} : memref<16x64xf32, #tpu.memory_space<vmem>>, vector<16x64xf32>,
    %c1_i32_95 = arith.constant 1 : i32
    %c1_i32_96 = arith.constant 1 : i32
    %189 = arith.cmpi eq, %arg1, %c1_i32_96 : i32
    %190 = arith.extui %189 : i1 to i32
    %c0_i32_97 = arith.constant 0 : i32
    %191 = arith.cmpi ne, %190, %c0_i32_97 : i32
    scf.if %191 {
      %c0_98 = arith.constant 0 : index
      %c0_99 = arith.constant 0 : index
      %192 = vector.load %arg24[%c0_98, %c0_99] : memref<16x64xf32, #tpu.memory_space<vmem>>, vector<16x64xf32>
      %193 = arith.truncf %192 : vector<16x64xf32> to vector<16x64xbf16>
      %c0_100 = arith.constant 0 : index
      %c0_101 = arith.constant 0 : index
      %c0_102 = arith.constant 0 : index
      %194 = vector.load %arg23[%c0_100, %c0_101, %c0_102] : memref<1x16x64xbf16, #tpu.memory_space<vmem>>, vector<1x16x64xbf16>
      %195 = vector.shape_cast %194 : vector<1x16x64xbf16> to vector<16x64xbf16>
      %196 = vector.shape_cast %193 : vector<16x64xbf16> to vector<1x16x64xbf16>
      tpu.vector_store %arg23[%c0_100, %c0_101, %c0_102], %196 {strides = array<i32>} : memref<1x16x64xbf16, #tpu.memory_space<vmem>>, vector<1x16x64xbf16>,
    } else {
    }
    return
  }
  func.func @transform_0(%arg0: i32, %arg1: i32) -> (i32, i32, i32) {
    %c0_i32 = arith.constant 0 : i32
    %c0_i32_0 = arith.constant 0 : i32
    %c0_i32_1 = arith.constant 0 : i32
    return %arg0, %c0_i32, %c0_i32_0 : i32, i32, i32
  }
  func.func @transform_1(%arg0: i32, %arg1: i32) -> (i32, i32, i32) {
    %c0_i32 = arith.constant 0 : i32
    %c0_i32_0 = arith.constant 0 : i32
    %c0_i32_1 = arith.constant 0 : i32
    return %arg0, %c0_i32, %c0_i32_0 : i32, i32, i32
  }
  func.func @transform_2(%arg0: i32, %arg1: i32) -> (i32, i32) {
    %c0_i32 = arith.constant 0 : i32
    %c0_i32_0 = arith.constant 0 : i32
    %c0_i32_1 = arith.constant 0 : i32
    return %c0_i32, %c0_i32_0 : i32, i32
  }
  func.func @transform_3(%arg0: i32, %arg1: i32) -> (i32, i32) {
    %c0_i32 = arith.constant 0 : i32
    %c0_i32_0 = arith.constant 0 : i32
    %c0_i32_1 = arith.constant 0 : i32
    return %c0_i32, %c0_i32_0 : i32, i32
  }
  func.func @transform_4(%arg0: i32, %arg1: i32) -> (i32, i32) {
    %c0_i32 = arith.constant 0 : i32
    %c0_i32_0 = arith.constant 0 : i32
    %c0_i32_1 = arith.constant 0 : i32
    return %c0_i32, %c0_i32_0 : i32, i32
  }
  func.func @transform_5(%arg0: i32, %arg1: i32) -> (i32, i32) {
    %c0_i32 = arith.constant 0 : i32
    %c0_i32_0 = arith.constant 0 : i32
    %c0_i32_1 = arith.constant 0 : i32
    return %c0_i32, %c0_i32_0 : i32, i32
  }
  func.func @transform_6(%arg0: i32, %arg1: i32) -> (i32, i32, i32) {
    %c0_i32 = arith.constant 0 : i32
    %c0_i32_0 = arith.constant 0 : i32
    %c0_i32_1 = arith.constant 0 : i32
    return %arg1, %c0_i32, %c0_i32_0 : i32, i32, i32
  }
  func.func @transform_7(%arg0: i32, %arg1: i32) -> (i32, i32, i32) {
    %c0_i32 = arith.constant 0 : i32
    %c0_i32_0 = arith.constant 0 : i32
    %c0_i32_1 = arith.constant 0 : i32
    return %arg1, %c0_i32, %c0_i32_0 : i32, i32, i32
  }
  func.func @transform_8(%arg0: i32, %arg1: i32) -> (i32, i32, i32) {
    %c0_i32 = arith.constant 0 : i32
    %c0_i32_0 = arith.constant 0 : i32
    %c0_i32_1 = arith.constant 0 : i32
    return %arg1, %c0_i32, %c0_i32_0 : i32, i32, i32
  }
  func.func @transform_9(%arg0: i32, %arg1: i32) -> (i32, i32, i32) {
    %c0_i32 = arith.constant 0 : i32
    %c0_i32_0 = arith.constant 0 : i32
    %c0_i32_1 = arith.constant 0 : i32
    return %arg1, %c0_i32, %c0_i32_0 : i32, i32, i32
  }
  func.func @transform_10(%arg0: i32, %arg1: i32) -> (i32, i32, i32) {
    %c0_i32 = arith.constant 0 : i32
    %c0_i32_0 = arith.constant 0 : i32
    %c0_i32_1 = arith.constant 0 : i32
    return %arg1, %c0_i32, %c0_i32_0 : i32, i32, i32
  }
  func.func @transform_11(%arg0: i32, %arg1: i32) -> (i32, i32, i32) {
    %c0_i32 = arith.constant 0 : i32
    %c0_i32_0 = arith.constant 0 : i32
    %c0_i32_1 = arith.constant 0 : i32
    return %arg1, %c0_i32, %c0_i32_0 : i32, i32, i32
  }
  func.func @transform_12(%arg0: i32, %arg1: i32) -> (i32, i32, i32) {
    %c0_i32 = arith.constant 0 : i32
    %c0_i32_0 = arith.constant 0 : i32
    %c0_i32_1 = arith.constant 0 : i32
    return %arg1, %c0_i32, %c0_i32_0 : i32, i32, i32
  }
  func.func @transform_13(%arg0: i32, %arg1: i32) -> (i32, i32, i32) {
    %c0_i32 = arith.constant 0 : i32
    %c0_i32_0 = arith.constant 0 : i32
    %c0_i32_1 = arith.constant 0 : i32
    return %arg1, %c0_i32, %c0_i32_0 : i32, i32, i32
  }
  func.func @transform_14(%arg0: i32, %arg1: i32) -> (i32, i32, i32) {
    %c0_i32 = arith.constant 0 : i32
    %c0_i32_0 = arith.constant 0 : i32
    %c0_i32_1 = arith.constant 0 : i32
    return %arg1, %c0_i32, %c0_i32_0 : i32, i32, i32
  }
  func.func @transform_15(%arg0: i32, %arg1: i32) -> (i32, i32, i32) {
    %c0_i32 = arith.constant 0 : i32
    %c0_i32_0 = arith.constant 0 : i32
    %c0_i32_1 = arith.constant 0 : i32
    return %arg1, %c0_i32, %c0_i32_0 : i32, i32, i32
  }
  func.func @transform_16(%arg0: i32, %arg1: i32) -> (i32, i32, i32) {
    %c0_i32 = arith.constant 0 : i32
    %c0_i32_0 = arith.constant 0 : i32
    %c0_i32_1 = arith.constant 0 : i32
    return %arg1, %c0_i32, %c0_i32_0 : i32, i32, i32
  }
  func.func @transform_17(%arg0: i32, %arg1: i32) -> (i32, i32, i32) {
    %c0_i32 = arith.constant 0 : i32
    %c0_i32_0 = arith.constant 0 : i32
    %c0_i32_1 = arith.constant 0 : i32
    return %arg1, %c0_i32, %c0_i32_0 : i32, i32, i32
  }
  func.func @transform_18(%arg0: i32, %arg1: i32) -> (i32, i32, i32) {
    %c0_i32 = arith.constant 0 : i32
    %c0_i32_0 = arith.constant 0 : i32
    %c0_i32_1 = arith.constant 0 : i32
    return %arg1, %c0_i32, %c0_i32_0 : i32, i32, i32
  }
  func.func @transform_19(%arg0: i32, %arg1: i32) -> (i32, i32, i32) {
    %c0_i32 = arith.constant 0 : i32
    %c0_i32_0 = arith.constant 0 : i32
    %c0_i32_1 = arith.constant 0 : i32
    return %arg1, %c0_i32, %c0_i32_0 : i32, i32, i32
  }
  func.func @transform_20(%arg0: i32, %arg1: i32) -> (i32, i32, i32) {
    %c0_i32 = arith.constant 0 : i32
    %c0_i32_0 = arith.constant 0 : i32
    %c0_i32_1 = arith.constant 0 : i32
    return %arg1, %c0_i32, %c0_i32_0 : i32, i32, i32
  }
  func.func @transform_21(%arg0: i32, %arg1: i32) -> (i32, i32, i32) {
    %c0_i32 = arith.constant 0 : i32
    %c0_i32_0 = arith.constant 0 : i32
    %c0_i32_1 = arith.constant 0 : i32
    return %arg0, %c0_i32, %c0_i32_0 : i32, i32, i32
  }
}

</mosaic_0001>

<llo_original>
// kernel: fast_transformer_forward.3
$region0: #{fast_transformer_forward.3}
  #allocation0 [shape = 'u32[]', space=smem, size = 0x4, offset = 0x4, fixed_abs, tag = 'smem constant byte address 0x4 - core index']
  #allocation1 [shape = 'u32[144,128]{1,0:T(1,128)}', space=vmem, size = 0x12000, scoped, tag = 'internal scratch']
  #allocation2 [shape = 'bf16[16,64]{1,0:T(16,128)(2,1)}', space=vmem, size = 0x1000, scoped, tag = 'scratch operand']
  %s0 = inlined_call_operand.vmem [shape: bf16[2,16,64], index: 0, kind: input, shape index: {}]
  %s1 = inlined_call_operand.vmem [shape: f32[1,64], index: 1, kind: input, shape index: {}]
  %s2 = inlined_call_operand.vmem [shape: f32[1,64], index: 2, kind: input, shape index: {}]
  %s3 = inlined_call_operand.vmem [shape: bf16[64,256], index: 3, kind: input, shape index: {}]
  %s4 = inlined_call_operand.vmem [shape: f32[1,256], index: 4, kind: input, shape index: {}]
  %s5 = inlined_call_operand.hbm [shape: f32[2,16,256], index: 5, kind: output, shape index: {}]
  %s6 = sld [smem:[#allocation0]]
  $region57: #{fast_transformer_forward.3} parent=0
    _
  %s8 = ssub.s32 1, %s6
  %s9 = scalar_select 0, %s8, %s6
  $region1: #{fast_transformer_forward.3} parent=0
    #allocation3 [shape = 'u8[32768]{0}', space=vmem, size = 0x8000, scoped, tag = 'output window, operand 0']
    #allocation4 [shape = 's32[2]{0}', space=sflag, size = 0x8, scoped, tag = 'scoped memory for fast_transformer_forward.3']
    %10 = vsyncpa [#allocation4], 0
    %s11 = scalar_lea.sflag [#allocation4], 1
    %12 = vsyncpa %s11, 0
    loop: start=0, step=1, limit=4
    $region2: #{fast_transformer_forward.3} parent=1 // loop_pre_header
      _
    $region3: #{fast_transformer_forward.3} parent=1 // loop_header
      %s14 = sphi 0, %s18
      %p15 = scmp.ge.s32.totalorder %s14, 4
      %s21 = sphi 0, %s33
      %s22 = sphi 0, %s29
      %s23 = sphi 0, %s21
      %s24 = sphi 0, %s22
      %s25 = sphi 0, %s23
      %s26 = sphi 0, %s24
      %s36 = sphi 0, %s38
      %s39 = sphi 0, %s36
      %s40 = sphi 0, %s39
      %s56 = sphi 0, %s40
      %s60 = sphi 0, %s60
      %s62 = sphi 0, %s60
      %s63 = sphi 0, %s62
      %s77 = sphi 0, %s63
      %s81 = sphi 0, %s81
      %s83 = sphi 0, %s81
      %s84 = sphi 0, %s83
      %s98 = sphi 0, %s84
      %s104 = sphi 0, %s106
      %s107 = sphi 0, %s104
      %s108 = sphi 0, %s107
      %s124 = sphi 0, %s108
      %s130 = sphi 0, %s132
      %s133 = sphi 0, %s130
      %s134 = sphi 0, %s133
      %s150 = sphi 0, %s134
      %s158 = sphi 0, %s160
      %s161 = sphi 0, %s158
      %s162 = sphi 0, %s161
      %s178 = sphi 0, %s162
    $region4: #{fast_transformer_forward.3} parent=1 // loop_header_branch
      %17 = sbr.rel (%p15) target = $region8
    $region5: #{fast_transformer_forward.3} parent=1 // loop_body
      %s19 = ssub.s32 %s14, 1
      %s20 = ssub.s32 %s14, 2
      %s27 = sadd.s32 1, %s22
      %p28 = scmp.ge.s32.totalorder %s27, 1
      %s29 = scalar_select %p28, 0, %s27
      %s30 = sadd.s32 1, %s21
      %s31 = scalar_select %p28, %s30, %s21
      %p32 = scmp.ge.s32.totalorder %s31, 2
      %s33 = scalar_select %p32, 0, %s31
      %s34 = ssub.s32 %s21, %s33
      %p35 = scmp.eq.s32.totalorder %s34, 0
      %s37 = sadd.s32 %s36, 1
      %s38 = scalar_select %p35, %s36, %s37
      %p41 = pneg %p35
      %p42 = scmp.eq.s32.totalorder %s14, 1
      %p43 = por %p41, %p42
      %p44 = scmp.ne.s32.totalorder %s36, %s39
      %p45 = scmp.eq.s32.totalorder %s14, 0
      %p46 = por %p44, %p45
      %p47 = scmp.ne.s32.totalorder %s36, %s39
      %p48 = scmp.eq.s32.totalorder %s19, 1
      %p49 = por %p47, %p48
      %p50 = scmp.ne.s32.totalorder %s39, %s40
      %p51 = scmp.eq.s32.totalorder %s19, 0
      %p52 = por %p50, %p51
      %p53 = scmp.ne.s32.totalorder %s39, %s40
      %p54 = scmp.eq.s32.totalorder %s20, 1
      %p55 = por %p53, %p54
      %p57 = scmp.ne.s32.totalorder %s40, %s56
      %p58 = scmp.eq.s32.totalorder %s20, 0
      %p59 = por %p57, %p58
      %s61 = sadd.s32 %s60, 1
      %p64 = scmp.eq.s32.totalorder %s14, 1
      %p65 = scmp.ne.s32.totalorder %s60, %s62
      %p66 = scmp.eq.s32.totalorder %s14, 0
      %p67 = por %p65, %p66
      %p68 = scmp.ne.s32.totalorder %s60, %s62
      %p69 = scmp.eq.s32.totalorder %s19, 1
      %p70 = por %p68, %p69
      %p71 = scmp.ne.s32.totalorder %s62, %s63
      %p72 = scmp.eq.s32.totalorder %s19, 0
      %p73 = por %p71, %p72
      %p74 = scmp.ne.s32.totalorder %s62, %s63
      %p75 = scmp.eq.s32.totalorder %s20, 1
      %p76 = por %p74, %p75
      %p78 = scmp.ne.s32.totalorder %s63, %s77
      %p79 = scmp.eq.s32.totalorder %s20, 0
      %p80 = por %p78, %p79
      %s82 = sadd.s32 %s81, 1
      %p85 = scmp.eq.s32.totalorder %s14, 1
      %p86 = scmp.ne.s32.totalorder %s81, %s83
      %p87 = scmp.eq.s32.totalorder %s14, 0
      %p88 = por %p86, %p87
      %p89 = scmp.ne.s32.totalorder %s81, %s83
      %p90 = scmp.eq.s32.totalorder %s19, 1
      %p91 = por %p89, %p90
      %p92 = scmp.ne.s32.totalorder %s83, %s84
      %p93 = scmp.eq.s32.totalorder %s19, 0
      %p94 = por %p92, %p93
      %p95 = scmp.ne.s32.totalorder %s83, %s84
      %p96 = scmp.eq.s32.totalorder %s20, 1
      %p97 = por %p95, %p96
      %p99 = scmp.ne.s32.totalorder %s84, %s98
      %p100 = scmp.eq.s32.totalorder %s20, 0
      %p101 = por %p99, %p100
      %s102 = ssub.s32 %s22, %s29
      %p103 = scmp.eq.s32.totalorder %s102, 0
      %s105 = sadd.s32 %s104, 1
      %s106 = scalar_select %p103, %s104, %s105
      %p109 = pneg %p103
      %p110 = scmp.eq.s32.totalorder %s14, 1
      %p111 = por %p109, %p110
      %p112 = scmp.ne.s32.totalorder %s104, %s107
      %p113 = scmp.eq.s32.totalorder %s14, 0
      %p114 = por %p112, %p113
      %p115 = scmp.ne.s32.totalorder %s104, %s107
      %p116 = scmp.eq.s32.totalorder %s19, 1
      %p117 = por %p115, %p116
      %p118 = scmp.ne.s32.totalorder %s107, %s108
      %p119 = scmp.eq.s32.totalorder %s19, 0
      %p120 = por %p118, %p119
      %p121 = scmp.ne.s32.totalorder %s107, %s108
      %p122 = scmp.eq.s32.totalorder %s20, 1
      %p123 = por %p121, %p122
      %p125 = scmp.ne.s32.totalorder %s108, %s124
      %p126 = scmp.eq.s32.totalorder %s20, 0
      %p127 = por %p125, %p126
      %s128 = ssub.s32 %s22, %s29
      %p129 = scmp.eq.s32.totalorder %s128, 0
      %s131 = sadd.s32 %s130, 1
      %s132 = scalar_select %p129, %s130, %s131
      %p135 = pneg %p129
      %p136 = scmp.eq.s32.totalorder %s14, 1
      %p137 = por %p135, %p136
      %p138 = scmp.ne.s32.totalorder %s130, %s133
      %p139 = scmp.eq.s32.totalorder %s14, 0
      %p140 = por %p138, %p139
      %p141 = scmp.ne.s32.totalorder %s130, %s133
      %p142 = scmp.eq.s32.totalorder %s19, 1
      %p143 = por %p141, %p142
      %p144 = scmp.ne.s32.totalorder %s133, %s134
      %p145 = scmp.eq.s32.totalorder %s19, 0
      %p146 = por %p144, %p145
      %p147 = scmp.ne.s32.totalorder %s133, %s134
      %p148 = scmp.eq.s32.totalorder %s20, 1
      %p149 = por %p147, %p148
      %p151 = scmp.ne.s32.totalorder %s134, %s150
      %p152 = scmp.eq.s32.totalorder %s20, 0
      %p153 = por %p151, %p152
      %s154 = ssub.s32 %s21, %s33
      %s155 = ssub.s32 %s22, %s29
      %s156 = sor.u32 %s154, %s155
      %p157 = scmp.eq.s32.totalorder %s156, 0
      %s159 = sadd.s32 %s158, 1
      %s160 = scalar_select %p157, %s158, %s159
      %p163 = pneg %p157
      %p164 = scmp.eq.s32.totalorder %s14, 1
      %p165 = por %p163, %p164
      %p166 = scmp.ne.s32.totalorder %s158, %s161
      %p167 = scmp.eq.s32.totalorder %s14, 0
      %p168 = por %p166, %p167
      %p169 = scmp.ne.s32.totalorder %s158, %s161
      %p170 = scmp.eq.s32.totalorder %s19, 1
      %p171 = por %p169, %p170
      %p172 = scmp.ne.s32.totalorder %s161, %s162
      %p173 = scmp.eq.s32.totalorder %s19, 0
      %p174 = por %p172, %p173
      %p175 = scmp.ne.s32.totalorder %s161, %s162
      %p176 = scmp.eq.s32.totalorder %s20, 1
      %p177 = por %p175, %p176
      %p179 = scmp.ne.s32.totalorder %s162, %s178
      %p180 = scmp.eq.s32.totalorder %s20, 0
      %p181 = por %p179, %p180
      %p182 = scmp.le.s32.totalorder 1, %s14
      %p183 = scmp.lt.s32.totalorder %s14, 3
      %p184 = pnand %p182, %p183
      %p185 = pneg %p184
      // Predicated region
      $region9: #{fast_transformer_forward.3} parent=5 // pred_check
        _
      $region10: #{fast_transformer_forward.3} parent=5 // pred_check_branch
        %187 = sbr.rel (%p184) target = $region12
      $region11: #{fast_transformer_forward.3} parent=5 // pred_region
        %s188 = ssub.s32 %s14, 1
        // Predicated region
        $region13: #{fast_transformer_forward.3} parent=11 // pred_check
          %p189 = pneg %p73
        $region14: #{fast_transformer_forward.3} parent=11 // pred_check_branch
          %191 = sbr.rel (%p189) target = $region16
        $region15: #{fast_transformer_forward.3} parent=11 // pred_region
          _
        $region16: #{fast_transformer_forward.3} parent=11 // pred_fallthru
          _
        // Predicated region
        $region17: #{fast_transformer_forward.3} parent=11 // pred_check
          %p192 = pneg %p94
        $region18: #{fast_transformer_forward.3} parent=11 // pred_check_branch
          %194 = sbr.rel (%p192) target = $region20
        $region19: #{fast_transformer_forward.3} parent=11 // pred_region
          _
        $region20: #{fast_transformer_forward.3} parent=11 // pred_fallthru
          _
        // Predicated region
        $region21: #{fast_transformer_forward.3} parent=11 // pred_check
          %p195 = pneg %p120
        $region22: #{fast_transformer_forward.3} parent=11 // pred_check_branch
          %197 = sbr.rel (%p195) target = $region24
        $region23: #{fast_transformer_forward.3} parent=11 // pred_region
          %s198 = smul.u32 2, %s24
          %p199 = scmp.lt.s32.totalorder %s198, 1
          %s200 = scalar_select %p199, %s198, 1
          %s201 = smul.addr %s200, 4
          %s202 = scalar_lea.vmem %s3, %s201
          %s203 = smul.u32 2, %s24
        $region24: #{fast_transformer_forward.3} parent=11 // pred_fallthru
          _
        // Predicated region
        $region25: #{fast_transformer_forward.3} parent=11 // pred_check
          %p204 = pneg %p146
        $region26: #{fast_transformer_forward.3} parent=11 // pred_check_branch
          %206 = sbr.rel (%p204) target = $region28
        $region27: #{fast_transformer_forward.3} parent=11 // pred_region
          %s207 = smul.u32 2, %s24
          %p208 = scmp.lt.s32.totalorder %s207, 1
          %s209 = scalar_select %p208, %s207, 1
          %s210 = scalar_lea.vmem %s4, %s209
          %s211 = smul.u32 2, %s24
        $region28: #{fast_transformer_forward.3} parent=11 // pred_fallthru
          _
      $region12: #{fast_transformer_forward.3} parent=5 // pred_fallthru
        _
      %p212 = scmp.lt.s32.totalorder %s14, 2
      // Predicated region
      $region29: #{fast_transformer_forward.3} parent=5 // pred_check
        %p213 = pneg %p212
      $region30: #{fast_transformer_forward.3} parent=5 // pred_check_branch
        %215 = sbr.rel (%p213) target = $region32
      $region31: #{fast_transformer_forward.3} parent=5 // pred_region
        // Predicated region
        $region33: #{fast_transformer_forward.3} parent=31 // pred_check
          %p216 = pneg %p46
        $region34: #{fast_transformer_forward.3} parent=31 // pred_check_branch
          %218 = sbr.rel (%p216) target = $region36
        $region35: #{fast_transformer_forward.3} parent=31 // pred_region
          %p219 = scmp.lt.s32.totalorder %s21, 1
          %s220 = scalar_select %p219, %s21, 1
          %s221 = smul.addr %s220, 2
          %s222 = smul.addr %s221, 4
          %s223 = scalar_lea.vmem %s0, %s222
        $region36: #{fast_transformer_forward.3} parent=31 // pred_fallthru
          _
      $region32: #{fast_transformer_forward.3} parent=5 // pred_fallthru
        _
      %p224 = scmp.le.s32.totalorder 1, %s14
      %p225 = scmp.lt.s32.totalorder %s14, 3
      %p226 = pnand %p224, %p225
      %p227 = pneg %p226
      // Predicated region
      $region37: #{fast_transformer_forward.3} parent=5 // pred_check
        _
      $region38: #{fast_transformer_forward.3} parent=5 // pred_check_branch
        %229 = sbr.rel (%p226) target = $region40
      $region39: #{fast_transformer_forward.3} parent=5 // pred_region
        %s230 = ssub.s32 %s14, 1
        %p231 = scmp.lt.s32.totalorder %s23, 1
        %s232 = scalar_select %p231, %s23, 1
        %s233 = smul.addr %s232, 2
        %s234 = smul.addr %s233, 4
        %s235 = scalar_lea.vmem %s0, %s234
        %p236 = pneg %p52
        %p237 = pneg %p49
        %p238 = pneg %p73
        %p239 = pneg %p70
        %p240 = pneg %p94
        %p241 = pneg %p91
        %s242 = smul.u32 2, %s24
        %p243 = scmp.lt.s32.totalorder %s242, 1
        %s244 = scalar_select %p243, %s242, 1
        %s245 = smul.addr %s244, 4
        %s246 = scalar_lea.vmem %s3, %s245
        %p247 = pneg %p120
        %p248 = pneg %p117
        %s249 = smul.u32 2, %s24
        %p250 = scmp.lt.s32.totalorder %s249, 1
        %s251 = scalar_select %p250, %s249, 1
        %s252 = scalar_lea.vmem %s4, %s251
        %p253 = pneg %p146
        %p254 = pneg %p143
        %p255 = pneg %p174
        %p256 = pneg %p171
        %s257 = sand.u32 %s161, 1
        %s258 = scalar_lea.sflag [#allocation4], %s257
        %s259 = sand.u32 %s161, 1
        %s260 = smul.addr %s259, 32
        %s261 = scalar_lea.vmem [#allocation3], %s260
        %p262 = scmp.lt.s32.totalorder %s23, 1
        %s263 = scalar_select %p262, %s23, 1
        %s264 = smul.addr %s263, 2
        %s265 = smul.addr %s264, 4
        %s266 = scalar_lea.vmem %s0, %s265
        %s267 = smul.u32 2, %s24
        %p268 = scmp.lt.s32.totalorder %s267, 1
        %s269 = scalar_select %p268, %s267, 1
        %s270 = smul.addr %s269, 4
        %s271 = scalar_lea.vmem %s3, %s270
        %s272 = smul.u32 2, %s24
        %s273 = smul.u32 2, %s24
        %p274 = scmp.lt.s32.totalorder %s273, 1
        %s275 = scalar_select %p274, %s273, 1
        %s276 = scalar_lea.vmem %s4, %s275
        %s277 = smul.u32 2, %s24
        %s278 = smul.u32 2, %s24
        %p280 = scmp.eq.s32.totalorder %s24, 0
        // Predicated region
        $region41: #{fast_transformer_forward.3} parent=39 // pred_check
          %p281 = pneg %p280
        $region42: #{fast_transformer_forward.3} parent=39 // pred_check_branch
          %283 = sbr.rel (%p281) target = $region44
        $region43: #{fast_transformer_forward.3} parent=39 // pred_region
          %v284 = vld [vmem:[%s266] sm:$0xf]
          %v285 = vld [vmem:[%s266 + $0x4] sm:$0xf]
          %v286 = vunpack.c.l.bf16 %v284
          %v287 = vunpack.c.l.bf16 %v285
          %v288 = vld [vmem:[%s1] sm:$0x1]
          %v289 = vld [vmem:[%s2] sm:$0x1]
          %vm290 = vcmask 523264
          %v291 = vsel %vm290, %v286, 0.0
          %292 = vadd.xlane.f32.xlu0 %v291
          %v293 = vpop.xlane.xlu0 %292
          %v294 = vsel %vm290, %v287, 0.0
          %295 = vadd.xlane.f32.xlu0 %v294
          %v296 = vpop.xlane.xlu0 %295
          %v297 = vrcp.pop 64.0
          %v298 = vmul.f32 %v293, %v297
          %v299 = vmul.f32 %v296, %v297
          %v300 = vsub.f32 %v286, %v298
          %v301 = vsub.f32 %v287, %v299
          %v302 = vmul.f32 %v300, %v300
          %v303 = vmul.f32 %v301, %v301
          %v304 = vsel %vm290, %v302, 0.0
          %305 = vadd.xlane.f32.xlu0 %v304
          %v306 = vpop.xlane.xlu0 %305
          %v307 = vsel %vm290, %v303, 0.0
          %308 = vadd.xlane.f32.xlu0 %v307
          %v309 = vpop.xlane.xlu0 %308
          %v310 = vmul.f32 %v306, %v297
          %v311 = vmul.f32 %v309, %v297
          %v312 = vadd.f32 %v310, 1e-05
          %v313 = vadd.f32 %v311, 1e-05
          %v314 = vrsqrt.pop %v312
          %v315 = vrsqrt.pop %v313
          %v316 = vmul.f32 %v300, %v314
          %v317 = vmul.f32 %v301, %v315
          %v319 = vlaneseq
          %v320 = vshrl.u32 %v319, 7
          %v321 = vsub.s32 0, %v320
          %v322 = vrot.slane %v288, %v321
          %v324 = vmul.f32 %v316, %v322
          %v325 = vmul.f32 %v317, %v322
          %v327 = vlaneseq
          %v328 = vshrl.u32 %v327, 7
          %v329 = vsub.s32 0, %v328
          %v330 = vrot.slane %v289, %v329
          %v332 = vadd.f32 %v324, %v330
          %v333 = vadd.f32 %v325, %v330
          %v334 = vpack.c.bf16 %v333, %v332
          %335 = vst.msk [vmem:[#allocation2] sm:$0xff] %vm290, %v334
        $region44: #{fast_transformer_forward.3} parent=39 // pred_fallthru
          _
        %v336 = vld [vmem:[#allocation2] sm:$0xff]
        %v337 = vld [vmem:[%s271] sm:$0xff]
        %v338 = vld [vmem:[%s271 + $0x8] sm:$0xff]
        %v339 = vld [vmem:[%s271 + $0x10] sm:$0xff]
        %v340 = vld [vmem:[%s271 + $0x18] sm:$0xff]
        %v341 = vld [vmem:[%s271 + $0x20] sm:$0xff]
        %v342 = vld [vmem:[%s271 + $0x28] sm:$0xff]
        %v343 = vld [vmem:[%s271 + $0x30] sm:$0xff]
        %v344 = vld [vmem:[%s271 + $0x38] sm:$0xff]
        %v345 = vld [vmem:[%s276] sm:$0x3]
        %v347 = vlaneseq
        %v348 = vshrl.u32 %v347, 7
        %v349 = vsub.s32 0, %v348
        %v350 = vrot.slane %v345, %v349
        %v351 = vlaneseq
        %v352 = vshrl.u32 %v351, 7
        %v353 = vsub.s32 1, %v352
        %v354 = vrot.slane %v345, %v353
        %v365 = vunpack.c.l.b16 %v337
        %v366 = vunpack.c.h.b16 %v337
        %v367 = vunpack.c.l.b16 %v338
        %v368 = vunpack.c.h.b16 %v338
        %v369 = vunpack.c.l.b16 %v339
        %v370 = vunpack.c.h.b16 %v339
        %v371 = vunpack.c.l.b16 %v340
        %v372 = vunpack.c.h.b16 %v340
        %v373 = vunpack.c.l.b16 %v341
        %v374 = vunpack.c.h.b16 %v341
        %v375 = vunpack.c.l.b16 %v342
        %v376 = vunpack.c.h.b16 %v342
        %v377 = vunpack.c.l.b16 %v343
        %v378 = vunpack.c.h.b16 %v343
        %v379 = vunpack.c.l.b16 %v344
        %v380 = vunpack.c.h.b16 %v344
        %v381 = vpack.c.b16 %v367, %v365
        %v382 = vpack.c.b16 %v368, %v366
        %v383 = vpack.c.b16 %v371, %v369
        %v384 = vpack.c.b16 %v372, %v370
        %v385 = vpack.c.b16 %v375, %v373
        %v386 = vpack.c.b16 %v376, %v374
        %v387 = vpack.c.b16 %v379, %v377
        %v388 = vpack.c.b16 %v380, %v378
        %vm397 = vcmask 523264
        %v399 = vsel %vm397, %v336, 0
        %401 = vmatprep.subr.bf16.mxu0 %v382
        %402 = vmatpush1.bf16.msra.mxu0 %v381
        %403 = vmatprep.subr.bf16.mxu0 %v384
        %404 = vmatpush1.bf16.msra.mxu0 %v383
        %405 = vmatprep.subr.bf16.mxu0 %v386
        %406 = vmatpush1.bf16.msra.mxu0 %v385
        %407 = vmatprep.subr.bf16.mxu0 %v388
        %408 = vmatpush1.bf16.msra.mxu0 %v387
        %409 = vmatprep.subr.bf16.mxu0 0
        %410 = vmatpush1.bf16.msra.mxu0 0
        %411 = vmatprep.subr.bf16.mxu0 0
        %412 = vmatpush1.bf16.msra.mxu0 0
        %413 = vmatprep.subr.bf16.mxu0 0
        %414 = vmatpush1.bf16.msra.mxu0 0
        %415 = vmatprep.subr.bf16.mxu0 0
        %416 = vmatpush1.bf16.msra.mxu0 0
        %417 = vmatprep.subr.bf16.mxu0 0
        %418 = vmatpush1.bf16.msra.mxu0 0
        %419 = vmatprep.subr.bf16.mxu0 0
        %420 = vmatpush1.bf16.msra.mxu0 0
        %421 = vmatprep.subr.bf16.mxu0 0
        %422 = vmatpush1.bf16.msra.mxu0 0
        %423 = vmatprep.subr.bf16.mxu0 0
        %424 = vmatpush1.bf16.msra.mxu0 0
        %425 = vmatprep.subr.bf16.mxu0 0
        %426 = vmatpush1.bf16.msra.mxu0 0
        %427 = vmatprep.subr.bf16.mxu0 0
        %428 = vmatpush1.bf16.msra.mxu0 0
        %429 = vmatprep.subr.bf16.mxu0 0
        %430 = vmatpush1.bf16.msra.mxu0 0
        %431 = vmatprep.subr.bf16.mxu0 0
        %432 = vmatpush1.bf16.msra.mxu0 0
        %433 = vmatprep.mubr.bf16.mxu0 0
        %434 = vmatmul.mubr.bf16.gmra.mrb[0].mxu0 %v399
        %v435 = vpop.f32.mrb[0].mxu0
        %v436 = vadd.f32 %v350, %v435
        %v437 = vpop.f32.mrb[0].mxu0
        %v438 = vadd.f32 %v354, %v437
        %v439 = vpop.f32.mrb[0].mxu0
        %v440 = vadd.f32 %v350, %v439
        %v441 = vpop.f32.mrb[0].mxu0
        %v442 = vadd.f32 %v354, %v441
        %443 = vdwg.mxu0
        %444 = vst [vmem:[%s261] sm:$0xff] %v436
        %445 = vst [vmem:[%s261 + $0x8] sm:$0xff] %v438
        %446 = vst [vmem:[%s261 + $0x10] sm:$0xff] %v440
        %447 = vst [vmem:[%s261 + $0x18] sm:$0xff] %v442
        %s448 = sand.u32 %s161, 1
        %s449 = scalar_lea.sflag [#allocation4], %s448
        %s450 = sand.u32 %s161, 1
        %s451 = smul.addr %s450, 32
        %s452 = scalar_lea.vmem [#allocation3], %s451
        // Predicated region
        $region45: #{fast_transformer_forward.3} parent=39 // pred_check
          %p453 = pneg %p171
        $region46: #{fast_transformer_forward.3} parent=39 // pred_check_branch
          %455 = sbr.rel (%p453) target = $region48
        $region47: #{fast_transformer_forward.3} parent=39 // pred_region
          %s456 = smul.u32 2, %s24
          %s458 = ssub.s32 512, 512
          %459 = vsyncadd %s449, %s458
          %s460 = smul.addr %s23, 4
          %s461 = sadd.s32 %s456, %s460
          %s462 = smul.addr %s461, 128
          %s463 = scalar_lea.hbm %s5, %s462
          %s464 = sshll.u32 %s452, 4
          %s465 = int_to_ptr.vmem [resolvable:$true] %s464
          %470 = dma.vmem_to_hbm [thread:$0]  %s465, 512, %s463, %s449, 256, 256, 16
        $region48: #{fast_transformer_forward.3} parent=39 // pred_fallthru
          _
      $region40: #{fast_transformer_forward.3} parent=5 // pred_fallthru
        _
      %p471 = scmp.le.s32.totalorder 2, %s14
      // Predicated region
      $region49: #{fast_transformer_forward.3} parent=5 // pred_check
        %p472 = pneg %p471
      $region50: #{fast_transformer_forward.3} parent=5 // pred_check_branch
        %474 = sbr.rel (%p472) target = $region52
      $region51: #{fast_transformer_forward.3} parent=5 // pred_region
        %s475 = ssub.s32 %s14, 2
        // Predicated region
        $region53: #{fast_transformer_forward.3} parent=51 // pred_check
          %p476 = pneg %p177
        $region54: #{fast_transformer_forward.3} parent=51 // pred_check_branch
          %478 = sbr.rel (%p476) target = $region56
        $region55: #{fast_transformer_forward.3} parent=51 // pred_region
          %s479 = sand.u32 %s162, 1
          %s480 = scalar_lea.sflag [#allocation4], %s479
          %s481 = sand.u32 %s162, 1
          %s482 = smul.addr %s481, 32
          %s483 = scalar_lea.vmem [#allocation3], %s482
          %484 = dma.done %s480, 512
        $region56: #{fast_transformer_forward.3} parent=51 // pred_fallthru
          _
      $region52: #{fast_transformer_forward.3} parent=5 // pred_fallthru
        _
    $region6: #{fast_transformer_forward.3} parent=1 // loop_footer
      %s18 = sadd.s32 1, %s14
    $region7: #{fast_transformer_forward.3} parent=1 // loop_footer_branch
      %13 = sbr.rel target = $region3
    $region8: #{fast_transformer_forward.3} parent=1 // loop_exit
      _
    %485 = vsyncpa [#allocation4], 1
    %s486 = scalar_lea.sflag [#allocation4], 1
    %487 = vsyncpa %s486, 1

// kernel: fast_transformer_forward.2
$region0: #{fast_transformer_forward.2}
  #allocation0 [shape = 'u32[]', space=smem, size = 0x4, offset = 0x4, fixed_abs, tag = 'smem constant byte address 0x4 - core index']
  #allocation1 [shape = 'u32[144,128]{1,0:T(1,128)}', space=vmem, size = 0x12000, scoped, tag = 'internal scratch']
  #allocation2 [shape = 'f32[16,64]{1,0:T(8,128)}', space=vmem, size = 0x2000, scoped, tag = 'scratch operand']
  %s0 = inlined_call_operand.vmem [shape: f32[2,16,64], index: 0, kind: input, shape index: {}]
  %s1 = inlined_call_operand.vmem [shape: f32[2,16,4], index: 1, kind: input, shape index: {}]
  %s2 = inlined_call_operand.vmem [shape: f32[16,128], index: 2, kind: input, shape index: {}]
  %s3 = inlined_call_operand.vmem [shape: f32[16,128], index: 3, kind: input, shape index: {}]
  %s4 = inlined_call_operand.vmem [shape: f32[16,128], index: 4, kind: input, shape index: {}]
  %s5 = inlined_call_operand.vmem [shape: bf16[4,128], index: 5, kind: input, shape index: {}]
  %s6 = inlined_call_operand.vmem [shape: f32[2,1,64], index: 6, kind: input, shape index: {}]
  %s7 = inlined_call_operand.vmem [shape: f32[2,1,64], index: 7, kind: input, shape index: {}]
  %s8 = inlined_call_operand.vmem [shape: bf16[2,64,384], index: 8, kind: input, shape index: {}]
  %s9 = inlined_call_operand.vmem [shape: bf16[2,128,4], index: 9, kind: input, shape index: {}]
  %s10 = inlined_call_operand.vmem [shape: bf16[2,128,4], index: 10, kind: input, shape index: {}]
  %s11 = inlined_call_operand.vmem [shape: bf16[2,128,128], index: 11, kind: input, shape index: {}]
  %s12 = inlined_call_operand.vmem [shape: f32[2,1,128], index: 12, kind: input, shape index: {}]
  %s13 = inlined_call_operand.vmem [shape: bf16[2,128,64], index: 13, kind: input, shape index: {}]
  %s14 = inlined_call_operand.vmem [shape: f32[2,1,64], index: 14, kind: input, shape index: {}]
  %s15 = inlined_call_operand.vmem [shape: f32[2,1,64], index: 15, kind: input, shape index: {}]
  %s16 = inlined_call_operand.vmem [shape: f32[2,1,64], index: 16, kind: input, shape index: {}]
  %s17 = inlined_call_operand.vmem [shape: bf16[2,64,256], index: 17, kind: input, shape index: {}]
  %s18 = inlined_call_operand.vmem [shape: f32[2,1,256], index: 18, kind: input, shape index: {}]
  %s19 = inlined_call_operand.vmem [shape: bf16[2,256,64], index: 19, kind: input, shape index: {}]
  %s20 = inlined_call_operand.vmem [shape: f32[2,1,64], index: 20, kind: input, shape index: {}]
  %s21 = inlined_call_operand.vmem [shape: bf16[2,16,64], index: 21, kind: output, shape index: {}]
  %s22 = sld [smem:[#allocation0]]
  $region125: #{fast_transformer_forward.2} parent=0
    _
  %s24 = ssub.s32 1, %s22
  %s25 = scalar_select 0, %s24, %s22
  loop: start=0, step=1, limit=6
  $region2: #{fast_transformer_forward.2} parent=0 // loop_pre_header
    _
  $region3: #{fast_transformer_forward.2} parent=0 // loop_header
    %s27 = sphi 0, %s31
    %p28 = scmp.ge.s32.totalorder %s27, 6
    %s34 = sphi 0, %s46
    %s35 = sphi 0, %s42
    %s36 = sphi 0, %s34
    %s37 = sphi 0, %s35
    %s38 = sphi 0, %s36
    %s39 = sphi 0, %s37
    %s49 = sphi 0, %s51
    %s52 = sphi 0, %s49
    %s53 = sphi 0, %s52
    %s69 = sphi 0, %s53
    %s75 = sphi 0, %s77
    %s78 = sphi 0, %s75
    %s79 = sphi 0, %s78
    %s95 = sphi 0, %s79
    %s99 = sphi 0, %s99
    %s101 = sphi 0, %s99
    %s102 = sphi 0, %s101
    %s116 = sphi 0, %s102
    %s120 = sphi 0, %s120
    %s122 = sphi 0, %s120
    %s123 = sphi 0, %s122
    %s137 = sphi 0, %s123
    %s141 = sphi 0, %s141
    %s143 = sphi 0, %s141
    %s144 = sphi 0, %s143
    %s158 = sphi 0, %s144
    %s162 = sphi 0, %s162
    %s164 = sphi 0, %s162
    %s165 = sphi 0, %s164
    %s179 = sphi 0, %s165
    %s185 = sphi 0, %s187
    %s188 = sphi 0, %s185
    %s189 = sphi 0, %s188
    %s205 = sphi 0, %s189
    %s211 = sphi 0, %s213
    %s214 = sphi 0, %s211
    %s215 = sphi 0, %s214
    %s231 = sphi 0, %s215
    %s237 = sphi 0, %s239
    %s240 = sphi 0, %s237
    %s241 = sphi 0, %s240
    %s257 = sphi 0, %s241
    %s263 = sphi 0, %s265
    %s266 = sphi 0, %s263
    %s267 = sphi 0, %s266
    %s283 = sphi 0, %s267
    %s289 = sphi 0, %s291
    %s292 = sphi 0, %s289
    %s293 = sphi 0, %s292
    %s309 = sphi 0, %s293
    %s315 = sphi 0, %s317
    %s318 = sphi 0, %s315
    %s319 = sphi 0, %s318
    %s335 = sphi 0, %s319
    %s341 = sphi 0, %s343
    %s344 = sphi 0, %s341
    %s345 = sphi 0, %s344
    %s361 = sphi 0, %s345
    %s367 = sphi 0, %s369
    %s370 = sphi 0, %s367
    %s371 = sphi 0, %s370
    %s387 = sphi 0, %s371
    %s393 = sphi 0, %s395
    %s396 = sphi 0, %s393
    %s397 = sphi 0, %s396
    %s413 = sphi 0, %s397
    %s419 = sphi 0, %s421
    %s422 = sphi 0, %s419
    %s423 = sphi 0, %s422
    %s439 = sphi 0, %s423
    %s445 = sphi 0, %s447
    %s448 = sphi 0, %s445
    %s449 = sphi 0, %s448
    %s465 = sphi 0, %s449
    %s471 = sphi 0, %s473
    %s474 = sphi 0, %s471
    %s475 = sphi 0, %s474
    %s491 = sphi 0, %s475
    %s497 = sphi 0, %s499
    %s500 = sphi 0, %s497
    %s501 = sphi 0, %s500
    %s517 = sphi 0, %s501
    %s523 = sphi 0, %s525
    %s526 = sphi 0, %s523
    %s527 = sphi 0, %s526
    %s543 = sphi 0, %s527
    %s549 = sphi 0, %s551
    %s552 = sphi 0, %s549
    %s553 = sphi 0, %s552
    %s569 = sphi 0, %s553
    %s575 = sphi 0, %s577
    %s578 = sphi 0, %s575
    %s579 = sphi 0, %s578
    %s595 = sphi 0, %s579
  $region4: #{fast_transformer_forward.2} parent=0 // loop_header_branch
    %30 = sbr.rel (%p28) target = $region8
  $region5: #{fast_transformer_forward.2} parent=0 // loop_body
    %s32 = ssub.s32 %s27, 1
    %s33 = ssub.s32 %s27, 2
    %s40 = sadd.s32 1, %s35
    %p41 = scmp.ge.s32.totalorder %s40, 2
    %s42 = scalar_select %p41, 0, %s40
    %s43 = sadd.s32 1, %s34
    %s44 = scalar_select %p41, %s43, %s34
    %p45 = scmp.ge.s32.totalorder %s44, 2
    %s46 = scalar_select %p45, 0, %s44
    %s47 = ssub.s32 %s34, %s46
    %p48 = scmp.eq.s32.totalorder %s47, 0
    %s50 = sadd.s32 %s49, 1
    %s51 = scalar_select %p48, %s49, %s50
    %p54 = pneg %p48
    %p55 = scmp.eq.s32.totalorder %s27, 3
    %p56 = por %p54, %p55
    %p57 = scmp.ne.s32.totalorder %s49, %s52
    %p58 = scmp.eq.s32.totalorder %s27, 0
    %p59 = por %p57, %p58
    %p60 = scmp.ne.s32.totalorder %s49, %s52
    %p61 = scmp.eq.s32.totalorder %s32, 3
    %p62 = por %p60, %p61
    %p63 = scmp.ne.s32.totalorder %s52, %s53
    %p64 = scmp.eq.s32.totalorder %s32, 0
    %p65 = por %p63, %p64
    %p66 = scmp.ne.s32.totalorder %s52, %s53
    %p67 = scmp.eq.s32.totalorder %s33, 3
    %p68 = por %p66, %p67
    %p70 = scmp.ne.s32.totalorder %s53, %s69
    %p71 = scmp.eq.s32.totalorder %s33, 0
    %p72 = por %p70, %p71
    %s73 = ssub.s32 %s34, %s46
    %p74 = scmp.eq.s32.totalorder %s73, 0
    %s76 = sadd.s32 %s75, 1
    %s77 = scalar_select %p74, %s75, %s76
    %p80 = pneg %p74
    %p81 = scmp.eq.s32.totalorder %s27, 3
    %p82 = por %p80, %p81
    %p83 = scmp.ne.s32.totalorder %s75, %s78
    %p84 = scmp.eq.s32.totalorder %s27, 0
    %p85 = por %p83, %p84
    %p86 = scmp.ne.s32.totalorder %s75, %s78
    %p87 = scmp.eq.s32.totalorder %s32, 3
    %p88 = por %p86, %p87
    %p89 = scmp.ne.s32.totalorder %s78, %s79
    %p90 = scmp.eq.s32.totalorder %s32, 0
    %p91 = por %p89, %p90
    %p92 = scmp.ne.s32.totalorder %s78, %s79
    %p93 = scmp.eq.s32.totalorder %s33, 3
    %p94 = por %p92, %p93
    %p96 = scmp.ne.s32.totalorder %s79, %s95
    %p97 = scmp.eq.s32.totalorder %s33, 0
    %p98 = por %p96, %p97
    %s100 = sadd.s32 %s99, 1
    %p103 = scmp.eq.s32.totalorder %s27, 3
    %p104 = scmp.ne.s32.totalorder %s99, %s101
    %p105 = scmp.eq.s32.totalorder %s27, 0
    %p106 = por %p104, %p105
    %p107 = scmp.ne.s32.totalorder %s99, %s101
    %p108 = scmp.eq.s32.totalorder %s32, 3
    %p109 = por %p107, %p108
    %p110 = scmp.ne.s32.totalorder %s101, %s102
    %p111 = scmp.eq.s32.totalorder %s32, 0
    %p112 = por %p110, %p111
    %p113 = scmp.ne.s32.totalorder %s101, %s102
    %p114 = scmp.eq.s32.totalorder %s33, 3
    %p115 = por %p113, %p114
    %p117 = scmp.ne.s32.totalorder %s102, %s116
    %p118 = scmp.eq.s32.totalorder %s33, 0
    %p119 = por %p117, %p118
    %s121 = sadd.s32 %s120, 1
    %p124 = scmp.eq.s32.totalorder %s27, 3
    %p125 = scmp.ne.s32.totalorder %s120, %s122
    %p126 = scmp.eq.s32.totalorder %s27, 0
    %p127 = por %p125, %p126
    %p128 = scmp.ne.s32.totalorder %s120, %s122
    %p129 = scmp.eq.s32.totalorder %s32, 3
    %p130 = por %p128, %p129
    %p131 = scmp.ne.s32.totalorder %s122, %s123
    %p132 = scmp.eq.s32.totalorder %s32, 0
    %p133 = por %p131, %p132
    %p134 = scmp.ne.s32.totalorder %s122, %s123
    %p135 = scmp.eq.s32.totalorder %s33, 3
    %p136 = por %p134, %p135
    %p138 = scmp.ne.s32.totalorder %s123, %s137
    %p139 = scmp.eq.s32.totalorder %s33, 0
    %p140 = por %p138, %p139
    %s142 = sadd.s32 %s141, 1
    %p145 = scmp.eq.s32.totalorder %s27, 3
    %p146 = scmp.ne.s32.totalorder %s141, %s143
    %p147 = scmp.eq.s32.totalorder %s27, 0
    %p148 = por %p146, %p147
    %p149 = scmp.ne.s32.totalorder %s141, %s143
    %p150 = scmp.eq.s32.totalorder %s32, 3
    %p151 = por %p149, %p150
    %p152 = scmp.ne.s32.totalorder %s143, %s144
    %p153 = scmp.eq.s32.totalorder %s32, 0
    %p154 = por %p152, %p153
    %p155 = scmp.ne.s32.totalorder %s143, %s144
    %p156 = scmp.eq.s32.totalorder %s33, 3
    %p157 = por %p155, %p156
    %p159 = scmp.ne.s32.totalorder %s144, %s158
    %p160 = scmp.eq.s32.totalorder %s33, 0
    %p161 = por %p159, %p160
    %s163 = sadd.s32 %s162, 1
    %p166 = scmp.eq.s32.totalorder %s27, 3
    %p167 = scmp.ne.s32.totalorder %s162, %s164
    %p168 = scmp.eq.s32.totalorder %s27, 0
    %p169 = por %p167, %p168
    %p170 = scmp.ne.s32.totalorder %s162, %s164
    %p171 = scmp.eq.s32.totalorder %s32, 3
    %p172 = por %p170, %p171
    %p173 = scmp.ne.s32.totalorder %s164, %s165
    %p174 = scmp.eq.s32.totalorder %s32, 0
    %p175 = por %p173, %p174
    %p176 = scmp.ne.s32.totalorder %s164, %s165
    %p177 = scmp.eq.s32.totalorder %s33, 3
    %p178 = por %p176, %p177
    %p180 = scmp.ne.s32.totalorder %s165, %s179
    %p181 = scmp.eq.s32.totalorder %s33, 0
    %p182 = por %p180, %p181
    %s183 = ssub.s32 %s35, %s42
    %p184 = scmp.eq.s32.totalorder %s183, 0
    %s186 = sadd.s32 %s185, 1
    %s187 = scalar_select %p184, %s185, %s186
    %p190 = pneg %p184
    %p191 = scmp.eq.s32.totalorder %s27, 3
    %p192 = por %p190, %p191
    %p193 = scmp.ne.s32.totalorder %s185, %s188
    %p194 = scmp.eq.s32.totalorder %s27, 0
    %p195 = por %p193, %p194
    %p196 = scmp.ne.s32.totalorder %s185, %s188
    %p197 = scmp.eq.s32.totalorder %s32, 3
    %p198 = por %p196, %p197
    %p199 = scmp.ne.s32.totalorder %s188, %s189
    %p200 = scmp.eq.s32.totalorder %s32, 0
    %p201 = por %p199, %p200
    %p202 = scmp.ne.s32.totalorder %s188, %s189
    %p203 = scmp.eq.s32.totalorder %s33, 3
    %p204 = por %p202, %p203
    %p206 = scmp.ne.s32.totalorder %s189, %s205
    %p207 = scmp.eq.s32.totalorder %s33, 0
    %p208 = por %p206, %p207
    %s209 = ssub.s32 %s35, %s42
    %p210 = scmp.eq.s32.totalorder %s209, 0
    %s212 = sadd.s32 %s211, 1
    %s213 = scalar_select %p210, %s211, %s212
    %p216 = pneg %p210
    %p217 = scmp.eq.s32.totalorder %s27, 3
    %p218 = por %p216, %p217
    %p219 = scmp.ne.s32.totalorder %s211, %s214
    %p220 = scmp.eq.s32.totalorder %s27, 0
    %p221 = por %p219, %p220
    %p222 = scmp.ne.s32.totalorder %s211, %s214
    %p223 = scmp.eq.s32.totalorder %s32, 3
    %p224 = por %p222, %p223
    %p225 = scmp.ne.s32.totalorder %s214, %s215
    %p226 = scmp.eq.s32.totalorder %s32, 0
    %p227 = por %p225, %p226
    %p228 = scmp.ne.s32.totalorder %s214, %s215
    %p229 = scmp.eq.s32.totalorder %s33, 3
    %p230 = por %p228, %p229
    %p232 = scmp.ne.s32.totalorder %s215, %s231
    %p233 = scmp.eq.s32.totalorder %s33, 0
    %p234 = por %p232, %p233
    %s235 = ssub.s32 %s35, %s42
    %p236 = scmp.eq.s32.totalorder %s235, 0
    %s238 = sadd.s32 %s237, 1
    %s239 = scalar_select %p236, %s237, %s238
    %p242 = pneg %p236
    %p243 = scmp.eq.s32.totalorder %s27, 3
    %p244 = por %p242, %p243
    %p245 = scmp.ne.s32.totalorder %s237, %s240
    %p246 = scmp.eq.s32.totalorder %s27, 0
    %p247 = por %p245, %p246
    %p248 = scmp.ne.s32.totalorder %s237, %s240
    %p249 = scmp.eq.s32.totalorder %s32, 3
    %p250 = por %p248, %p249
    %p251 = scmp.ne.s32.totalorder %s240, %s241
    %p252 = scmp.eq.s32.totalorder %s32, 0
    %p253 = por %p251, %p252
    %p254 = scmp.ne.s32.totalorder %s240, %s241
    %p255 = scmp.eq.s32.totalorder %s33, 3
    %p256 = por %p254, %p255
    %p258 = scmp.ne.s32.totalorder %s241, %s257
    %p259 = scmp.eq.s32.totalorder %s33, 0
    %p260 = por %p258, %p259
    %s261 = ssub.s32 %s35, %s42
    %p262 = scmp.eq.s32.totalorder %s261, 0
    %s264 = sadd.s32 %s263, 1
    %s265 = scalar_select %p262, %s263, %s264
    %p268 = pneg %p262
    %p269 = scmp.eq.s32.totalorder %s27, 3
    %p270 = por %p268, %p269
    %p271 = scmp.ne.s32.totalorder %s263, %s266
    %p272 = scmp.eq.s32.totalorder %s27, 0
    %p273 = por %p271, %p272
    %p274 = scmp.ne.s32.totalorder %s263, %s266
    %p275 = scmp.eq.s32.totalorder %s32, 3
    %p276 = por %p274, %p275
    %p277 = scmp.ne.s32.totalorder %s266, %s267
    %p278 = scmp.eq.s32.totalorder %s32, 0
    %p279 = por %p277, %p278
    %p280 = scmp.ne.s32.totalorder %s266, %s267
    %p281 = scmp.eq.s32.totalorder %s33, 3
    %p282 = por %p280, %p281
    %p284 = scmp.ne.s32.totalorder %s267, %s283
    %p285 = scmp.eq.s32.totalorder %s33, 0
    %p286 = por %p284, %p285
    %s287 = ssub.s32 %s35, %s42
    %p288 = scmp.eq.s32.totalorder %s287, 0
    %s290 = sadd.s32 %s289, 1
    %s291 = scalar_select %p288, %s289, %s290
    %p294 = pneg %p288
    %p295 = scmp.eq.s32.totalorder %s27, 3
    %p296 = por %p294, %p295
    %p297 = scmp.ne.s32.totalorder %s289, %s292
    %p298 = scmp.eq.s32.totalorder %s27, 0
    %p299 = por %p297, %p298
    %p300 = scmp.ne.s32.totalorder %s289, %s292
    %p301 = scmp.eq.s32.totalorder %s32, 3
    %p302 = por %p300, %p301
    %p303 = scmp.ne.s32.totalorder %s292, %s293
    %p304 = scmp.eq.s32.totalorder %s32, 0
    %p305 = por %p303, %p304
    %p306 = scmp.ne.s32.totalorder %s292, %s293
    %p307 = scmp.eq.s32.totalorder %s33, 3
    %p308 = por %p306, %p307
    %p310 = scmp.ne.s32.totalorder %s293, %s309
    %p311 = scmp.eq.s32.totalorder %s33, 0
    %p312 = por %p310, %p311
    %s313 = ssub.s32 %s35, %s42
    %p314 = scmp.eq.s32.totalorder %s313, 0
    %s316 = sadd.s32 %s315, 1
    %s317 = scalar_select %p314, %s315, %s316
    %p320 = pneg %p314
    %p321 = scmp.eq.s32.totalorder %s27, 3
    %p322 = por %p320, %p321
    %p323 = scmp.ne.s32.totalorder %s315, %s318
    %p324 = scmp.eq.s32.totalorder %s27, 0
    %p325 = por %p323, %p324
    %p326 = scmp.ne.s32.totalorder %s315, %s318
    %p327 = scmp.eq.s32.totalorder %s32, 3
    %p328 = por %p326, %p327
    %p329 = scmp.ne.s32.totalorder %s318, %s319
    %p330 = scmp.eq.s32.totalorder %s32, 0
    %p331 = por %p329, %p330
    %p332 = scmp.ne.s32.totalorder %s318, %s319
    %p333 = scmp.eq.s32.totalorder %s33, 3
    %p334 = por %p332, %p333
    %p336 = scmp.ne.s32.totalorder %s319, %s335
    %p337 = scmp.eq.s32.totalorder %s33, 0
    %p338 = por %p336, %p337
    %s339 = ssub.s32 %s35, %s42
    %p340 = scmp.eq.s32.totalorder %s339, 0
    %s342 = sadd.s32 %s341, 1
    %s343 = scalar_select %p340, %s341, %s342
    %p346 = pneg %p340
    %p347 = scmp.eq.s32.totalorder %s27, 3
    %p348 = por %p346, %p347
    %p349 = scmp.ne.s32.totalorder %s341, %s344
    %p350 = scmp.eq.s32.totalorder %s27, 0
    %p351 = por %p349, %p350
    %p352 = scmp.ne.s32.totalorder %s341, %s344
    %p353 = scmp.eq.s32.totalorder %s32, 3
    %p354 = por %p352, %p353
    %p355 = scmp.ne.s32.totalorder %s344, %s345
    %p356 = scmp.eq.s32.totalorder %s32, 0
    %p357 = por %p355, %p356
    %p358 = scmp.ne.s32.totalorder %s344, %s345
    %p359 = scmp.eq.s32.totalorder %s33, 3
    %p360 = por %p358, %p359
    %p362 = scmp.ne.s32.totalorder %s345, %s361
    %p363 = scmp.eq.s32.totalorder %s33, 0
    %p364 = por %p362, %p363
    %s365 = ssub.s32 %s35, %s42
    %p366 = scmp.eq.s32.totalorder %s365, 0
    %s368 = sadd.s32 %s367, 1
    %s369 = scalar_select %p366, %s367, %s368
    %p372 = pneg %p366
    %p373 = scmp.eq.s32.totalorder %s27, 3
    %p374 = por %p372, %p373
    %p375 = scmp.ne.s32.totalorder %s367, %s370
    %p376 = scmp.eq.s32.totalorder %s27, 0
    %p377 = por %p375, %p376
    %p378 = scmp.ne.s32.totalorder %s367, %s370
    %p379 = scmp.eq.s32.totalorder %s32, 3
    %p380 = por %p378, %p379
    %p381 = scmp.ne.s32.totalorder %s370, %s371
    %p382 = scmp.eq.s32.totalorder %s32, 0
    %p383 = por %p381, %p382
    %p384 = scmp.ne.s32.totalorder %s370, %s371
    %p385 = scmp.eq.s32.totalorder %s33, 3
    %p386 = por %p384, %p385
    %p388 = scmp.ne.s32.totalorder %s371, %s387
    %p389 = scmp.eq.s32.totalorder %s33, 0
    %p390 = por %p388, %p389
    %s391 = ssub.s32 %s35, %s42
    %p392 = scmp.eq.s32.totalorder %s391, 0
    %s394 = sadd.s32 %s393, 1
    %s395 = scalar_select %p392, %s393, %s394
    %p398 = pneg %p392
    %p399 = scmp.eq.s32.totalorder %s27, 3
    %p400 = por %p398, %p399
    %p401 = scmp.ne.s32.totalorder %s393, %s396
    %p402 = scmp.eq.s32.totalorder %s27, 0
    %p403 = por %p401, %p402
    %p404 = scmp.ne.s32.totalorder %s393, %s396
    %p405 = scmp.eq.s32.totalorder %s32, 3
    %p406 = por %p404, %p405
    %p407 = scmp.ne.s32.totalorder %s396, %s397
    %p408 = scmp.eq.s32.totalorder %s32, 0
    %p409 = por %p407, %p408
    %p410 = scmp.ne.s32.totalorder %s396, %s397
    %p411 = scmp.eq.s32.totalorder %s33, 3
    %p412 = por %p410, %p411
    %p414 = scmp.ne.s32.totalorder %s397, %s413
    %p415 = scmp.eq.s32.totalorder %s33, 0
    %p416 = por %p414, %p415
    %s417 = ssub.s32 %s35, %s42
    %p418 = scmp.eq.s32.totalorder %s417, 0
    %s420 = sadd.s32 %s419, 1
    %s421 = scalar_select %p418, %s419, %s420
    %p424 = pneg %p418
    %p425 = scmp.eq.s32.totalorder %s27, 3
    %p426 = por %p424, %p425
    %p427 = scmp.ne.s32.totalorder %s419, %s422
    %p428 = scmp.eq.s32.totalorder %s27, 0
    %p429 = por %p427, %p428
    %p430 = scmp.ne.s32.totalorder %s419, %s422
    %p431 = scmp.eq.s32.totalorder %s32, 3
    %p432 = por %p430, %p431
    %p433 = scmp.ne.s32.totalorder %s422, %s423
    %p434 = scmp.eq.s32.totalorder %s32, 0
    %p435 = por %p433, %p434
    %p436 = scmp.ne.s32.totalorder %s422, %s423
    %p437 = scmp.eq.s32.totalorder %s33, 3
    %p438 = por %p436, %p437
    %p440 = scmp.ne.s32.totalorder %s423, %s439
    %p441 = scmp.eq.s32.totalorder %s33, 0
    %p442 = por %p440, %p441
    %s443 = ssub.s32 %s35, %s42
    %p444 = scmp.eq.s32.totalorder %s443, 0
    %s446 = sadd.s32 %s445, 1
    %s447 = scalar_select %p444, %s445, %s446
    %p450 = pneg %p444
    %p451 = scmp.eq.s32.totalorder %s27, 3
    %p452 = por %p450, %p451
    %p453 = scmp.ne.s32.totalorder %s445, %s448
    %p454 = scmp.eq.s32.totalorder %s27, 0
    %p455 = por %p453, %p454
    %p456 = scmp.ne.s32.totalorder %s445, %s448
    %p457 = scmp.eq.s32.totalorder %s32, 3
    %p458 = por %p456, %p457
    %p459 = scmp.ne.s32.totalorder %s448, %s449
    %p460 = scmp.eq.s32.totalorder %s32, 0
    %p461 = por %p459, %p460
    %p462 = scmp.ne.s32.totalorder %s448, %s449
    %p463 = scmp.eq.s32.totalorder %s33, 3
    %p464 = por %p462, %p463
    %p466 = scmp.ne.s32.totalorder %s449, %s465
    %p467 = scmp.eq.s32.totalorder %s33, 0
    %p468 = por %p466, %p467
    %s469 = ssub.s32 %s35, %s42
    %p470 = scmp.eq.s32.totalorder %s469, 0
    %s472 = sadd.s32 %s471, 1
    %s473 = scalar_select %p470, %s471, %s472
    %p476 = pneg %p470
    %p477 = scmp.eq.s32.totalorder %s27, 3
    %p478 = por %p476, %p477
    %p479 = scmp.ne.s32.totalorder %s471, %s474
    %p480 = scmp.eq.s32.totalorder %s27, 0
    %p481 = por %p479, %p480
    %p482 = scmp.ne.s32.totalorder %s471, %s474
    %p483 = scmp.eq.s32.totalorder %s32, 3
    %p484 = por %p482, %p483
    %p485 = scmp.ne.s32.totalorder %s474, %s475
    %p486 = scmp.eq.s32.totalorder %s32, 0
    %p487 = por %p485, %p486
    %p488 = scmp.ne.s32.totalorder %s474, %s475
    %p489 = scmp.eq.s32.totalorder %s33, 3
    %p490 = por %p488, %p489
    %p492 = scmp.ne.s32.totalorder %s475, %s491
    %p493 = scmp.eq.s32.totalorder %s33, 0
    %p494 = por %p492, %p493
    %s495 = ssub.s32 %s35, %s42
    %p496 = scmp.eq.s32.totalorder %s495, 0
    %s498 = sadd.s32 %s497, 1
    %s499 = scalar_select %p496, %s497, %s498
    %p502 = pneg %p496
    %p503 = scmp.eq.s32.totalorder %s27, 3
    %p504 = por %p502, %p503
    %p505 = scmp.ne.s32.totalorder %s497, %s500
    %p506 = scmp.eq.s32.totalorder %s27, 0
    %p507 = por %p505, %p506
    %p508 = scmp.ne.s32.totalorder %s497, %s500
    %p509 = scmp.eq.s32.totalorder %s32, 3
    %p510 = por %p508, %p509
    %p511 = scmp.ne.s32.totalorder %s500, %s501
    %p512 = scmp.eq.s32.totalorder %s32, 0
    %p513 = por %p511, %p512
    %p514 = scmp.ne.s32.totalorder %s500, %s501
    %p515 = scmp.eq.s32.totalorder %s33, 3
    %p516 = por %p514, %p515
    %p518 = scmp.ne.s32.totalorder %s501, %s517
    %p519 = scmp.eq.s32.totalorder %s33, 0
    %p520 = por %p518, %p519
    %s521 = ssub.s32 %s35, %s42
    %p522 = scmp.eq.s32.totalorder %s521, 0
    %s524 = sadd.s32 %s523, 1
    %s525 = scalar_select %p522, %s523, %s524
    %p528 = pneg %p522
    %p529 = scmp.eq.s32.totalorder %s27, 3
    %p530 = por %p528, %p529
    %p531 = scmp.ne.s32.totalorder %s523, %s526
    %p532 = scmp.eq.s32.totalorder %s27, 0
    %p533 = por %p531, %p532
    %p534 = scmp.ne.s32.totalorder %s523, %s526
    %p535 = scmp.eq.s32.totalorder %s32, 3
    %p536 = por %p534, %p535
    %p537 = scmp.ne.s32.totalorder %s526, %s527
    %p538 = scmp.eq.s32.totalorder %s32, 0
    %p539 = por %p537, %p538
    %p540 = scmp.ne.s32.totalorder %s526, %s527
    %p541 = scmp.eq.s32.totalorder %s33, 3
    %p542 = por %p540, %p541
    %p544 = scmp.ne.s32.totalorder %s527, %s543
    %p545 = scmp.eq.s32.totalorder %s33, 0
    %p546 = por %p544, %p545
    %s547 = ssub.s32 %s35, %s42
    %p548 = scmp.eq.s32.totalorder %s547, 0
    %s550 = sadd.s32 %s549, 1
    %s551 = scalar_select %p548, %s549, %s550
    %p554 = pneg %p548
    %p555 = scmp.eq.s32.totalorder %s27, 3
    %p556 = por %p554, %p555
    %p557 = scmp.ne.s32.totalorder %s549, %s552
    %p558 = scmp.eq.s32.totalorder %s27, 0
    %p559 = por %p557, %p558
    %p560 = scmp.ne.s32.totalorder %s549, %s552
    %p561 = scmp.eq.s32.totalorder %s32, 3
    %p562 = por %p560, %p561
    %p563 = scmp.ne.s32.totalorder %s552, %s553
    %p564 = scmp.eq.s32.totalorder %s32, 0
    %p565 = por %p563, %p564
    %p566 = scmp.ne.s32.totalorder %s552, %s553
    %p567 = scmp.eq.s32.totalorder %s33, 3
    %p568 = por %p566, %p567
    %p570 = scmp.ne.s32.totalorder %s553, %s569
    %p571 = scmp.eq.s32.totalorder %s33, 0
    %p572 = por %p570, %p571
    %s573 = ssub.s32 %s34, %s46
    %p574 = scmp.eq.s32.totalorder %s573, 0
    %s576 = sadd.s32 %s575, 1
    %s577 = scalar_select %p574, %s575, %s576
    %p580 = pneg %p574
    %p581 = scmp.eq.s32.totalorder %s27, 3
    %p582 = por %p580, %p581
    %p583 = scmp.ne.s32.totalorder %s575, %s578
    %p584 = scmp.eq.s32.totalorder %s27, 0
    %p585 = por %p583, %p584
    %p586 = scmp.ne.s32.totalorder %s575, %s578
    %p587 = scmp.eq.s32.totalorder %s32, 3
    %p588 = por %p586, %p587
    %p589 = scmp.ne.s32.totalorder %s578, %s579
    %p590 = scmp.eq.s32.totalorder %s32, 0
    %p591 = por %p589, %p590
    %p592 = scmp.ne.s32.totalorder %s578, %s579
    %p593 = scmp.eq.s32.totalorder %s33, 3
    %p594 = por %p592, %p593
    %p596 = scmp.ne.s32.totalorder %s579, %s595
    %p597 = scmp.eq.s32.totalorder %s33, 0
    %p598 = por %p596, %p597
    %p599 = scmp.le.s32.totalorder 1, %s27
    %p600 = scmp.lt.s32.totalorder %s27, 5
    %p601 = pnand %p599, %p600
    %p602 = pneg %p601
    // Predicated region
    $region9: #{fast_transformer_forward.2} parent=5 // pred_check
      _
    $region10: #{fast_transformer_forward.2} parent=5 // pred_check_branch
      %604 = sbr.rel (%p601) target = $region12
    $region11: #{fast_transformer_forward.2} parent=5 // pred_region
      %s605 = ssub.s32 %s27, 1
      // Predicated region
      $region13: #{fast_transformer_forward.2} parent=11 // pred_check
        %p606 = pneg %p112
      $region14: #{fast_transformer_forward.2} parent=11 // pred_check_branch
        %608 = sbr.rel (%p606) target = $region16
      $region15: #{fast_transformer_forward.2} parent=11 // pred_region
        _
      $region16: #{fast_transformer_forward.2} parent=11 // pred_fallthru
        _
      // Predicated region
      $region17: #{fast_transformer_forward.2} parent=11 // pred_check
        %p609 = pneg %p133
      $region18: #{fast_transformer_forward.2} parent=11 // pred_check_branch
        %611 = sbr.rel (%p609) target = $region20
      $region19: #{fast_transformer_forward.2} parent=11 // pred_region
        _
      $region20: #{fast_transformer_forward.2} parent=11 // pred_fallthru
        _
      // Predicated region
      $region21: #{fast_transformer_forward.2} parent=11 // pred_check
        %p612 = pneg %p154
      $region22: #{fast_transformer_forward.2} parent=11 // pred_check_branch
        %614 = sbr.rel (%p612) target = $region24
      $region23: #{fast_transformer_forward.2} parent=11 // pred_region
        _
      $region24: #{fast_transformer_forward.2} parent=11 // pred_fallthru
        _
      // Predicated region
      $region25: #{fast_transformer_forward.2} parent=11 // pred_check
        %p615 = pneg %p175
      $region26: #{fast_transformer_forward.2} parent=11 // pred_check_branch
        %617 = sbr.rel (%p615) target = $region28
      $region27: #{fast_transformer_forward.2} parent=11 // pred_region
        _
      $region28: #{fast_transformer_forward.2} parent=11 // pred_fallthru
        _
    $region12: #{fast_transformer_forward.2} parent=5 // pred_fallthru
      _
    %p618 = scmp.lt.s32.totalorder %s27, 4
    // Predicated region
    $region29: #{fast_transformer_forward.2} parent=5 // pred_check
      %p619 = pneg %p618
    $region30: #{fast_transformer_forward.2} parent=5 // pred_check_branch
      %621 = sbr.rel (%p619) target = $region32
    $region31: #{fast_transformer_forward.2} parent=5 // pred_region
      // Predicated region
      $region33: #{fast_transformer_forward.2} parent=31 // pred_check
        %p622 = pneg %p59
      $region34: #{fast_transformer_forward.2} parent=31 // pred_check_branch
        %624 = sbr.rel (%p622) target = $region36
      $region35: #{fast_transformer_forward.2} parent=31 // pred_region
        %p625 = scmp.lt.s32.totalorder %s34, 1
        %s626 = scalar_select %p625, %s34, 1
        %s627 = smul.addr %s626, 2
        %s628 = smul.addr %s627, 8
        %s629 = scalar_lea.vmem %s0, %s628
      $region36: #{fast_transformer_forward.2} parent=31 // pred_fallthru
        _
      // Predicated region
      $region37: #{fast_transformer_forward.2} parent=31 // pred_check
        %p630 = pneg %p85
      $region38: #{fast_transformer_forward.2} parent=31 // pred_check_branch
        %632 = sbr.rel (%p630) target = $region40
      $region39: #{fast_transformer_forward.2} parent=31 // pred_region
        %p633 = scmp.lt.s32.totalorder %s34, 1
        %s634 = scalar_select %p633, %s34, 1
        %s635 = smul.addr %s634, 2
        %s636 = smul.addr %s635, 8
        %s637 = scalar_lea.vmem %s1, %s636
      $region40: #{fast_transformer_forward.2} parent=31 // pred_fallthru
        _
      // Predicated region
      $region41: #{fast_transformer_forward.2} parent=31 // pred_check
        %p638 = pneg %p195
      $region42: #{fast_transformer_forward.2} parent=31 // pred_check_branch
        %640 = sbr.rel (%p638) target = $region44
      $region43: #{fast_transformer_forward.2} parent=31 // pred_region
        %p641 = scmp.lt.s32.totalorder %s35, 1
        %s642 = scalar_select %p641, %s35, 1
        %s643 = scalar_lea.vmem %s6, %s642
      $region44: #{fast_transformer_forward.2} parent=31 // pred_fallthru
        _
      // Predicated region
      $region45: #{fast_transformer_forward.2} parent=31 // pred_check
        %p644 = pneg %p221
      $region46: #{fast_transformer_forward.2} parent=31 // pred_check_branch
        %646 = sbr.rel (%p644) target = $region48
      $region47: #{fast_transformer_forward.2} parent=31 // pred_region
        %p647 = scmp.lt.s32.totalorder %s35, 1
        %s648 = scalar_select %p647, %s35, 1
        %s649 = scalar_lea.vmem %s7, %s648
      $region48: #{fast_transformer_forward.2} parent=31 // pred_fallthru
        _
      // Predicated region
      $region49: #{fast_transformer_forward.2} parent=31 // pred_check
        %p650 = pneg %p247
      $region50: #{fast_transformer_forward.2} parent=31 // pred_check_branch
        %652 = sbr.rel (%p650) target = $region52
      $region51: #{fast_transformer_forward.2} parent=31 // pred_region
        %p653 = scmp.lt.s32.totalorder %s35, 1
        %s654 = scalar_select %p653, %s35, 1
        %s655 = smul.addr %s654, 24
        %s656 = smul.addr %s655, 4
        %s657 = scalar_lea.vmem %s8, %s656
      $region52: #{fast_transformer_forward.2} parent=31 // pred_fallthru
        _
      // Predicated region
      $region53: #{fast_transformer_forward.2} parent=31 // pred_check
        %p658 = pneg %p273
      $region54: #{fast_transformer_forward.2} parent=31 // pred_check_branch
        %660 = sbr.rel (%p658) target = $region56
      $region55: #{fast_transformer_forward.2} parent=31 // pred_region
        %p661 = scmp.lt.s32.totalorder %s35, 1
        %s662 = scalar_select %p661, %s35, 1
        %s663 = smul.addr %s662, 16
        %s664 = smul.addr %s663, 4
        %s665 = scalar_lea.vmem %s9, %s664
      $region56: #{fast_transformer_forward.2} parent=31 // pred_fallthru
        _
      // Predicated region
      $region57: #{fast_transformer_forward.2} parent=31 // pred_check
        %p666 = pneg %p299
      $region58: #{fast_transformer_forward.2} parent=31 // pred_check_branch
        %668 = sbr.rel (%p666) target = $region60
      $region59: #{fast_transformer_forward.2} parent=31 // pred_region
        %p669 = scmp.lt.s32.totalorder %s35, 1
        %s670 = scalar_select %p669, %s35, 1
        %s671 = smul.addr %s670, 16
        %s672 = smul.addr %s671, 4
        %s673 = scalar_lea.vmem %s10, %s672
      $region60: #{fast_transformer_forward.2} parent=31 // pred_fallthru
        _
      // Predicated region
      $region61: #{fast_transformer_forward.2} parent=31 // pred_check
        %p674 = pneg %p325
      $region62: #{fast_transformer_forward.2} parent=31 // pred_check_branch
        %676 = sbr.rel (%p674) target = $region64
      $region63: #{fast_transformer_forward.2} parent=31 // pred_region
        %p677 = scmp.lt.s32.totalorder %s35, 1
        %s678 = scalar_select %p677, %s35, 1
        %s679 = smul.addr %s678, 16
        %s680 = smul.addr %s679, 4
        %s681 = scalar_lea.vmem %s11, %s680
      $region64: #{fast_transformer_forward.2} parent=31 // pred_fallthru
        _
      // Predicated region
      $region65: #{fast_transformer_forward.2} parent=31 // pred_check
        %p682 = pneg %p351
      $region66: #{fast_transformer_forward.2} parent=31 // pred_check_branch
        %684 = sbr.rel (%p682) target = $region68
      $region67: #{fast_transformer_forward.2} parent=31 // pred_region
        %p685 = scmp.lt.s32.totalorder %s35, 1
        %s686 = scalar_select %p685, %s35, 1
        %s687 = scalar_lea.vmem %s12, %s686
      $region68: #{fast_transformer_forward.2} parent=31 // pred_fallthru
        _
      // Predicated region
      $region69: #{fast_transformer_forward.2} parent=31 // pred_check
        %p688 = pneg %p377
      $region70: #{fast_transformer_forward.2} parent=31 // pred_check_branch
        %690 = sbr.rel (%p688) target = $region72
      $region71: #{fast_transformer_forward.2} parent=31 // pred_region
        %p691 = scmp.lt.s32.totalorder %s35, 1
        %s692 = scalar_select %p691, %s35, 1
        %s693 = smul.addr %s692, 16
        %s694 = smul.addr %s693, 4
        %s695 = scalar_lea.vmem %s13, %s694
      $region72: #{fast_transformer_forward.2} parent=31 // pred_fallthru
        _
      // Predicated region
      $region73: #{fast_transformer_forward.2} parent=31 // pred_check
        %p696 = pneg %p403
      $region74: #{fast_transformer_forward.2} parent=31 // pred_check_branch
        %698 = sbr.rel (%p696) target = $region76
      $region75: #{fast_transformer_forward.2} parent=31 // pred_region
        %p699 = scmp.lt.s32.totalorder %s35, 1
        %s700 = scalar_select %p699, %s35, 1
        %s701 = scalar_lea.vmem %s14, %s700
      $region76: #{fast_transformer_forward.2} parent=31 // pred_fallthru
        _
      // Predicated region
      $region77: #{fast_transformer_forward.2} parent=31 // pred_check
        %p702 = pneg %p429
      $region78: #{fast_transformer_forward.2} parent=31 // pred_check_branch
        %704 = sbr.rel (%p702) target = $region80
      $region79: #{fast_transformer_forward.2} parent=31 // pred_region
        %p705 = scmp.lt.s32.totalorder %s35, 1
        %s706 = scalar_select %p705, %s35, 1
        %s707 = scalar_lea.vmem %s15, %s706
      $region80: #{fast_transformer_forward.2} parent=31 // pred_fallthru
        _
      // Predicated region
      $region81: #{fast_transformer_forward.2} parent=31 // pred_check
        %p708 = pneg %p455
      $region82: #{fast_transformer_forward.2} parent=31 // pred_check_branch
        %710 = sbr.rel (%p708) target = $region84
      $region83: #{fast_transformer_forward.2} parent=31 // pred_region
        %p711 = scmp.lt.s32.totalorder %s35, 1
        %s712 = scalar_select %p711, %s35, 1
        %s713 = scalar_lea.vmem %s16, %s712
      $region84: #{fast_transformer_forward.2} parent=31 // pred_fallthru
        _
      // Predicated region
      $region85: #{fast_transformer_forward.2} parent=31 // pred_check
        %p714 = pneg %p481
      $region86: #{fast_transformer_forward.2} parent=31 // pred_check_branch
        %716 = sbr.rel (%p714) target = $region88
      $region87: #{fast_transformer_forward.2} parent=31 // pred_region
        %p717 = scmp.lt.s32.totalorder %s35, 1
        %s718 = scalar_select %p717, %s35, 1
        %s719 = smul.addr %s718, 16
        %s720 = smul.addr %s719, 4
        %s721 = scalar_lea.vmem %s17, %s720
      $region88: #{fast_transformer_forward.2} parent=31 // pred_fallthru
        _
      // Predicated region
      $region89: #{fast_transformer_forward.2} parent=31 // pred_check
        %p722 = pneg %p507
      $region90: #{fast_transformer_forward.2} parent=31 // pred_check_branch
        %724 = sbr.rel (%p722) target = $region92
      $region91: #{fast_transformer_forward.2} parent=31 // pred_region
        %p725 = scmp.lt.s32.totalorder %s35, 1
        %s726 = scalar_select %p725, %s35, 1
        %s727 = smul.addr %s726, 2
        %s728 = scalar_lea.vmem %s18, %s727
      $region92: #{fast_transformer_forward.2} parent=31 // pred_fallthru
        _
      // Predicated region
      $region93: #{fast_transformer_forward.2} parent=31 // pred_check
        %p729 = pneg %p533
      $region94: #{fast_transformer_forward.2} parent=31 // pred_check_branch
        %731 = sbr.rel (%p729) target = $region96
      $region95: #{fast_transformer_forward.2} parent=31 // pred_region
        %p732 = scmp.lt.s32.totalorder %s35, 1
        %s733 = scalar_select %p732, %s35, 1
        %s734 = smul.addr %s733, 32
        %s735 = smul.addr %s734, 4
        %s736 = scalar_lea.vmem %s19, %s735
      $region96: #{fast_transformer_forward.2} parent=31 // pred_fallthru
        _
      // Predicated region
      $region97: #{fast_transformer_forward.2} parent=31 // pred_check
        %p737 = pneg %p559
      $region98: #{fast_transformer_forward.2} parent=31 // pred_check_branch
        %739 = sbr.rel (%p737) target = $region100
      $region99: #{fast_transformer_forward.2} parent=31 // pred_region
        %p740 = scmp.lt.s32.totalorder %s35, 1
        %s741 = scalar_select %p740, %s35, 1
        %s742 = scalar_lea.vmem %s20, %s741
      $region100: #{fast_transformer_forward.2} parent=31 // pred_fallthru
        _
    $region32: #{fast_transformer_forward.2} parent=5 // pred_fallthru
      _
    %p743 = scmp.le.s32.totalorder 1, %s27
    %p744 = scmp.lt.s32.totalorder %s27, 5
    %p745 = pnand %p743, %p744
    %p746 = pneg %p745
    // Predicated region
    $region101: #{fast_transformer_forward.2} parent=5 // pred_check
      _
    $region102: #{fast_transformer_forward.2} parent=5 // pred_check_branch
      %748 = sbr.rel (%p745) target = $region104
    $region103: #{fast_transformer_forward.2} parent=5 // pred_region
      %s749 = ssub.s32 %s27, 1
      %p750 = scmp.lt.s32.totalorder %s36, 1
      %s751 = scalar_select %p750, %s36, 1
      %s752 = smul.addr %s751, 2
      %s753 = smul.addr %s752, 8
      %s754 = scalar_lea.vmem %s0, %s753
      %p755 = pneg %p65
      %p756 = pneg %p62
      %p757 = scmp.lt.s32.totalorder %s36, 1
      %s758 = scalar_select %p757, %s36, 1
      %s759 = smul.addr %s758, 2
      %s760 = smul.addr %s759, 8
      %s761 = scalar_lea.vmem %s1, %s760
      %p762 = pneg %p91
      %p763 = pneg %p88
      %p764 = pneg %p112
      %p765 = pneg %p109
      %p766 = pneg %p133
      %p767 = pneg %p130
      %p768 = pneg %p154
      %p769 = pneg %p151
      %p770 = pneg %p175
      %p771 = pneg %p172
      %p772 = scmp.lt.s32.totalorder %s37, 1
      %s773 = scalar_select %p772, %s37, 1
      %s774 = scalar_lea.vmem %s6, %s773
      %p775 = pneg %p201
      %p776 = pneg %p198
      %p777 = scmp.lt.s32.totalorder %s37, 1
      %s778 = scalar_select %p777, %s37, 1
      %s779 = scalar_lea.vmem %s7, %s778
      %p780 = pneg %p227
      %p781 = pneg %p224
      %p782 = scmp.lt.s32.totalorder %s37, 1
      %s783 = scalar_select %p782, %s37, 1
      %s784 = smul.addr %s783, 24
      %s785 = smul.addr %s784, 4
      %s786 = scalar_lea.vmem %s8, %s785
      %p787 = pneg %p253
      %p788 = pneg %p250
      %p789 = scmp.lt.s32.totalorder %s37, 1
      %s790 = scalar_select %p789, %s37, 1
      %s791 = smul.addr %s790, 16
      %s792 = smul.addr %s791, 4
      %s793 = scalar_lea.vmem %s9, %s792
      %p794 = pneg %p279
      %p795 = pneg %p276
      %p796 = scmp.lt.s32.totalorder %s37, 1
      %s797 = scalar_select %p796, %s37, 1
      %s798 = smul.addr %s797, 16
      %s799 = smul.addr %s798, 4
      %s800 = scalar_lea.vmem %s10, %s799
      %p801 = pneg %p305
      %p802 = pneg %p302
      %p803 = scmp.lt.s32.totalorder %s37, 1
      %s804 = scalar_select %p803, %s37, 1
      %s805 = smul.addr %s804, 16
      %s806 = smul.addr %s805, 4
      %s807 = scalar_lea.vmem %s11, %s806
      %p808 = pneg %p331
      %p809 = pneg %p328
      %p810 = scmp.lt.s32.totalorder %s37, 1
      %s811 = scalar_select %p810, %s37, 1
      %s812 = scalar_lea.vmem %s12, %s811
      %p813 = pneg %p357
      %p814 = pneg %p354
      %p815 = scmp.lt.s32.totalorder %s37, 1
      %s816 = scalar_select %p815, %s37, 1
      %s817 = smul.addr %s816, 16
      %s818 = smul.addr %s817, 4
      %s819 = scalar_lea.vmem %s13, %s818
      %p820 = pneg %p383
      %p821 = pneg %p380
      %p822 = scmp.lt.s32.totalorder %s37, 1
      %s823 = scalar_select %p822, %s37, 1
      %s824 = scalar_lea.vmem %s14, %s823
      %p825 = pneg %p409
      %p826 = pneg %p406
      %p827 = scmp.lt.s32.totalorder %s37, 1
      %s828 = scalar_select %p827, %s37, 1
      %s829 = scalar_lea.vmem %s15, %s828
      %p830 = pneg %p435
      %p831 = pneg %p432
      %p832 = scmp.lt.s32.totalorder %s37, 1
      %s833 = scalar_select %p832, %s37, 1
      %s834 = scalar_lea.vmem %s16, %s833
      %p835 = pneg %p461
      %p836 = pneg %p458
      %p837 = scmp.lt.s32.totalorder %s37, 1
      %s838 = scalar_select %p837, %s37, 1
      %s839 = smul.addr %s838, 16
      %s840 = smul.addr %s839, 4
      %s841 = scalar_lea.vmem %s17, %s840
      %p842 = pneg %p487
      %p843 = pneg %p484
      %p844 = scmp.lt.s32.totalorder %s37, 1
      %s845 = scalar_select %p844, %s37, 1
      %s846 = smul.addr %s845, 2
      %s847 = scalar_lea.vmem %s18, %s846
      %p848 = pneg %p513
      %p849 = pneg %p510
      %p850 = scmp.lt.s32.totalorder %s37, 1
      %s851 = scalar_select %p850, %s37, 1
      %s852 = smul.addr %s851, 32
      %s853 = smul.addr %s852, 4
      %s854 = scalar_lea.vmem %s19, %s853
      %p855 = pneg %p539
      %p856 = pneg %p536
      %p857 = scmp.lt.s32.totalorder %s37, 1
      %s858 = scalar_select %p857, %s37, 1
      %s859 = scalar_lea.vmem %s20, %s858
      %p860 = pneg %p565
      %p861 = pneg %p562
      %p862 = pneg %p591
      %p863 = pneg %p588
      %p864 = scmp.lt.s32.totalorder %s36, 1
      %s865 = scalar_select %p864, %s36, 1
      %s866 = smul.addr %s865, 2
      %s867 = smul.addr %s866, 4
      %s868 = scalar_lea.vmem %s21, %s867
      %p869 = scmp.lt.s32.totalorder %s36, 1
      %s870 = scalar_select %p869, %s36, 1
      %s871 = smul.addr %s870, 2
      %s872 = smul.addr %s871, 8
      %s873 = scalar_lea.vmem %s0, %s872
      %p874 = scmp.lt.s32.totalorder %s36, 1
      %s875 = scalar_select %p874, %s36, 1
      %s876 = smul.addr %s875, 2
      %s877 = smul.addr %s876, 8
      %s878 = scalar_lea.vmem %s1, %s877
      %p879 = scmp.lt.s32.totalorder %s37, 1
      %s880 = scalar_select %p879, %s37, 1
      %s881 = scalar_lea.vmem %s6, %s880
      %p882 = scmp.lt.s32.totalorder %s37, 1
      %s883 = scalar_select %p882, %s37, 1
      %s884 = scalar_lea.vmem %s7, %s883
      %p885 = scmp.lt.s32.totalorder %s37, 1
      %s886 = scalar_select %p885, %s37, 1
      %s887 = smul.addr %s886, 24
      %s888 = smul.addr %s887, 4
      %s889 = scalar_lea.vmem %s8, %s888
      %p890 = scmp.lt.s32.totalorder %s37, 1
      %s891 = scalar_select %p890, %s37, 1
      %s892 = smul.addr %s891, 16
      %s893 = smul.addr %s892, 4
      %s894 = scalar_lea.vmem %s9, %s893
      %p895 = scmp.lt.s32.totalorder %s37, 1
      %s896 = scalar_select %p895, %s37, 1
      %s897 = smul.addr %s896, 16
      %s898 = smul.addr %s897, 4
      %s899 = scalar_lea.vmem %s10, %s898
      %p900 = scmp.lt.s32.totalorder %s37, 1
      %s901 = scalar_select %p900, %s37, 1
      %s902 = smul.addr %s901, 16
      %s903 = smul.addr %s902, 4
      %s904 = scalar_lea.vmem %s11, %s903
      %p905 = scmp.lt.s32.totalorder %s37, 1
      %s906 = scalar_select %p905, %s37, 1
      %s907 = scalar_lea.vmem %s12, %s906
      %p908 = scmp.lt.s32.totalorder %s37, 1
      %s909 = scalar_select %p908, %s37, 1
      %s910 = smul.addr %s909, 16
      %s911 = smul.addr %s910, 4
      %s912 = scalar_lea.vmem %s13, %s911
      %p913 = scmp.lt.s32.totalorder %s37, 1
      %s914 = scalar_select %p913, %s37, 1
      %s915 = scalar_lea.vmem %s14, %s914
      %p916 = scmp.lt.s32.totalorder %s37, 1
      %s917 = scalar_select %p916, %s37, 1
      %s918 = scalar_lea.vmem %s15, %s917
      %p919 = scmp.lt.s32.totalorder %s37, 1
      %s920 = scalar_select %p919, %s37, 1
      %s921 = scalar_lea.vmem %s16, %s920
      %p922 = scmp.lt.s32.totalorder %s37, 1
      %s923 = scalar_select %p922, %s37, 1
      %s924 = smul.addr %s923, 16
      %s925 = smul.addr %s924, 4
      %s926 = scalar_lea.vmem %s17, %s925
      %p927 = scmp.lt.s32.totalorder %s37, 1
      %s928 = scalar_select %p927, %s37, 1
      %s929 = smul.addr %s928, 2
      %s930 = scalar_lea.vmem %s18, %s929
      %p931 = scmp.lt.s32.totalorder %s37, 1
      %s932 = scalar_select %p931, %s37, 1
      %s933 = smul.addr %s932, 32
      %s934 = smul.addr %s933, 4
      %s935 = scalar_lea.vmem %s19, %s934
      %p936 = scmp.lt.s32.totalorder %s37, 1
      %s937 = scalar_select %p936, %s37, 1
      %s938 = scalar_lea.vmem %s20, %s937
      %p939 = scmp.lt.s32.totalorder %s36, 1
      %s940 = scalar_select %p939, %s36, 1
      %s941 = smul.addr %s940, 2
      %s942 = smul.addr %s941, 4
      %s943 = scalar_lea.vmem %s21, %s942
      %p945 = scmp.eq.s32.totalorder %s37, 0
      // Predicated region
      $region105: #{fast_transformer_forward.2} parent=103 // pred_check
        %p946 = pneg %p945
      $region106: #{fast_transformer_forward.2} parent=103 // pred_check_branch
        %948 = sbr.rel (%p946) target = $region108
      $region107: #{fast_transformer_forward.2} parent=103 // pred_region
        %v949 = vld [vmem:[%s873] sm:$0xff]
        %v950 = vld [vmem:[%s873 + $0x8] sm:$0xff]
        %vm951 = vcmask 523264
        %952 = vst.msk [vmem:[#allocation2] sm:$0xff] %vm951, %v949
        %953 = vst.msk [vmem:[#allocation2 + $0x8] sm:$0xff] %vm951, %v950
      $region108: #{fast_transformer_forward.2} parent=103 // pred_fallthru
        _
      %v954 = vld [vmem:[#allocation2] sm:$0xff]
      %v955 = vld [vmem:[#allocation2 + $0x8] sm:$0xff]
      %v956 = vld [vmem:[%s2] sm:$0xff]
      %v957 = vld [vmem:[%s2 + $0x8] sm:$0xff]
      %v958 = vld [vmem:[%s3] sm:$0xff]
      %v959 = vld [vmem:[%s3 + $0x8] sm:$0xff]
      %v960 = vld [vmem:[%s4] sm:$0xff]
      %v961 = vld [vmem:[%s4 + $0x8] sm:$0xff]
      %v962 = vld [vmem:[%s881] sm:$0x1]
      %v963 = vld [vmem:[%s884] sm:$0x1]
      %vm964 = vcmask 523264
      %v965 = vsel %vm964, %v954, 0.0
      %966 = vadd.xlane.f32.xlu0 %v965
      %v967 = vpop.xlane.xlu0 %966
      %v968 = vsel %vm964, %v955, 0.0
      %969 = vadd.xlane.f32.xlu0 %v968
      %v970 = vpop.xlane.xlu0 %969
      %v971 = vrcp.pop 64.0
      %v972 = vmul.f32 %v967, %v971
      %v973 = vmul.f32 %v970, %v971
      %v974 = vsub.f32 %v954, %v972
      %v975 = vsub.f32 %v955, %v973
      %v976 = vmul.f32 %v974, %v974
      %v977 = vmul.f32 %v975, %v975
      %v978 = vsel %vm964, %v976, 0.0
      %979 = vadd.xlane.f32.xlu0 %v978
      %v980 = vpop.xlane.xlu0 %979
      %v981 = vsel %vm964, %v977, 0.0
      %982 = vadd.xlane.f32.xlu0 %v981
      %v983 = vpop.xlane.xlu0 %982
      %v984 = vmul.f32 %v980, %v971
      %v985 = vmul.f32 %v983, %v971
      %v986 = vadd.f32 %v984, 1e-05
      %v987 = vadd.f32 %v985, 1e-05
      %v988 = vrsqrt.pop %v986
      %v989 = vrsqrt.pop %v987
      %v990 = vmul.f32 %v974, %v988
      %v991 = vmul.f32 %v975, %v989
      %v993 = vlaneseq
      %v994 = vshrl.u32 %v993, 7
      %v995 = vsub.s32 0, %v994
      %v996 = vrot.slane %v962, %v995
      %v998 = vmul.f32 %v990, %v996
      %v999 = vmul.f32 %v991, %v996
      %v1001 = vlaneseq
      %v1002 = vshrl.u32 %v1001, 7
      %v1003 = vsub.s32 0, %v1002
      %v1004 = vrot.slane %v963, %v1003
      %v1006 = vadd.f32 %v998, %v1004
      %v1007 = vadd.f32 %v999, %v1004
      %v1008 = vld [vmem:[%s889] sm:$0xff]
      %v1009 = vld [vmem:[%s889 + $0x8] sm:$0xf]
      %v1010 = vld [vmem:[%s889 + $0xc] sm:$0xff]
      %v1011 = vld [vmem:[%s889 + $0x14] sm:$0xf]
      %v1012 = vld [vmem:[%s889 + $0x18] sm:$0xff]
      %v1013 = vld [vmem:[%s889 + $0x20] sm:$0xf]
      %v1014 = vld [vmem:[%s889 + $0x24] sm:$0xff]
      %v1015 = vld [vmem:[%s889 + $0x2c] sm:$0xf]
      %v1016 = vld [vmem:[%s889 + $0x30] sm:$0xff]
      %v1017 = vld [vmem:[%s889 + $0x38] sm:$0xf]
      %v1018 = vld [vmem:[%s889 + $0x3c] sm:$0xff]
      %v1019 = vld [vmem:[%s889 + $0x44] sm:$0xf]
      %v1020 = vld [vmem:[%s889 + $0x48] sm:$0xff]
      %v1021 = vld [vmem:[%s889 + $0x50] sm:$0xf]
      %v1022 = vld [vmem:[%s889 + $0x54] sm:$0xff]
      %v1023 = vld [vmem:[%s889 + $0x5c] sm:$0xf]
      %v1024 = vpack.c.bf16 %v1007, %v1006
      %v1041 = vunpack.c.l.b16 %v1008
      %v1042 = vunpack.c.h.b16 %v1008
      %v1043 = vunpack.c.l.b16 %v1009
      %v1044 = vunpack.c.l.b16 %v1010
      %v1045 = vunpack.c.h.b16 %v1010
      %v1046 = vunpack.c.l.b16 %v1011
      %v1047 = vunpack.c.l.b16 %v1012
      %v1048 = vunpack.c.h.b16 %v1012
      %v1049 = vunpack.c.l.b16 %v1013
      %v1050 = vunpack.c.l.b16 %v1014
      %v1051 = vunpack.c.h.b16 %v1014
      %v1052 = vunpack.c.l.b16 %v1015
      %v1053 = vunpack.c.l.b16 %v1016
      %v1054 = vunpack.c.h.b16 %v1016
      %v1055 = vunpack.c.l.b16 %v1017
      %v1056 = vunpack.c.l.b16 %v1018
      %v1057 = vunpack.c.h.b16 %v1018
      %v1058 = vunpack.c.l.b16 %v1019
      %v1059 = vunpack.c.l.b16 %v1020
      %v1060 = vunpack.c.h.b16 %v1020
      %v1061 = vunpack.c.l.b16 %v1021
      %v1062 = vunpack.c.l.b16 %v1022
      %v1063 = vunpack.c.h.b16 %v1022
      %v1064 = vunpack.c.l.b16 %v1023
      %v1065 = vpack.c.b16 %v1044, %v1041
      %v1066 = vpack.c.b16 %v1045, %v1042
      %v1067 = vpack.c.b16 %v1046, %v1043
      %v1068 = vpack.c.b16 %v1050, %v1047
      %v1069 = vpack.c.b16 %v1051, %v1048
      %v1070 = vpack.c.b16 %v1052, %v1049
      %v1071 = vpack.c.b16 %v1056, %v1053
      %v1072 = vpack.c.b16 %v1057, %v1054
      %v1073 = vpack.c.b16 %v1058, %v1055
      %v1074 = vpack.c.b16 %v1062, %v1059
      %v1075 = vpack.c.b16 %v1063, %v1060
      %v1076 = vpack.c.b16 %v1064, %v1061
      %v1090 = vsel %vm964, %v1024, 0
      %1092 = vmatprep.subr.bf16.mxu0 %v1066
      %1093 = vmatpush1.bf16.msra.mxu0 %v1065
      %1094 = vmatprep.subr.bf16.mxu0 %v1069
      %1095 = vmatpush1.bf16.msra.mxu0 %v1068
      %1096 = vmatprep.subr.bf16.mxu0 %v1072
      %1097 = vmatpush1.bf16.msra.mxu0 %v1071
      %1098 = vmatprep.subr.bf16.mxu0 %v1075
      %1099 = vmatpush1.bf16.msra.mxu0 %v1074
      %1100 = vmatprep.subr.bf16.mxu0 0
      %1101 = vmatpush1.bf16.msra.mxu0 0
      %1102 = vmatprep.subr.bf16.mxu0 0
      %1103 = vmatpush1.bf16.msra.mxu0 0
      %1104 = vmatprep.subr.bf16.mxu0 0
      %1105 = vmatpush1.bf16.msra.mxu0 0
      %1106 = vmatprep.subr.bf16.mxu0 0
      %1107 = vmatpush1.bf16.msra.mxu0 0
      %1108 = vmatprep.subr.bf16.mxu0 0
      %1109 = vmatpush1.bf16.msra.mxu0 0
      %1110 = vmatprep.subr.bf16.mxu0 0
      %1111 = vmatpush1.bf16.msra.mxu0 0
      %1112 = vmatprep.subr.bf16.mxu0 0
      %1113 = vmatpush1.bf16.msra.mxu0 0
      %1114 = vmatprep.subr.bf16.mxu0 0
      %1115 = vmatpush1.bf16.msra.mxu0 0
      %1116 = vmatprep.subr.bf16.mxu0 0
      %1117 = vmatpush1.bf16.msra.mxu0 0
      %1118 = vmatprep.subr.bf16.mxu0 0
      %1119 = vmatpush1.bf16.msra.mxu0 0
      %1120 = vmatprep.subr.bf16.mxu0 0
      %1121 = vmatpush1.bf16.msra.mxu0 0
      %1122 = vmatprep.subr.bf16.mxu0 0
      %1123 = vmatpush1.bf16.msra.mxu0 0
      %1124 = vmatprep.mubr.bf16.mxu0 0
      %1125 = vmatmul.mubr.bf16.gmra.mrb[0].mxu0 %v1090
      %v1126 = vpop.f32.mrb[0].mxu0
      %v1127 = vadd.f32 0.0, %v1126
      %v1128 = vpop.f32.mrb[0].mxu0
      %v1129 = vadd.f32 0.0, %v1128
      %v1130 = vpop.f32.mrb[0].mxu0
      %v1131 = vadd.f32 0.0, %v1130
      %v1132 = vpop.f32.mrb[0].mxu0
      %v1133 = vadd.f32 0.0, %v1132
      %1134 = vdwg.mxu0
      %1135 = vmatprep.subr.bf16.mxu0 0
      %1136 = vmatpush1.bf16.msra.mxu0 %v1067
      %1137 = vmatprep.subr.bf16.mxu0 0
      %1138 = vmatpush1.bf16.msra.mxu0 %v1070
      %1139 = vmatprep.subr.bf16.mxu0 0
      %1140 = vmatpush1.bf16.msra.mxu0 %v1073
      %1141 = vmatprep.subr.bf16.mxu0 0
      %1142 = vmatpush1.bf16.msra.mxu0 %v1076
      %1143 = vmatprep.subr.bf16.mxu0 0
      %1144 = vmatpush1.bf16.msra.mxu0 0
      %1145 = vmatprep.subr.bf16.mxu0 0
      %1146 = vmatpush1.bf16.msra.mxu0 0
      %1147 = vmatprep.subr.bf16.mxu0 0
      %1148 = vmatpush1.bf16.msra.mxu0 0
      %1149 = vmatprep.subr.bf16.mxu0 0
      %1150 = vmatpush1.bf16.msra.mxu0 0
      %1151 = vmatprep.subr.bf16.mxu0 0
      %1152 = vmatpush1.bf16.msra.mxu0 0
      %1153 = vmatprep.subr.bf16.mxu0 0
      %1154 = vmatpush1.bf16.msra.mxu0 0
      %1155 = vmatprep.subr.bf16.mxu0 0
      %1156 = vmatpush1.bf16.msra.mxu0 0
      %1157 = vmatprep.subr.bf16.mxu0 0
      %1158 = vmatpush1.bf16.msra.mxu0 0
      %1159 = vmatprep.subr.bf16.mxu0 0
      %1160 = vmatpush1.bf16.msra.mxu0 0
      %1161 = vmatprep.subr.bf16.mxu0 0
      %1162 = vmatpush1.bf16.msra.mxu0 0
      %1163 = vmatprep.subr.bf16.mxu0 0
      %1164 = vmatpush1.bf16.msra.mxu0 0
      %1165 = vmatprep.subr.bf16.mxu0 0
      %1166 = vmatpush1.bf16.msra.mxu0 0
      %1167 = vmatprep.mubr.bf16.mxu0 0
      %1168 = vmatmul.mubr.bf16.gmra.mrb[0].mxu0 %v1090
      %v1169 = vpop.f32.mrb[0].mxu0
      %v1170 = vadd.f32 0.0, %v1169
      %v1171 = vpop.f32.mrb[0].mxu0
      %v1172 = vpop.f32.mrb[0].mxu0
      %v1173 = vadd.f32 0.0, %v1172
      %v1174 = vpop.f32.mrb[0].mxu0
      %1175 = vdwg.mxu0
      %1176 = vrot.lane.b32.xlu0 %v1127, 127
      %v1177 = vpop.permute.xlu0 %1176
      %1178 = vrot.lane.b32.xlu0 %v1131, 127
      %v1179 = vpop.permute.xlu0 %1178
      %1180 = vrot.lane.b32.xlu0 %v1127, 1
      %v1181 = vpop.permute.xlu0 %1180
      %1182 = vrot.lane.b32.xlu0 %v1131, 1
      %v1183 = vpop.permute.xlu0 %1182
      %v1184 = vmul.f32 %v1127, %v956
      %v1185 = vmul.f32 %v1131, %v957
      %v1186 = vmul.f32 %v1177, %v958
      %v1187 = vmul.f32 %v1179, %v959
      %v1188 = vadd.f32 %v1184, %v1186
      %v1189 = vadd.f32 %v1185, %v1187
      %v1190 = vmul.f32 %v1181, %v960
      %v1191 = vmul.f32 %v1183, %v961
      %v1192 = vadd.f32 %v1188, %v1190
      %v1193 = vadd.f32 %v1189, %v1191
      %1194 = vrot.lane.b32.xlu0 %v1129, 127
      %v1195 = vpop.permute.xlu0 %1194
      %1196 = vrot.lane.b32.xlu0 %v1133, 127
      %v1197 = vpop.permute.xlu0 %1196
      %1198 = vrot.lane.b32.xlu0 %v1129, 1
      %v1199 = vpop.permute.xlu0 %1198
      %1200 = vrot.lane.b32.xlu0 %v1133, 1
      %v1201 = vpop.permute.xlu0 %1200
      %v1202 = vmul.f32 %v1129, %v956
      %v1203 = vmul.f32 %v1133, %v957
      %v1204 = vmul.f32 %v1195, %v958
      %v1205 = vmul.f32 %v1197, %v959
      %v1206 = vadd.f32 %v1202, %v1204
      %v1207 = vadd.f32 %v1203, %v1205
      %v1208 = vmul.f32 %v1199, %v960
      %v1209 = vmul.f32 %v1201, %v961
      %v1210 = vadd.f32 %v1206, %v1208
      %v1211 = vadd.f32 %v1207, %v1209
      %1212 = vrot.lane.b32.xlu0 %v1170, 127
      %v1213 = vpop.permute.xlu0 %1212
      %1214 = vrot.lane.b32.xlu0 %v1173, 127
      %v1215 = vpop.permute.xlu0 %1214
      %1216 = vrot.lane.b32.xlu0 %v1170, 1
      %v1217 = vpop.permute.xlu0 %1216
      %1218 = vrot.lane.b32.xlu0 %v1173, 1
      %v1219 = vpop.permute.xlu0 %1218
      %v1220 = vmul.f32 %v1170, %v956
      %v1221 = vmul.f32 %v1173, %v957
      %v1222 = vmul.f32 %v1213, %v958
      %v1223 = vmul.f32 %v1215, %v959
      %v1224 = vadd.f32 %v1220, %v1222
      %v1225 = vadd.f32 %v1221, %v1223
      %v1226 = vmul.f32 %v1217, %v960
      %v1227 = vmul.f32 %v1219, %v961
      %v1228 = vadd.f32 %v1224, %v1226
      %v1229 = vadd.f32 %v1225, %v1227
      %v1230 = vld [vmem:[%s878] sm:$0xff]
      %v1231 = vld [vmem:[%s878 + $0x8] sm:$0xff]
      %v1232 = vld [vmem:[%s5] sm:$0x3]
      %v1233 = vld [vmem:[%s894] sm:$0xf]
      %v1234 = vld [vmem:[%s894 + $0x4] sm:$0xf]
      %v1235 = vld [vmem:[%s894 + $0x8] sm:$0xf]
      %v1236 = vld [vmem:[%s894 + $0xc] sm:$0xf]
      %v1237 = vld [vmem:[%s894 + $0x10] sm:$0xf]
      %v1238 = vld [vmem:[%s894 + $0x14] sm:$0xf]
      %v1239 = vld [vmem:[%s894 + $0x18] sm:$0xf]
      %v1240 = vld [vmem:[%s894 + $0x1c] sm:$0xf]
      %v1241 = vld [vmem:[%s894 + $0x20] sm:$0xf]
      %v1242 = vld [vmem:[%s894 + $0x24] sm:$0xf]
      %v1243 = vld [vmem:[%s894 + $0x28] sm:$0xf]
      %v1244 = vld [vmem:[%s894 + $0x2c] sm:$0xf]
      %v1245 = vld [vmem:[%s894 + $0x30] sm:$0xf]
      %v1246 = vld [vmem:[%s894 + $0x34] sm:$0xf]
      %v1247 = vld [vmem:[%s894 + $0x38] sm:$0xf]
      %v1248 = vld [vmem:[%s894 + $0x3c] sm:$0xf]
      %v1249 = vpack.c.bf16 %v1131, %v1127
      %v1266 = vunpack.c.l.b16 %v1233
      %v1267 = vunpack.c.l.b16 %v1234
      %v1268 = vunpack.c.l.b16 %v1235
      %v1269 = vunpack.c.l.b16 %v1236
      %v1270 = vunpack.c.l.b16 %v1237
      %v1271 = vunpack.c.l.b16 %v1238
      %v1272 = vunpack.c.l.b16 %v1239
      %v1273 = vunpack.c.l.b16 %v1240
      %v1274 = vunpack.c.l.b16 %v1241
      %v1275 = vunpack.c.l.b16 %v1242
      %v1276 = vunpack.c.l.b16 %v1243
      %v1277 = vunpack.c.l.b16 %v1244
      %v1278 = vunpack.c.l.b16 %v1245
      %v1279 = vunpack.c.l.b16 %v1246
      %v1280 = vunpack.c.l.b16 %v1247
      %v1281 = vunpack.c.l.b16 %v1248
      %v1282 = vpack.c.b16 %v1267, %v1266
      %v1283 = vpack.c.b16 %v1269, %v1268
      %v1284 = vpack.c.b16 %v1271, %v1270
      %v1285 = vpack.c.b16 %v1273, %v1272
      %v1286 = vpack.c.b16 %v1275, %v1274
      %v1287 = vpack.c.b16 %v1277, %v1276
      %v1288 = vpack.c.b16 %v1279, %v1278
      %v1289 = vpack.c.b16 %v1281, %v1280
      %1298 = vmatprep.subr.bf16.mxu0 0
      %1299 = vmatpush1.bf16.msra.mxu0 %v1282
      %1300 = vmatprep.subr.bf16.mxu0 0
      %1301 = vmatpush1.bf16.msra.mxu0 %v1283
      %1302 = vmatprep.subr.bf16.mxu0 0
      %1303 = vmatpush1.bf16.msra.mxu0 %v1284
      %1304 = vmatprep.subr.bf16.mxu0 0
      %1305 = vmatpush1.bf16.msra.mxu0 %v1285
      %1306 = vmatprep.subr.bf16.mxu0 0
      %1307 = vmatpush1.bf16.msra.mxu0 %v1286
      %1308 = vmatprep.subr.bf16.mxu0 0
      %1309 = vmatpush1.bf16.msra.mxu0 %v1287
      %1310 = vmatprep.subr.bf16.mxu0 0
      %1311 = vmatpush1.bf16.msra.mxu0 %v1288
      %1312 = vmatprep.subr.bf16.mxu0 0
      %1313 = vmatpush1.bf16.msra.mxu0 %v1289
      %1314 = vmatprep.subr.bf16.mxu0 0
      %1315 = vmatpush1.bf16.msra.mxu0 0
      %1316 = vmatprep.subr.bf16.mxu0 0
      %1317 = vmatpush1.bf16.msra.mxu0 0
      %1318 = vmatprep.subr.bf16.mxu0 0
      %1319 = vmatpush1.bf16.msra.mxu0 0
      %1320 = vmatprep.subr.bf16.mxu0 0
      %1321 = vmatpush1.bf16.msra.mxu0 0
      %1322 = vmatprep.subr.bf16.mxu0 0
      %1323 = vmatpush1.bf16.msra.mxu0 0
      %1324 = vmatprep.subr.bf16.mxu0 0
      %1325 = vmatpush1.bf16.msra.mxu0 0
      %1326 = vmatprep.subr.bf16.mxu0 0
      %1327 = vmatpush1.bf16.msra.mxu0 0
      %1328 = vmatprep.subr.bf16.mxu0 0
      %1329 = vmatpush1.bf16.msra.mxu0 0
      %1330 = vmatprep.mubr.bf16.mxu0 0
      %1331 = vmatmul.mubr.bf16.gmra.mrb[0].mxu0 %v1249
      %v1332 = vpop.f32.mrb[0].mxu0
      %v1333 = vadd.f32 %v1230, %v1332
      %v1334 = vpop.f32.mrb[0].mxu0
      %v1335 = vpop.f32.mrb[0].mxu0
      %v1336 = vadd.f32 %v1231, %v1335
      %v1337 = vpop.f32.mrb[0].mxu0
      %1338 = vdwg.mxu0
      %vm1339 = vcmask 31744
      %v1340 = vsel %vm1339, %v1333, -inf
      %v1341 = vsel %vm1339, %v1336, -inf
      %v1342 = vmax.f32 %v1340, %v1341
      %v1343 = vrot.slane %v1342, 4
      %v1344 = vmax.f32 %v1342, %v1343
      %v1345 = vrot.slane %v1344, 2
      %v1346 = vmax.f32 %v1344, %v1345
      %v1347 = vrot.slane %v1346, 1
      %v1348 = vmax.f32 %v1346, %v1347
      %v1349 = vsub.f32 %v1333, %v1348
      %v1350 = vsub.f32 %v1336, %v1348
      %v1351 = vmul.f32 %v1349, 1.442695
      %v1352 = vpow.pop %v1351
      %v1353 = vmul.f32 %v1350, 1.442695
      %v1354 = vpow.pop %v1353
      %v1355 = vsel %vm1339, %v1352, 0.0
      %v1356 = vsel %vm1339, %v1354, 0.0
      %v1357 = vadd.f32 %v1355, %v1356
      %v1358 = vrot.slane %v1357, 4
      %v1359 = vadd.f32 %v1357, %v1358
      %v1360 = vrot.slane %v1359, 2
      %v1361 = vadd.f32 %v1359, %v1360
      %v1362 = vrot.slane %v1361, 1
      %v1363 = vadd.f32 %v1361, %v1362
      %v1364 = vrcp.pop %v1363
      %v1365 = vmul.f32 %v1352, %v1364
      %v1366 = vmul.f32 %v1354, %v1364
      %v1367 = vpack.c.bf16 %v1366, %v1365
      %v1369 = vsel %vm1339, %v1367, 0
      %vm1371 = vcmask 1041408
      %v1373 = vsel %vm1371, %v1232, 0
      %1375 = vmatprep.subr.bf16.mxu0 0
      %1376 = vmatpush1.bf16.msra.mxu0 %v1373
      %1377 = vmatprep.subr.bf16.mxu0 0
      %1378 = vmatpush1.bf16.msra.mxu0 0
      %1379 = vmatprep.subr.bf16.mxu0 0
      %1380 = vmatpush1.bf16.msra.mxu0 0
      %1381 = vmatprep.subr.bf16.mxu0 0
      %1382 = vmatpush1.bf16.msra.mxu0 0
      %1383 = vmatprep.subr.bf16.mxu0 0
      %1384 = vmatpush1.bf16.msra.mxu0 0
      %1385 = vmatprep.subr.bf16.mxu0 0
      %1386 = vmatpush1.bf16.msra.mxu0 0
      %1387 = vmatprep.subr.bf16.mxu0 0
      %1388 = vmatpush1.bf16.msra.mxu0 0
      %1389 = vmatprep.subr.bf16.mxu0 0
      %1390 = vmatpush1.bf16.msra.mxu0 0
      %1391 = vmatprep.subr.bf16.mxu0 0
      %1392 = vmatpush1.bf16.msra.mxu0 0
      %1393 = vmatprep.subr.bf16.mxu0 0
      %1394 = vmatpush1.bf16.msra.mxu0 0
      %1395 = vmatprep.subr.bf16.mxu0 0
      %1396 = vmatpush1.bf16.msra.mxu0 0
      %1397 = vmatprep.subr.bf16.mxu0 0
      %1398 = vmatpush1.bf16.msra.mxu0 0
      %1399 = vmatprep.subr.bf16.mxu0 0
      %1400 = vmatpush1.bf16.msra.mxu0 0
      %1401 = vmatprep.subr.bf16.mxu0 0
      %1402 = vmatpush1.bf16.msra.mxu0 0
      %1403 = vmatprep.subr.bf16.mxu0 0
      %1404 = vmatpush1.bf16.msra.mxu0 0
      %1405 = vmatprep.subr.bf16.mxu0 0
      %1406 = vmatpush1.bf16.msra.mxu0 0
      %1407 = vmatprep.mubr.bf16.mxu0 0
      %1408 = vmatmul.mubr.bf16.gmra.mrb[0].mxu0 %v1369
      %v1409 = vpop.f32.mrb[0].mxu0
      %v1410 = vadd.f32 0.0, %v1409
      %v1411 = vpop.f32.mrb[0].mxu0
      %v1412 = vpop.f32.mrb[0].mxu0
      %v1413 = vadd.f32 0.0, %v1412
      %v1414 = vpop.f32.mrb[0].mxu0
      %1415 = vdwg.mxu0
      %v1416 = vmul.f32 %v1410, %v1192
      %v1417 = vmul.f32 %v1413, %v1193
      %v1418 = vadd.f32 %v1416, %v1417
      %v1419 = vrot.slane %v1418, 4
      %v1420 = vadd.f32 %v1418, %v1419
      %v1421 = vrot.slane %v1420, 2
      %v1422 = vadd.f32 %v1420, %v1421
      %v1423 = vrot.slane %v1422, 1
      %v1424 = vadd.f32 %v1422, %v1423
      %v1425 = vmul.f32 %v1129, %v1424
      %v1426 = vmul.f32 %v1133, %v1424
      %v1427 = vld [vmem:[%s899] sm:$0xf]
      %v1428 = vld [vmem:[%s899 + $0x4] sm:$0xf]
      %v1429 = vld [vmem:[%s899 + $0x8] sm:$0xf]
      %v1430 = vld [vmem:[%s899 + $0xc] sm:$0xf]
      %v1431 = vld [vmem:[%s899 + $0x10] sm:$0xf]
      %v1432 = vld [vmem:[%s899 + $0x14] sm:$0xf]
      %v1433 = vld [vmem:[%s899 + $0x18] sm:$0xf]
      %v1434 = vld [vmem:[%s899 + $0x1c] sm:$0xf]
      %v1435 = vld [vmem:[%s899 + $0x20] sm:$0xf]
      %v1436 = vld [vmem:[%s899 + $0x24] sm:$0xf]
      %v1437 = vld [vmem:[%s899 + $0x28] sm:$0xf]
      %v1438 = vld [vmem:[%s899 + $0x2c] sm:$0xf]
      %v1439 = vld [vmem:[%s899 + $0x30] sm:$0xf]
      %v1440 = vld [vmem:[%s899 + $0x34] sm:$0xf]
      %v1441 = vld [vmem:[%s899 + $0x38] sm:$0xf]
      %v1442 = vld [vmem:[%s899 + $0x3c] sm:$0xf]
      %v1443 = vpack.c.bf16 %v1426, %v1425
      %v1460 = vunpack.c.l.b16 %v1427
      %v1461 = vunpack.c.l.b16 %v1428
      %v1462 = vunpack.c.l.b16 %v1429
      %v1463 = vunpack.c.l.b16 %v1430
      %v1464 = vunpack.c.l.b16 %v1431
      %v1465 = vunpack.c.l.b16 %v1432
      %v1466 = vunpack.c.l.b16 %v1433
      %v1467 = vunpack.c.l.b16 %v1434
      %v1468 = vunpack.c.l.b16 %v1435
      %v1469 = vunpack.c.l.b16 %v1436
      %v1470 = vunpack.c.l.b16 %v1437
      %v1471 = vunpack.c.l.b16 %v1438
      %v1472 = vunpack.c.l.b16 %v1439
      %v1473 = vunpack.c.l.b16 %v1440
      %v1474 = vunpack.c.l.b16 %v1441
      %v1475 = vunpack.c.l.b16 %v1442
      %v1476 = vpack.c.b16 %v1461, %v1460
      %v1477 = vpack.c.b16 %v1463, %v1462
      %v1478 = vpack.c.b16 %v1465, %v1464
      %v1479 = vpack.c.b16 %v1467, %v1466
      %v1480 = vpack.c.b16 %v1469, %v1468
      %v1481 = vpack.c.b16 %v1471, %v1470
      %v1482 = vpack.c.b16 %v1473, %v1472
      %v1483 = vpack.c.b16 %v1475, %v1474
      %1492 = vmatprep.subr.bf16.mxu0 0
      %1493 = vmatpush1.bf16.msra.mxu0 %v1476
      %1494 = vmatprep.subr.bf16.mxu0 0
      %1495 = vmatpush1.bf16.msra.mxu0 %v1477
      %1496 = vmatprep.subr.bf16.mxu0 0
      %1497 = vmatpush1.bf16.msra.mxu0 %v1478
      %1498 = vmatprep.subr.bf16.mxu0 0
      %1499 = vmatpush1.bf16.msra.mxu0 %v1479
      %1500 = vmatprep.subr.bf16.mxu0 0
      %1501 = vmatpush1.bf16.msra.mxu0 %v1480
      %1502 = vmatprep.subr.bf16.mxu0 0
      %1503 = vmatpush1.bf16.msra.mxu0 %v1481
      %1504 = vmatprep.subr.bf16.mxu0 0
      %1505 = vmatpush1.bf16.msra.mxu0 %v1482
      %1506 = vmatprep.subr.bf16.mxu0 0
      %1507 = vmatpush1.bf16.msra.mxu0 %v1483
      %1508 = vmatprep.subr.bf16.mxu0 0
      %1509 = vmatpush1.bf16.msra.mxu0 0
      %1510 = vmatprep.subr.bf16.mxu0 0
      %1511 = vmatpush1.bf16.msra.mxu0 0
      %1512 = vmatprep.subr.bf16.mxu0 0
      %1513 = vmatpush1.bf16.msra.mxu0 0
      %1514 = vmatprep.subr.bf16.mxu0 0
      %1515 = vmatpush1.bf16.msra.mxu0 0
      %1516 = vmatprep.subr.bf16.mxu0 0
      %1517 = vmatpush1.bf16.msra.mxu0 0
      %1518 = vmatprep.subr.bf16.mxu0 0
      %1519 = vmatpush1.bf16.msra.mxu0 0
      %1520 = vmatprep.subr.bf16.mxu0 0
      %1521 = vmatpush1.bf16.msra.mxu0 0
      %1522 = vmatprep.subr.bf16.mxu0 0
      %1523 = vmatpush1.bf16.msra.mxu0 0
      %1524 = vmatprep.mubr.bf16.mxu0 0
      %1525 = vmatmul.mubr.bf16.gmra.mrb[0].mxu0 %v1443
      %v1526 = vpop.f32.mrb[0].mxu0
      %v1527 = vadd.f32 %v1230, %v1526
      %v1528 = vpop.f32.mrb[0].mxu0
      %v1529 = vpop.f32.mrb[0].mxu0
      %v1530 = vadd.f32 %v1231, %v1529
      %v1531 = vpop.f32.mrb[0].mxu0
      %1532 = vdwg.mxu0
      %v1533 = vsel %vm1339, %v1527, -inf
      %v1534 = vsel %vm1339, %v1530, -inf
      %v1535 = vmax.f32 %v1533, %v1534
      %v1536 = vrot.slane %v1535, 4
      %v1537 = vmax.f32 %v1535, %v1536
      %v1538 = vrot.slane %v1537, 2
      %v1539 = vmax.f32 %v1537, %v1538
      %v1540 = vrot.slane %v1539, 1
      %v1541 = vmax.f32 %v1539, %v1540
      %v1542 = vsub.f32 %v1527, %v1541
      %v1543 = vsub.f32 %v1530, %v1541
      %v1544 = vmul.f32 %v1542, 1.442695
      %v1545 = vpow.pop %v1544
      %v1546 = vmul.f32 %v1543, 1.442695
      %v1547 = vpow.pop %v1546
      %v1548 = vsel %vm1339, %v1545, 0.0
      %v1549 = vsel %vm1339, %v1547, 0.0
      %v1550 = vadd.f32 %v1548, %v1549
      %v1551 = vrot.slane %v1550, 4
      %v1552 = vadd.f32 %v1550, %v1551
      %v1553 = vrot.slane %v1552, 2
      %v1554 = vadd.f32 %v1552, %v1553
      %v1555 = vrot.slane %v1554, 1
      %v1556 = vadd.f32 %v1554, %v1555
      %v1557 = vrcp.pop %v1556
      %v1558 = vmul.f32 %v1545, %v1557
      %v1559 = vmul.f32 %v1547, %v1557
      %v1560 = vpack.c.bf16 %v1559, %v1558
      %v1562 = vsel %vm1339, %v1560, 0
      %1564 = vmatprep.subr.bf16.mxu0 0
      %1565 = vmatpush1.bf16.msra.mxu0 %v1373
      %1566 = vmatprep.subr.bf16.mxu0 0
      %1567 = vmatpush1.bf16.msra.mxu0 0
      %1568 = vmatprep.subr.bf16.mxu0 0
      %1569 = vmatpush1.bf16.msra.mxu0 0
      %1570 = vmatprep.subr.bf16.mxu0 0
      %1571 = vmatpush1.bf16.msra.mxu0 0
      %1572 = vmatprep.subr.bf16.mxu0 0
      %1573 = vmatpush1.bf16.msra.mxu0 0
      %1574 = vmatprep.subr.bf16.mxu0 0
      %1575 = vmatpush1.bf16.msra.mxu0 0
      %1576 = vmatprep.subr.bf16.mxu0 0
      %1577 = vmatpush1.bf16.msra.mxu0 0
      %1578 = vmatprep.subr.bf16.mxu0 0
      %1579 = vmatpush1.bf16.msra.mxu0 0
      %1580 = vmatprep.subr.bf16.mxu0 0
      %1581 = vmatpush1.bf16.msra.mxu0 0
      %1582 = vmatprep.subr.bf16.mxu0 0
      %1583 = vmatpush1.bf16.msra.mxu0 0
      %1584 = vmatprep.subr.bf16.mxu0 0
      %1585 = vmatpush1.bf16.msra.mxu0 0
      %1586 = vmatprep.subr.bf16.mxu0 0
      %1587 = vmatpush1.bf16.msra.mxu0 0
      %1588 = vmatprep.subr.bf16.mxu0 0
      %1589 = vmatpush1.bf16.msra.mxu0 0
      %1590 = vmatprep.subr.bf16.mxu0 0
      %1591 = vmatpush1.bf16.msra.mxu0 0
      %1592 = vmatprep.subr.bf16.mxu0 0
      %1593 = vmatpush1.bf16.msra.mxu0 0
      %1594 = vmatprep.subr.bf16.mxu0 0
      %1595 = vmatpush1.bf16.msra.mxu0 0
      %1596 = vmatprep.mubr.bf16.mxu0 0
      %1597 = vmatmul.mubr.bf16.gmra.mrb[0].mxu0 %v1562
      %v1598 = vpop.f32.mrb[0].mxu0
      %v1599 = vadd.f32 0.0, %v1598
      %v1600 = vpop.f32.mrb[0].mxu0
      %v1601 = vpop.f32.mrb[0].mxu0
      %v1602 = vadd.f32 0.0, %v1601
      %v1603 = vpop.f32.mrb[0].mxu0
      %1604 = vdwg.mxu0
      %v1605 = vmul.f32 %v1599, %v1210
      %v1606 = vmul.f32 %v1602, %v1211
      %v1607 = vadd.f32 %v1605, %v1606
      %v1608 = vrot.slane %v1607, 4
      %v1609 = vadd.f32 %v1607, %v1608
      %v1610 = vrot.slane %v1609, 2
      %v1611 = vadd.f32 %v1609, %v1610
      %v1612 = vrot.slane %v1611, 1
      %v1613 = vadd.f32 %v1611, %v1612
      %v1614 = vmul.f32 %v1228, %v1613
      %v1615 = vmul.f32 %v1229, %v1613
      %v1616 = vld [vmem:[%s904] sm:$0xf]
      %v1617 = vld [vmem:[%s904 + $0x4] sm:$0xf]
      %v1618 = vld [vmem:[%s904 + $0x8] sm:$0xf]
      %v1619 = vld [vmem:[%s904 + $0xc] sm:$0xf]
      %v1620 = vld [vmem:[%s904 + $0x10] sm:$0xf]
      %v1621 = vld [vmem:[%s904 + $0x14] sm:$0xf]
      %v1622 = vld [vmem:[%s904 + $0x18] sm:$0xf]
      %v1623 = vld [vmem:[%s904 + $0x1c] sm:$0xf]
      %v1624 = vld [vmem:[%s904 + $0x20] sm:$0xf]
      %v1625 = vld [vmem:[%s904 + $0x24] sm:$0xf]
      %v1626 = vld [vmem:[%s904 + $0x28] sm:$0xf]
      %v1627 = vld [vmem:[%s904 + $0x2c] sm:$0xf]
      %v1628 = vld [vmem:[%s904 + $0x30] sm:$0xf]
      %v1629 = vld [vmem:[%s904 + $0x34] sm:$0xf]
      %v1630 = vld [vmem:[%s904 + $0x38] sm:$0xf]
      %v1631 = vld [vmem:[%s904 + $0x3c] sm:$0xf]
      %v1632 = vpack.c.bf16 %v1615, %v1614
      %v1633 = vld [vmem:[%s907] sm:$0x1]
      %v1635 = vlaneseq
      %v1636 = vshrl.u32 %v1635, 7
      %v1637 = vsub.s32 0, %v1636
      %v1638 = vrot.slane %v1633, %v1637
      %v1656 = vunpack.c.l.b16 %v1616
      %v1657 = vunpack.c.l.b16 %v1617
      %v1658 = vunpack.c.l.b16 %v1618
      %v1659 = vunpack.c.l.b16 %v1619
      %v1660 = vunpack.c.l.b16 %v1620
      %v1661 = vunpack.c.l.b16 %v1621
      %v1662 = vunpack.c.l.b16 %v1622
      %v1663 = vunpack.c.l.b16 %v1623
      %v1664 = vunpack.c.l.b16 %v1624
      %v1665 = vunpack.c.l.b16 %v1625
      %v1666 = vunpack.c.l.b16 %v1626
      %v1667 = vunpack.c.l.b16 %v1627
      %v1668 = vunpack.c.l.b16 %v1628
      %v1669 = vunpack.c.l.b16 %v1629
      %v1670 = vunpack.c.l.b16 %v1630
      %v1671 = vunpack.c.l.b16 %v1631
      %v1672 = vpack.c.b16 %v1657, %v1656
      %v1673 = vpack.c.b16 %v1659, %v1658
      %v1674 = vpack.c.b16 %v1661, %v1660
      %v1675 = vpack.c.b16 %v1663, %v1662
      %v1676 = vpack.c.b16 %v1665, %v1664
      %v1677 = vpack.c.b16 %v1667, %v1666
      %v1678 = vpack.c.b16 %v1669, %v1668
      %v1679 = vpack.c.b16 %v1671, %v1670
      %1688 = vmatprep.subr.bf16.mxu0 0
      %1689 = vmatpush1.bf16.msra.mxu0 %v1672
      %1690 = vmatprep.subr.bf16.mxu0 0
      %1691 = vmatpush1.bf16.msra.mxu0 %v1673
      %1692 = vmatprep.subr.bf16.mxu0 0
      %1693 = vmatpush1.bf16.msra.mxu0 %v1674
      %1694 = vmatprep.subr.bf16.mxu0 0
      %1695 = vmatpush1.bf16.msra.mxu0 %v1675
      %1696 = vmatprep.subr.bf16.mxu0 0
      %1697 = vmatpush1.bf16.msra.mxu0 %v1676
      %1698 = vmatprep.subr.bf16.mxu0 0
      %1699 = vmatpush1.bf16.msra.mxu0 %v1677
      %1700 = vmatprep.subr.bf16.mxu0 0
      %1701 = vmatpush1.bf16.msra.mxu0 %v1678
      %1702 = vmatprep.subr.bf16.mxu0 0
      %1703 = vmatpush1.bf16.msra.mxu0 %v1679
      %1704 = vmatprep.subr.bf16.mxu0 0
      %1705 = vmatpush1.bf16.msra.mxu0 0
      %1706 = vmatprep.subr.bf16.mxu0 0
      %1707 = vmatpush1.bf16.msra.mxu0 0
      %1708 = vmatprep.subr.bf16.mxu0 0
      %1709 = vmatpush1.bf16.msra.mxu0 0
      %1710 = vmatprep.subr.bf16.mxu0 0
      %1711 = vmatpush1.bf16.msra.mxu0 0
      %1712 = vmatprep.subr.bf16.mxu0 0
      %1713 = vmatpush1.bf16.msra.mxu0 0
      %1714 = vmatprep.subr.bf16.mxu0 0
      %1715 = vmatpush1.bf16.msra.mxu0 0
      %1716 = vmatprep.subr.bf16.mxu0 0
      %1717 = vmatpush1.bf16.msra.mxu0 0
      %1718 = vmatprep.subr.bf16.mxu0 0
      %1719 = vmatpush1.bf16.msra.mxu0 0
      %1720 = vmatprep.mubr.bf16.mxu0 0
      %1721 = vmatmul.mubr.bf16.gmra.mrb[0].mxu0 %v1632
      %v1722 = vpop.f32.mrb[0].mxu0
      %v1723 = vadd.f32 %v1638, %v1722
      %v1724 = vpop.f32.mrb[0].mxu0
      %v1725 = vpop.f32.mrb[0].mxu0
      %v1726 = vadd.f32 %v1638, %v1725
      %v1727 = vpop.f32.mrb[0].mxu0
      %1728 = vdwg.mxu0
      %v1729 = vadd.f32 %v1723, %v1127
      %v1730 = vadd.f32 %v1726, %v1131
      %v1731 = vld [vmem:[%s912] sm:$0xf]
      %v1732 = vld [vmem:[%s912 + $0x4] sm:$0xf]
      %v1733 = vld [vmem:[%s912 + $0x8] sm:$0xf]
      %v1734 = vld [vmem:[%s912 + $0xc] sm:$0xf]
      %v1735 = vld [vmem:[%s912 + $0x10] sm:$0xf]
      %v1736 = vld [vmem:[%s912 + $0x14] sm:$0xf]
      %v1737 = vld [vmem:[%s912 + $0x18] sm:$0xf]
      %v1738 = vld [vmem:[%s912 + $0x1c] sm:$0xf]
      %v1739 = vld [vmem:[%s912 + $0x20] sm:$0xf]
      %v1740 = vld [vmem:[%s912 + $0x24] sm:$0xf]
      %v1741 = vld [vmem:[%s912 + $0x28] sm:$0xf]
      %v1742 = vld [vmem:[%s912 + $0x2c] sm:$0xf]
      %v1743 = vld [vmem:[%s912 + $0x30] sm:$0xf]
      %v1744 = vld [vmem:[%s912 + $0x34] sm:$0xf]
      %v1745 = vld [vmem:[%s912 + $0x38] sm:$0xf]
      %v1746 = vld [vmem:[%s912 + $0x3c] sm:$0xf]
      %v1747 = vpack.c.bf16 %v1730, %v1729
      %v1764 = vunpack.c.l.b16 %v1731
      %v1765 = vunpack.c.l.b16 %v1732
      %v1766 = vunpack.c.l.b16 %v1733
      %v1767 = vunpack.c.l.b16 %v1734
      %v1768 = vunpack.c.l.b16 %v1735
      %v1769 = vunpack.c.l.b16 %v1736
      %v1770 = vunpack.c.l.b16 %v1737
      %v1771 = vunpack.c.l.b16 %v1738
      %v1772 = vunpack.c.l.b16 %v1739
      %v1773 = vunpack.c.l.b16 %v1740
      %v1774 = vunpack.c.l.b16 %v1741
      %v1775 = vunpack.c.l.b16 %v1742
      %v1776 = vunpack.c.l.b16 %v1743
      %v1777 = vunpack.c.l.b16 %v1744
      %v1778 = vunpack.c.l.b16 %v1745
      %v1779 = vunpack.c.l.b16 %v1746
      %v1780 = vpack.c.b16 %v1765, %v1764
      %v1781 = vpack.c.b16 %v1767, %v1766
      %v1782 = vpack.c.b16 %v1769, %v1768
      %v1783 = vpack.c.b16 %v1771, %v1770
      %v1784 = vpack.c.b16 %v1773, %v1772
      %v1785 = vpack.c.b16 %v1775, %v1774
      %v1786 = vpack.c.b16 %v1777, %v1776
      %v1787 = vpack.c.b16 %v1779, %v1778
      %1796 = vmatprep.subr.bf16.mxu0 0
      %1797 = vmatpush1.bf16.msra.mxu0 %v1780
      %1798 = vmatprep.subr.bf16.mxu0 0
      %1799 = vmatpush1.bf16.msra.mxu0 %v1781
      %1800 = vmatprep.subr.bf16.mxu0 0
      %1801 = vmatpush1.bf16.msra.mxu0 %v1782
      %1802 = vmatprep.subr.bf16.mxu0 0
      %1803 = vmatpush1.bf16.msra.mxu0 %v1783
      %1804 = vmatprep.subr.bf16.mxu0 0
      %1805 = vmatpush1.bf16.msra.mxu0 %v1784
      %1806 = vmatprep.subr.bf16.mxu0 0
      %1807 = vmatpush1.bf16.msra.mxu0 %v1785
      %1808 = vmatprep.subr.bf16.mxu0 0
      %1809 = vmatpush1.bf16.msra.mxu0 %v1786
      %1810 = vmatprep.subr.bf16.mxu0 0
      %1811 = vmatpush1.bf16.msra.mxu0 %v1787
      %1812 = vmatprep.subr.bf16.mxu0 0
      %1813 = vmatpush1.bf16.msra.mxu0 0
      %1814 = vmatprep.subr.bf16.mxu0 0
      %1815 = vmatpush1.bf16.msra.mxu0 0
      %1816 = vmatprep.subr.bf16.mxu0 0
      %1817 = vmatpush1.bf16.msra.mxu0 0
      %1818 = vmatprep.subr.bf16.mxu0 0
      %1819 = vmatpush1.bf16.msra.mxu0 0
      %1820 = vmatprep.subr.bf16.mxu0 0
      %1821 = vmatpush1.bf16.msra.mxu0 0
      %1822 = vmatprep.subr.bf16.mxu0 0
      %1823 = vmatpush1.bf16.msra.mxu0 0
      %1824 = vmatprep.subr.bf16.mxu0 0
      %1825 = vmatpush1.bf16.msra.mxu0 0
      %1826 = vmatprep.subr.bf16.mxu0 0
      %1827 = vmatpush1.bf16.msra.mxu0 0
      %1828 = vmatprep.mubr.bf16.mxu0 0
      %1829 = vmatmul.mubr.bf16.gmra.mrb[0].mxu0 %v1747
      %v1830 = vpop.f32.mrb[0].mxu0
      %v1831 = vadd.f32 0.0, %v1830
      %v1832 = vpop.f32.mrb[0].mxu0
      %v1833 = vpop.f32.mrb[0].mxu0
      %v1834 = vadd.f32 0.0, %v1833
      %v1835 = vpop.f32.mrb[0].mxu0
      %1836 = vdwg.mxu0
      %v1837 = vadd.f32 %v954, %v1831
      %v1838 = vadd.f32 %v955, %v1834
      %v1839 = vld [vmem:[%s915] sm:$0x1]
      %v1841 = vlaneseq
      %v1842 = vshrl.u32 %v1841, 7
      %v1843 = vsub.s32 0, %v1842
      %v1844 = vrot.slane %v1839, %v1843
      %v1846 = vadd.f32 %v1837, %v1844
      %v1847 = vadd.f32 %v1838, %v1844
      %1848 = vst.msk [vmem:[#allocation2] sm:$0xff] %vm964, %v1846
      %1849 = vst.msk [vmem:[#allocation2 + $0x8] sm:$0xff] %vm964, %v1847
      %v1850 = vld [vmem:[%s918] sm:$0x1]
      %v1851 = vld [vmem:[%s921] sm:$0x1]
      %v1852 = vld [vmem:[%s926] sm:$0xff]
      %v1853 = vld [vmem:[%s926 + $0x8] sm:$0xff]
      %v1854 = vld [vmem:[%s926 + $0x10] sm:$0xff]
      %v1855 = vld [vmem:[%s926 + $0x18] sm:$0xff]
      %v1856 = vld [vmem:[%s926 + $0x20] sm:$0xff]
      %v1857 = vld [vmem:[%s926 + $0x28] sm:$0xff]
      %v1858 = vld [vmem:[%s926 + $0x30] sm:$0xff]
      %v1859 = vld [vmem:[%s926 + $0x38] sm:$0xff]
      %v1860 = vld [vmem:[%s930] sm:$0x3]
      %v1861 = vld [vmem:[%s935] sm:$0xf]
      %v1862 = vld [vmem:[%s935 + $0x4] sm:$0xf]
      %v1863 = vld [vmem:[%s935 + $0x8] sm:$0xf]
      %v1864 = vld [vmem:[%s935 + $0xc] sm:$0xf]
      %v1865 = vld [vmem:[%s935 + $0x10] sm:$0xf]
      %v1866 = vld [vmem:[%s935 + $0x14] sm:$0xf]
      %v1867 = vld [vmem:[%s935 + $0x18] sm:$0xf]
      %v1868 = vld [vmem:[%s935 + $0x1c] sm:$0xf]
      %v1869 = vld [vmem:[%s935 + $0x20] sm:$0xf]
      %v1870 = vld [vmem:[%s935 + $0x24] sm:$0xf]
      %v1871 = vld [vmem:[%s935 + $0x28] sm:$0xf]
      %v1872 = vld [vmem:[%s935 + $0x2c] sm:$0xf]
      %v1873 = vld [vmem:[%s935 + $0x30] sm:$0xf]
      %v1874 = vld [vmem:[%s935 + $0x34] sm:$0xf]
      %v1875 = vld [vmem:[%s935 + $0x38] sm:$0xf]
      %v1876 = vld [vmem:[%s935 + $0x3c] sm:$0xf]
      %v1877 = vld [vmem:[%s935 + $0x40] sm:$0xf]
      %v1878 = vld [vmem:[%s935 + $0x44] sm:$0xf]
      %v1879 = vld [vmem:[%s935 + $0x48] sm:$0xf]
      %v1880 = vld [vmem:[%s935 + $0x4c] sm:$0xf]
      %v1881 = vld [vmem:[%s935 + $0x50] sm:$0xf]
      %v1882 = vld [vmem:[%s935 + $0x54] sm:$0xf]
      %v1883 = vld [vmem:[%s935 + $0x58] sm:$0xf]
      %v1884 = vld [vmem:[%s935 + $0x5c] sm:$0xf]
      %v1885 = vld [vmem:[%s935 + $0x60] sm:$0xf]
      %v1886 = vld [vmem:[%s935 + $0x64] sm:$0xf]
      %v1887 = vld [vmem:[%s935 + $0x68] sm:$0xf]
      %v1888 = vld [vmem:[%s935 + $0x6c] sm:$0xf]
      %v1889 = vld [vmem:[%s935 + $0x70] sm:$0xf]
      %v1890 = vld [vmem:[%s935 + $0x74] sm:$0xf]
      %v1891 = vld [vmem:[%s935 + $0x78] sm:$0xf]
      %v1892 = vld [vmem:[%s935 + $0x7c] sm:$0xf]
      %v1893 = vld [vmem:[%s938] sm:$0x1]
      %v1894 = vld [vmem:[#allocation2] sm:$0xff]
      %v1895 = vld [vmem:[#allocation2 + $0x8] sm:$0xff]
      %v1896 = vsel %vm964, %v1894, 0.0
      %1897 = vadd.xlane.f32.xlu0 %v1896
      %v1898 = vpop.xlane.xlu0 %1897
      %v1899 = vsel %vm964, %v1895, 0.0
      %1900 = vadd.xlane.f32.xlu0 %v1899
      %v1901 = vpop.xlane.xlu0 %1900
      %v1902 = vmul.f32 %v1898, %v971
      %v1903 = vmul.f32 %v1901, %v971
      %v1904 = vsub.f32 %v1894, %v1902
      %v1905 = vsub.f32 %v1895, %v1903
      %v1906 = vmul.f32 %v1904, %v1904
      %v1907 = vmul.f32 %v1905, %v1905
      %v1908 = vsel %vm964, %v1906, 0.0
      %1909 = vadd.xlane.f32.xlu0 %v1908
      %v1910 = vpop.xlane.xlu0 %1909
      %v1911 = vsel %vm964, %v1907, 0.0
      %1912 = vadd.xlane.f32.xlu0 %v1911
      %v1913 = vpop.xlane.xlu0 %1912
      %v1914 = vmul.f32 %v1910, %v971
      %v1915 = vmul.f32 %v1913, %v971
      %v1916 = vadd.f32 %v1914, 1e-05
      %v1917 = vadd.f32 %v1915, 1e-05
      %v1918 = vrsqrt.pop %v1916
      %v1919 = vrsqrt.pop %v1917
      %v1920 = vmul.f32 %v1904, %v1918
      %v1921 = vmul.f32 %v1905, %v1919
      %v1923 = vlaneseq
      %v1924 = vshrl.u32 %v1923, 7
      %v1925 = vsub.s32 0, %v1924
      %v1926 = vrot.slane %v1850, %v1925
      %v1928 = vmul.f32 %v1920, %v1926
      %v1929 = vmul.f32 %v1921, %v1926
      %v1931 = vlaneseq
      %v1932 = vshrl.u32 %v1931, 7
      %v1933 = vsub.s32 0, %v1932
      %v1934 = vrot.slane %v1851, %v1933
      %v1936 = vadd.f32 %v1928, %v1934
      %v1937 = vadd.f32 %v1929, %v1934
      %v1938 = vpack.c.bf16 %v1937, %v1936
      %v1940 = vlaneseq
      %v1941 = vshrl.u32 %v1940, 7
      %v1942 = vsub.s32 0, %v1941
      %v1943 = vrot.slane %v1860, %v1942
      %v1944 = vlaneseq
      %v1945 = vshrl.u32 %v1944, 7
      %v1946 = vsub.s32 1, %v1945
      %v1947 = vrot.slane %v1860, %v1946
      %v1958 = vunpack.c.l.b16 %v1852
      %v1959 = vunpack.c.h.b16 %v1852
      %v1960 = vunpack.c.l.b16 %v1853
      %v1961 = vunpack.c.h.b16 %v1853
      %v1962 = vunpack.c.l.b16 %v1854
      %v1963 = vunpack.c.h.b16 %v1854
      %v1964 = vunpack.c.l.b16 %v1855
      %v1965 = vunpack.c.h.b16 %v1855
      %v1966 = vunpack.c.l.b16 %v1856
      %v1967 = vunpack.c.h.b16 %v1856
      %v1968 = vunpack.c.l.b16 %v1857
      %v1969 = vunpack.c.h.b16 %v1857
      %v1970 = vunpack.c.l.b16 %v1858
      %v1971 = vunpack.c.h.b16 %v1858
      %v1972 = vunpack.c.l.b16 %v1859
      %v1973 = vunpack.c.h.b16 %v1859
      %v1974 = vpack.c.b16 %v1960, %v1958
      %v1975 = vpack.c.b16 %v1961, %v1959
      %v1976 = vpack.c.b16 %v1964, %v1962
      %v1977 = vpack.c.b16 %v1965, %v1963
      %v1978 = vpack.c.b16 %v1968, %v1966
      %v1979 = vpack.c.b16 %v1969, %v1967
      %v1980 = vpack.c.b16 %v1972, %v1970
      %v1981 = vpack.c.b16 %v1973, %v1971
      %v1991 = vsel %vm964, %v1938, 0
      %1993 = vmatprep.subr.bf16.mxu0 %v1975
      %1994 = vmatpush1.bf16.msra.mxu0 %v1974
      %1995 = vmatprep.subr.bf16.mxu0 %v1977
      %1996 = vmatpush1.bf16.msra.mxu0 %v1976
      %1997 = vmatprep.subr.bf16.mxu0 %v1979
      %1998 = vmatpush1.bf16.msra.mxu0 %v1978
      %1999 = vmatprep.subr.bf16.mxu0 %v1981
      %2000 = vmatpush1.bf16.msra.mxu0 %v1980
      %2001 = vmatprep.subr.bf16.mxu0 0
      %2002 = vmatpush1.bf16.msra.mxu0 0
      %2003 = vmatprep.subr.bf16.mxu0 0
      %2004 = vmatpush1.bf16.msra.mxu0 0
      %2005 = vmatprep.subr.bf16.mxu0 0
      %2006 = vmatpush1.bf16.msra.mxu0 0
      %2007 = vmatprep.subr.bf16.mxu0 0
      %2008 = vmatpush1.bf16.msra.mxu0 0
      %2009 = vmatprep.subr.bf16.mxu0 0
      %2010 = vmatpush1.bf16.msra.mxu0 0
      %2011 = vmatprep.subr.bf16.mxu0 0
      %2012 = vmatpush1.bf16.msra.mxu0 0
      %2013 = vmatprep.subr.bf16.mxu0 0
      %2014 = vmatpush1.bf16.msra.mxu0 0
      %2015 = vmatprep.subr.bf16.mxu0 0
      %2016 = vmatpush1.bf16.msra.mxu0 0
      %2017 = vmatprep.subr.bf16.mxu0 0
      %2018 = vmatpush1.bf16.msra.mxu0 0
      %2019 = vmatprep.subr.bf16.mxu0 0
      %2020 = vmatpush1.bf16.msra.mxu0 0
      %2021 = vmatprep.subr.bf16.mxu0 0
      %2022 = vmatpush1.bf16.msra.mxu0 0
      %2023 = vmatprep.subr.bf16.mxu0 0
      %2024 = vmatpush1.bf16.msra.mxu0 0
      %2025 = vmatprep.mubr.bf16.mxu0 0
      %2026 = vmatmul.mubr.bf16.gmra.mrb[0].mxu0 %v1991
      %v2027 = vpop.f32.mrb[0].mxu0
      %v2028 = vadd.f32 %v1943, %v2027
      %v2029 = vpop.f32.mrb[0].mxu0
      %v2030 = vadd.f32 %v1947, %v2029
      %v2031 = vpop.f32.mrb[0].mxu0
      %v2032 = vadd.f32 %v1943, %v2031
      %v2033 = vpop.f32.mrb[0].mxu0
      %v2034 = vadd.f32 %v1947, %v2033
      %2035 = vdwg.mxu0
      %v2036 = vmul.f32 %v2028, 0.5
      %v2037 = vmul.f32 %v2030, 0.5
      %v2038 = vmul.f32 %v2032, 0.5
      %v2039 = vmul.f32 %v2034, 0.5
      %v2040 = vmul.f32 %v2028, 0.044715
      %v2041 = vmul.f32 %v2030, 0.044715
      %v2042 = vmul.f32 %v2032, 0.044715
      %v2043 = vmul.f32 %v2034, 0.044715
      %v2044 = vmul.f32 %v2040, %v2028
      %v2045 = vmul.f32 %v2041, %v2030
      %v2046 = vmul.f32 %v2042, %v2032
      %v2047 = vmul.f32 %v2043, %v2034
      %v2048 = vmul.f32 %v2044, %v2028
      %v2049 = vmul.f32 %v2045, %v2030
      %v2050 = vmul.f32 %v2046, %v2032
      %v2051 = vmul.f32 %v2047, %v2034
      %v2052 = vadd.f32 %v2028, %v2048
      %v2053 = vadd.f32 %v2030, %v2049
      %v2054 = vadd.f32 %v2032, %v2050
      %v2055 = vadd.f32 %v2034, %v2051
      %v2056 = vmul.f32 %v2052, 0.7978846
      %v2057 = vmul.f32 %v2053, 0.7978846
      %v2058 = vmul.f32 %v2054, 0.7978846
      %v2059 = vmul.f32 %v2055, 0.7978846
      %v2060 = vtanh.pop %v2056
      %v2061 = vtanh.pop %v2057
      %v2062 = vtanh.pop %v2058
      %v2063 = vtanh.pop %v2059
      %v2064 = vadd.f32 %v2060, 1.0
      %v2065 = vadd.f32 %v2061, 1.0
      %v2066 = vadd.f32 %v2062, 1.0
      %v2067 = vadd.f32 %v2063, 1.0
      %v2068 = vmul.f32 %v2036, %v2064
      %v2069 = vmul.f32 %v2037, %v2065
      %v2070 = vmul.f32 %v2038, %v2066
      %v2071 = vmul.f32 %v2039, %v2067
      %v2072 = vpack.c.bf16 %v2070, %v2068
      %v2073 = vpack.c.bf16 %v2071, %v2069
      %v2106 = vunpack.c.l.b16 %v1861
      %v2107 = vunpack.c.l.b16 %v1862
      %v2108 = vunpack.c.l.b16 %v1863
      %v2109 = vunpack.c.l.b16 %v1864
      %v2110 = vunpack.c.l.b16 %v1865
      %v2111 = vunpack.c.l.b16 %v1866
      %v2112 = vunpack.c.l.b16 %v1867
      %v2113 = vunpack.c.l.b16 %v1868
      %v2114 = vunpack.c.l.b16 %v1869
      %v2115 = vunpack.c.l.b16 %v1870
      %v2116 = vunpack.c.l.b16 %v1871
      %v2117 = vunpack.c.l.b16 %v1872
      %v2118 = vunpack.c.l.b16 %v1873
      %v2119 = vunpack.c.l.b16 %v1874
      %v2120 = vunpack.c.l.b16 %v1875
      %v2121 = vunpack.c.l.b16 %v1876
      %v2122 = vunpack.c.l.b16 %v1877
      %v2123 = vunpack.c.l.b16 %v1878
      %v2124 = vunpack.c.l.b16 %v1879
      %v2125 = vunpack.c.l.b16 %v1880
      %v2126 = vunpack.c.l.b16 %v1881
      %v2127 = vunpack.c.l.b16 %v1882
      %v2128 = vunpack.c.l.b16 %v1883
      %v2129 = vunpack.c.l.b16 %v1884
      %v2130 = vunpack.c.l.b16 %v1885
      %v2131 = vunpack.c.l.b16 %v1886
      %v2132 = vunpack.c.l.b16 %v1887
      %v2133 = vunpack.c.l.b16 %v1888
      %v2134 = vunpack.c.l.b16 %v1889
      %v2135 = vunpack.c.l.b16 %v1890
      %v2136 = vunpack.c.l.b16 %v1891
      %v2137 = vunpack.c.l.b16 %v1892
      %v2138 = vpack.c.b16 %v2107, %v2106
      %v2139 = vpack.c.b16 %v2109, %v2108
      %v2140 = vpack.c.b16 %v2111, %v2110
      %v2141 = vpack.c.b16 %v2113, %v2112
      %v2142 = vpack.c.b16 %v2115, %v2114
      %v2143 = vpack.c.b16 %v2117, %v2116
      %v2144 = vpack.c.b16 %v2119, %v2118
      %v2145 = vpack.c.b16 %v2121, %v2120
      %v2146 = vpack.c.b16 %v2123, %v2122
      %v2147 = vpack.c.b16 %v2125, %v2124
      %v2148 = vpack.c.b16 %v2127, %v2126
      %v2149 = vpack.c.b16 %v2129, %v2128
      %v2150 = vpack.c.b16 %v2131, %v2130
      %v2151 = vpack.c.b16 %v2133, %v2132
      %v2152 = vpack.c.b16 %v2135, %v2134
      %v2153 = vpack.c.b16 %v2137, %v2136
      %2170 = vmatprep.subr.bf16.mxu0 0
      %2171 = vmatpush1.bf16.msra.mxu0 %v2138
      %2172 = vmatprep.subr.bf16.mxu0 0
      %2173 = vmatpush1.bf16.msra.mxu0 %v2139
      %2174 = vmatprep.subr.bf16.mxu0 0
      %2175 = vmatpush1.bf16.msra.mxu0 %v2140
      %2176 = vmatprep.subr.bf16.mxu0 0
      %2177 = vmatpush1.bf16.msra.mxu0 %v2141
      %2178 = vmatprep.subr.bf16.mxu0 0
      %2179 = vmatpush1.bf16.msra.mxu0 %v2142
      %2180 = vmatprep.subr.bf16.mxu0 0
      %2181 = vmatpush1.bf16.msra.mxu0 %v2143
      %2182 = vmatprep.subr.bf16.mxu0 0
      %2183 = vmatpush1.bf16.msra.mxu0 %v2144
      %2184 = vmatprep.subr.bf16.mxu0 0
      %2185 = vmatpush1.bf16.msra.mxu0 %v2145
      %2186 = vmatprep.subr.bf16.mxu0 0
      %2187 = vmatpush1.bf16.msra.mxu0 %v2146
      %2188 = vmatprep.subr.bf16.mxu0 0
      %2189 = vmatpush1.bf16.msra.mxu0 %v2147
      %2190 = vmatprep.subr.bf16.mxu0 0
      %2191 = vmatpush1.bf16.msra.mxu0 %v2148
      %2192 = vmatprep.subr.bf16.mxu0 0
      %2193 = vmatpush1.bf16.msra.mxu0 %v2149
      %2194 = vmatprep.subr.bf16.mxu0 0
      %2195 = vmatpush1.bf16.msra.mxu0 %v2150
      %2196 = vmatprep.subr.bf16.mxu0 0
      %2197 = vmatpush1.bf16.msra.mxu0 %v2151
      %2198 = vmatprep.subr.bf16.mxu0 0
      %2199 = vmatpush1.bf16.msra.mxu0 %v2152
      %2200 = vmatprep.subr.bf16.mxu0 0
      %2201 = vmatpush1.bf16.msra.mxu0 %v2153
      %2202 = vmatprep.mubr.bf16.mxu0 %v2073
      %2203 = vmatmul.mubr.bf16.gmra.mrb[0].mxu0 %v2072
      %v2204 = vpop.f32.mrb[0].mxu0
      %v2205 = vadd.f32 0.0, %v2204
      %v2206 = vpop.f32.mrb[0].mxu0
      %v2207 = vpop.f32.mrb[0].mxu0
      %v2208 = vadd.f32 0.0, %v2207
      %v2209 = vpop.f32.mrb[0].mxu0
      %2210 = vdwg.mxu0
      %v2211 = vadd.f32 %v1894, %v2205
      %v2212 = vadd.f32 %v1895, %v2208
      %v2214 = vlaneseq
      %v2215 = vshrl.u32 %v2214, 7
      %v2216 = vsub.s32 0, %v2215
      %v2217 = vrot.slane %v1893, %v2216
      %v2219 = vadd.f32 %v2211, %v2217
      %v2220 = vadd.f32 %v2212, %v2217
      %2221 = vst.msk [vmem:[#allocation2] sm:$0xff] %vm964, %v2219
      %2222 = vst.msk [vmem:[#allocation2 + $0x8] sm:$0xff] %vm964, %v2220
      %p2223 = scmp.eq.s32.totalorder %s37, 1
      // Predicated region
      $region109: #{fast_transformer_forward.2} parent=103 // pred_check
        %p2224 = pneg %p2223
      $region110: #{fast_transformer_forward.2} parent=103 // pred_check_branch
        %2226 = sbr.rel (%p2224) target = $region112
      $region111: #{fast_transformer_forward.2} parent=103 // pred_region
        %v2227 = vld [vmem:[#allocation2] sm:$0xff]
        %v2228 = vld [vmem:[#allocation2 + $0x8] sm:$0xff]
        %v2229 = vpack.c.bf16 %v2228, %v2227
        %v2231 = vunpack.c.l.b16 %v2229
        %v2232 = vunpack.c.h.b16 %v2229
        %v2233 = vpack.c.b16 %v2231, %v2231
        %v2234 = vpack.c.b16 %v2232, %v2232
        %vm2237 = vcmask 519168
        %2238 = vst.msk [vmem:[%s943] sm:$0xf] %vm2237, %v2233
        %2239 = vst.msk [vmem:[%s943 + $0x4] sm:$0xf] %vm2237, %v2234
      $region112: #{fast_transformer_forward.2} parent=103 // pred_fallthru
        _
      %p2240 = scmp.lt.s32.totalorder %s36, 1
      %s2241 = scalar_select %p2240, %s36, 1
      %s2242 = smul.addr %s2241, 2
      %s2243 = smul.addr %s2242, 4
      %s2244 = scalar_lea.vmem %s21, %s2243
      // Predicated region
      $region113: #{fast_transformer_forward.2} parent=103 // pred_check
        %p2245 = pneg %p588
      $region114: #{fast_transformer_forward.2} parent=103 // pred_check_branch
        %2247 = sbr.rel (%p2245) target = $region116
      $region115: #{fast_transformer_forward.2} parent=103 // pred_region
        _
      $region116: #{fast_transformer_forward.2} parent=103 // pred_fallthru
        _
    $region104: #{fast_transformer_forward.2} parent=5 // pred_fallthru
      _
    %p2248 = scmp.le.s32.totalorder 2, %s27
    // Predicated region
    $region117: #{fast_transformer_forward.2} parent=5 // pred_check
      %p2249 = pneg %p2248
    $region118: #{fast_transformer_forward.2} parent=5 // pred_check_branch
      %2251 = sbr.rel (%p2249) target = $region120
    $region119: #{fast_transformer_forward.2} parent=5 // pred_region
      %s2252 = ssub.s32 %s27, 2
      // Predicated region
      $region121: #{fast_transformer_forward.2} parent=119 // pred_check
        %p2253 = pneg %p594
      $region122: #{fast_transformer_forward.2} parent=119 // pred_check_branch
        %2255 = sbr.rel (%p2253) target = $region124
      $region123: #{fast_transformer_forward.2} parent=119 // pred_region
        %p2256 = scmp.lt.s32.totalorder %s38, 1
        %s2257 = scalar_select %p2256, %s38, 1
        %s2258 = smul.addr %s2257, 2
        %s2259 = smul.addr %s2258, 4
        %s2260 = scalar_lea.vmem %s21, %s2259
      $region124: #{fast_transformer_forward.2} parent=119 // pred_fallthru
        _
    $region120: #{fast_transformer_forward.2} parent=5 // pred_fallthru
      _
  $region6: #{fast_transformer_forward.2} parent=0 // loop_footer
    %s31 = sadd.s32 1, %s27
  $region7: #{fast_transformer_forward.2} parent=0 // loop_footer_branch
    %26 = sbr.rel target = $region3
  $region8: #{fast_transformer_forward.2} parent=0 // loop_exit
    _

</llo_original>
